<compile_context>
chip_gen: v7x
topology: tpu7x:2x2x1
jax: 0.10.0
libtpu: 0.0.40
codegen_flags: <defaults>
</compile_context>

<pallas_src>
import numpy as np
import jax
import jax.numpy as jnp
from jax import lax
from jax.experimental import pallas as pl
from jax.experimental.pallas import tpu as pltpu

# ---------------- model hyper-parameters (from the PyTorch script) ----------
VOCAB_SIZE = 100
WORD_DIM   = 10
WINDOW     = 3
RNN_DIM    = 15
BATCH      = 30
SRC_LEN    = 10
TGT_LEN    = 8

# padded sizes used by the kernel (lane width 128, sublane multiple 8)
HP = 128                 # padded hidden dim (one 128-lane group per gate)
VP = 128                 # padded vocab dim  (lane-dense output slab)
GP = 3 * HP              # packed gates [r | z | n] at lane offsets 0/128/256
KP = 128                 # padded contraction dim for the off-chain matmuls


def _round_up(x, m):
    return ((x + m - 1) // m) * m


# ---------------- kernel + wrapper -------------------------------------------
def nlg_forward(x_emb, y_emb, kp, window):
    """x_emb: (B, Lx, D) f32 source embeddings, y_emb: (B, Ly, D) f32 target
    embeddings, kp: packed kernel params from pack_params()."""
    B, Lx, D = x_emb.shape
    Ly = y_emb.shape[1]
    Lout = Lx - window + 1
    BP = _round_up(B, 8)          # batch padded to a sublane multiple (30 -> 32)
    WD = window * D
    V = kp["V"]

    # ---- plain-JAX layout prep: im2col, batch pad, K pad to 128, time-major -
    x_unf = jnp.stack(
        [x_emb[:, t:t + window, :].reshape(B, WD) for t in range(Lout)], axis=0)
    x_unf = jnp.pad(x_unf, ((0, 0), (0, BP - B), (0, KP - WD)))
    x_unf = x_unf.reshape(Lout * BP, KP).astype(jnp.bfloat16)       # (Lout*BP, 128)

    y_tm = jnp.pad(y_emb, ((0, BP - B), (0, 0), (0, KP - D)))
    y_tm = jnp.transpose(y_tm, (1, 0, 2)).reshape(Ly * BP, KP)
    y_tm = y_tm.astype(jnp.bfloat16)                                 # (Ly*BP, 128)

    args = (x_unf, y_tm, kp["cwf"], kp["cb"], kp["wih"], kp["bih"],
            kp["whh"], kp["bhh_n"], kp["lw"], kp["lb"])

    def kernel(xu_ref, y_ref, cwf_ref, cb_ref, wih_ref, bih_ref,
               whh_ref, bhhn_ref, lw_ref, lb_ref, o_ref, gi_ref, hs_ref):
        f32 = jnp.float32

        # ---- CNN_Maxpool: ONE im2col matmul + max over conv positions -------
        conv = jnp.dot(xu_ref[...], cwf_ref[...],
                       preferred_element_type=f32) + cb_ref[...]     # (Lout*BP, HP)
        h0 = conv[0:BP, :]
        for t in range(1, Lout):                      # cheap (32,128) VPU maxes
            h0 = jnp.maximum(h0, conv[t * BP:(t + 1) * BP, :])       # (BP, HP)

        # ---- GRU input gates for every timestep in ONE matmul (off h-chain) -
        # (bhh_r / bhh_z are pre-folded into bih, so they are applied here.)
        gi_ref[...] = jnp.dot(y_ref[...], wih_ref[...],
                              preferred_element_type=f32) + bih_ref[...]

        def step(t, h):
            off = pl.multiple_of(t * BP, BP)
            gi = gi_ref[pl.ds(off, BP), :]                           # (BP, GP) f32
            # whh re-read from VMEM every unrolled step: keeps the 24 weight
            # vregs out of the live set of the unrolled recurrence.
            gh = jnp.dot(h.astype(jnp.bfloat16), whh_ref[...],
                         preferred_element_type=f32)                 # (BP, GP) f32
            # lane-aligned gate slices at offsets 0 / 128 / 256 (PyTorch r,z,n)
            r = jax.nn.sigmoid(gi[:, 0:HP]      + gh[:, 0:HP])
            z = jax.nn.sigmoid(gi[:, HP:2 * HP] + gh[:, HP:2 * HP])
            n = jnp.tanh(gi[:, 2 * HP:3 * HP]
                         + r * (gh[:, 2 * HP:3 * HP] + bhhn_ref[...]))
            h = (1.0 - z) * n + z * h                                # (BP, HP) f32
            hs_ref[pl.ds(off, BP), :] = h.astype(hs_ref.dtype)       # bf16 store
            return h

        lax.fori_loop(0, Ly, step, h0, unroll=True)

        # ---- output projection: ONE matmul, one lane-dense (256,128) store --
        o_ref[...] = jnp.dot(hs_ref[...], lw_ref[...],
                             preferred_element_type=f32) + lb_ref[...]

    vmem = pl.BlockSpec(memory_space=pltpu.MemorySpace.VMEM)
    out = pl.pallas_call(
        kernel,
        out_shape=jax.ShapeDtypeStruct((Ly * BP, VP), jnp.float32),
        in_specs=[vmem] * len(args),
        out_specs=vmem,
        scratch_shapes=[pltpu.VMEM((Ly * BP, GP), jnp.float32),    # gi, all steps
                        pltpu.VMEM((Ly * BP, HP), jnp.bfloat16)],  # hidden states
    )(*args)

    # (Ly*BP, VP) time-major -> (B, Ly, V)
    return jnp.transpose(out.reshape(Ly, BP, VP)[:, :B, :V], (1, 0, 2))


# ---------------- parameter packing for the kernel ---------------------------
def pack_params(p):
    """Pad / pack PyTorch-layout params into the kernel layout.

    cwf  : (128, 128)  conv weight, im2col-flattened rows padded 30->128,
                       hidden lane-padded 15->128
    wih  : (128, 384)  input->hidden gates packed [r|z|n], rows padded 10->128
    whh  : (128, 384)  hidden->hidden gates packed, rows padded 15->128
    bih  : (1, 384)    input-gate bias with bhh_r / bhh_z FOLDED IN
    bhh_n: (1, 128)    hidden n-gate bias (stays inside the recurrence)
    lw   : (128, 128)  output projection, hidden rows / vocab cols padded
    Matmul operands are stored bf16 (f32 MXU accumulation); biases stay f32.
    """
    W, D, H = p["cw"].shape
    V = p["lw"].shape[1]

    cwf = jnp.zeros((KP, HP), jnp.float32).at[:W * D, :H].set(
        p["cw"].reshape(W * D, H))
    cb = jnp.zeros((1, HP), jnp.float32).at[:, :H].set(p["cb"])

    wih = jnp.zeros((KP, GP), jnp.float32)
    whh = jnp.zeros((HP, GP), jnp.float32)
    bih = jnp.zeros((1, GP), jnp.float32)
    for g in range(3):  # PyTorch gate order [r, z, n]
        wih = wih.at[:D, g * HP:g * HP + H].set(p["wih"][g])
        whh = whh.at[:H, g * HP:g * HP + H].set(p["whh"][g])
        bih = bih.at[0, g * HP:g * HP + H].set(p["bih"][g])
    # fold the hidden r/z biases into the (off-chain) input-gate bias:
    #   sigmoid(gi + gh) is linear in both biases, only bhh_n is gated by r.
    bih = bih.at[0, 0:H].add(p["bhh"][0])
    bih = bih.at[0, HP:HP + H].add(p["bhh"][1])
    bhh_n = jnp.zeros((1, HP), jnp.float32).at[0, :H].set(p["bhh"][2])

    lw = jnp.zeros((HP, VP), jnp.float32).at[:H, :V].set(p["lw"])
    lb = jnp.zeros((1, VP), jnp.float32).at[:, :V].set(p["lb"])

    bf16 = jnp.bfloat16
    return {"cwf": cwf.astype(bf16), "cb": cb,
            "wih": wih.astype(bf16), "bih": bih,
            "whh": whh.astype(bf16), "bhh_n": bhh_n,
            "lw": lw.astype(bf16), "lb": lb,
            "H": H, "V": V}


# ---------------- pure-JAX f32 reference (same math, original layout) --------
def nlg_reference(x_emb, y_emb, p):
    W = p["cw"].shape[0]
    Lout = x_emb.shape[1] - W + 1
    conv = jnp.stack(
        [sum(x_emb[:, t + k, :] @ p["cw"][k] for k in range(W)) + p["cb"]
         for t in range(Lout)], axis=1)            # (B, Lout, H)
    h = conv.max(axis=1)                           # (B, H)
    outs = []
    for t in range(y_emb.shape[1]):
        yt = y_emb[:, t, :]
        gi_r = yt @ p["wih"][0] + p["bih"][0:1]
        gi_z = yt @ p["wih"][1] + p["bih"][1:2]
        gi_n = yt @ p["wih"][2] + p["bih"][2:3]
        gh_r = h @ p["whh"][0] + p["bhh"][0:1]
        gh_z = h @ p["whh"][1] + p["bhh"][1:2]
        gh_n = h @ p["whh"][2] + p["bhh"][2:3]
        r = jax.nn.sigmoid(gi_r + gh_r)
        z = jax.nn.sigmoid(gi_z + gh_z)
        n = jnp.tanh(gi_n + r * gh_n)
        h = (1.0 - z) * n + z * h
        outs.append(h @ p["lw"] + p["lb"])
    return jnp.stack(outs, axis=1)


# ---------------- deterministic parameter init -------------------------------
def init_params(key):
    ks = jax.random.split(key, 8)
    D, W, H, V = WORD_DIM, WINDOW, RNN_DIM, VOCAB_SIZE

    def u(k, shape, bound):
        return jax.random.uniform(k, shape, jnp.float32, -bound, bound)

    emb = jax.random.normal(ks[0], (V, D), jnp.float32)             # nn.Embedding

    kc = 1.0 / np.sqrt(W * D)
    cw = u(ks[1], (W, D, H), kc)                                    # conv weight (W,D,H)
    cb = u(ks[2], (1, H), kc)                                       # conv bias

    kg = 1.0 / np.sqrt(H)
    wih = u(ks[3], (3, D, H), kg)                                   # GRU W_ih (r,z,n)
    whh = u(ks[4], (3, H, H), kg)                                   # GRU W_hh (r,z,n)
    bih = u(ks[5], (3, H), kg)
    bhh = u(ks[6], (3, H), kg)

    kl = 1.0 / np.sqrt(H)
    lw = u(ks[7], (H, V), kl)                                       # Linear weight^T
    lb = jnp.zeros((1, V), jnp.float32)

    return {"emb": emb, "cw": cw, "cb": cb, "wih": wih, "whh": whh,
            "bih": bih, "bhh": bhh, "lw": lw, "lb": lb}


if __name__ == "__main__":
    key = jax.random.PRNGKey(0)
    k_param, k_x, k_y = jax.random.split(key, 3)

    params = init_params(k_param)
    kparams = pack_params(params)

    x_id = jax.random.randint(k_x, (BATCH, SRC_LEN), 0, VOCAB_SIZE, dtype=jnp.int32)
    y_id = jax.random.randint(k_y, (BATCH, TGT_LEN), 0, VOCAB_SIZE, dtype=jnp.int32)

    # embedding lookup (glue, plain JAX)
    x_emb = jnp.take(params["emb"], x_id, axis=0)   # (30, 10, 10)
    y_emb = jnp.take(params["emb"], y_id, axis=0)   # (30, 8, 10)

    word_scores = nlg_forward(x_emb, y_emb, kparams, WINDOW)
    word_scores = jax.block_until_ready(word_scores)

    ref = jax.block_until_ready(nlg_reference(x_emb, y_emb, params))

    assert word_scores.shape == (BATCH, TGT_LEN, VOCAB_SIZE)
    # tolerance accounts for bf16 MXU operands (f32 accumulation + f32 elementwise)
    np.testing.assert_allclose(np.asarray(word_scores), np.asarray(ref),
                               rtol=2e-2, atol=2e-2)
    print("KERNEL_OK")
</pallas_src>

<mosaic_0001>
module attributes {stable_mosaic.version = 11 : i64} {
  func.func @kernel(%arg0: memref<256x128xbf16, #tpu.memory_space<vmem>>, %arg1: memref<256x128xbf16, #tpu.memory_space<vmem>>, %arg2: memref<128x128xbf16, #tpu.memory_space<vmem>>, %arg3: memref<1x128xf32, #tpu.memory_space<vmem>>, %arg4: memref<128x384xbf16, #tpu.memory_space<vmem>>, %arg5: memref<1x384xf32, #tpu.memory_space<vmem>>, %arg6: memref<128x384xbf16, #tpu.memory_space<vmem>>, %arg7: memref<1x128xf32, #tpu.memory_space<vmem>>, %arg8: memref<128x128xbf16, #tpu.memory_space<vmem>>, %arg9: memref<1x128xf32, #tpu.memory_space<vmem>>, %arg10: memref<256x128xf32, #tpu.memory_space<vmem>>, %arg11: memref<256x384xf32, #tpu.memory_space<vmem>>, %arg12: memref<256x128xbf16, #tpu.memory_space<vmem>>) attributes {dimension_semantics = [], scalar_prefetch = 0 : i64, scratch_operands = 2 : i64, tpu.core_type = #tpu.core_type<tc>} {
    %c0 = arith.constant 0 : index
    %c0_0 = arith.constant 0 : index
    %0 = vector.load %arg0[%c0, %c0_0] : memref<256x128xbf16, #tpu.memory_space<vmem>>, vector<256x128xbf16>
    %c0_1 = arith.constant 0 : index
    %c0_2 = arith.constant 0 : index
    %1 = vector.load %arg2[%c0_1, %c0_2] : memref<128x128xbf16, #tpu.memory_space<vmem>>, vector<128x128xbf16>
    %cst = arith.constant dense<0.000000e+00> : vector<256x128xf32>
    %2 = tpu.matmul %0, %1, %cst {dimension_numbers = #tpu.dot_dimension_numbers<[1], [0], [0], [1], [0, 0, 1, 1], [], []>} : vector<256x128xbf16>, vector<128x128xbf16>, vector<256x128xf32> -> vector<256x128xf32>
    %c0_3 = arith.constant 0 : index
    %c0_4 = arith.constant 0 : index
    %3 = vector.load %arg3[%c0_3, %c0_4] : memref<1x128xf32, #tpu.memory_space<vmem>>, vector<1x128xf32>
    %4 = vector.broadcast %3 : vector<1x128xf32> to vector<256x128xf32>
    %5 = arith.addf %2, %4 : vector<256x128xf32>
    %6 = vector.extract_strided_slice %5 {offsets = [0, 0], sizes = [32, 128], strides = [1, 1]} : vector<256x128xf32> to vector<32x128xf32>
    %7 = vector.extract_strided_slice %5 {offsets = [32, 0], sizes = [32, 128], strides = [1, 1]} : vector<256x128xf32> to vector<32x128xf32>
    %8 = arith.maximumf %6, %7 : vector<32x128xf32>
    %9 = vector.extract_strided_slice %5 {offsets = [64, 0], sizes = [32, 128], strides = [1, 1]} : vector<256x128xf32> to vector<32x128xf32>
    %10 = arith.maximumf %8, %9 : vector<32x128xf32>
    %11 = vector.extract_strided_slice %5 {offsets = [96, 0], sizes = [32, 128], strides = [1, 1]} : vector<256x128xf32> to vector<32x128xf32>
    %12 = arith.maximumf %10, %11 : vector<32x128xf32>
    %13 = vector.extract_strided_slice %5 {offsets = [128, 0], sizes = [32, 128], strides = [1, 1]} : vector<256x128xf32> to vector<32x128xf32>
    %14 = arith.maximumf %12, %13 : vector<32x128xf32>
    %15 = vector.extract_strided_slice %5 {offsets = [160, 0], sizes = [32, 128], strides = [1, 1]} : vector<256x128xf32> to vector<32x128xf32>
    %16 = arith.maximumf %14, %15 : vector<32x128xf32>
    %17 = vector.extract_strided_slice %5 {offsets = [192, 0], sizes = [32, 128], strides = [1, 1]} : vector<256x128xf32> to vector<32x128xf32>
    %18 = arith.maximumf %16, %17 : vector<32x128xf32>
    %19 = vector.extract_strided_slice %5 {offsets = [224, 0], sizes = [32, 128], strides = [1, 1]} : vector<256x128xf32> to vector<32x128xf32>
    %20 = arith.maximumf %18, %19 : vector<32x128xf32>
    %c0_5 = arith.constant 0 : index
    %c0_6 = arith.constant 0 : index
    %21 = vector.load %arg1[%c0_5, %c0_6] : memref<256x128xbf16, #tpu.memory_space<vmem>>, vector<256x128xbf16>
    %c0_7 = arith.constant 0 : index
    %c0_8 = arith.constant 0 : index
    %22 = vector.load %arg4[%c0_7, %c0_8] : memref<128x384xbf16, #tpu.memory_space<vmem>>, vector<128x384xbf16>
    %cst_9 = arith.constant dense<0.000000e+00> : vector<256x384xf32>
    %23 = tpu.matmul %21, %22, %cst_9 {dimension_numbers = #tpu.dot_dimension_numbers<[1], [0], [0], [1], [0, 0, 1, 1], [], []>} : vector<256x128xbf16>, vector<128x384xbf16>, vector<256x384xf32> -> vector<256x384xf32>
    %c0_10 = arith.constant 0 : index
    %c0_11 = arith.constant 0 : index
    %24 = vector.load %arg5[%c0_10, %c0_11] : memref<1x384xf32, #tpu.memory_space<vmem>>, vector<1x384xf32>
    %25 = vector.broadcast %24 : vector<1x384xf32> to vector<256x384xf32>
    %26 = arith.addf %23, %25 : vector<256x384xf32>
    %c0_12 = arith.constant 0 : index
    %c0_13 = arith.constant 0 : index
    %27 = vector.load %arg11[%c0_12, %c0_13] : memref<256x384xf32, #tpu.memory_space<vmem>>, vector<256x384xf32>
    tpu.vector_store %arg11[%c0_12, %c0_13], %26 {strides = array<i32>} : memref<256x384xf32, #tpu.memory_space<vmem>>, vector<256x384xf32>,
    %c0_i32 = arith.constant 0 : i32
    %c32_i32 = arith.constant 32 : i32
    %28 = arith.muli %c0_i32, %c32_i32 : i32
    %29 = tpu.assume_multiple %28, 32 : i32
    %30 = arith.index_cast %29 : i32 to index
    %c0_14 = arith.constant 0 : index
    %31 = vector.load %arg11[%30, %c0_14] : memref<256x384xf32, #tpu.memory_space<vmem>>, vector<32x384xf32>
    %32 = arith.truncf %20 : vector<32x128xf32> to vector<32x128xbf16>
    %c0_15 = arith.constant 0 : index
    %c0_16 = arith.constant 0 : index
    %33 = vector.load %arg6[%c0_15, %c0_16] : memref<128x384xbf16, #tpu.memory_space<vmem>>, vector<128x384xbf16>
    %cst_17 = arith.constant dense<0.000000e+00> : vector<32x384xf32>
    %34 = tpu.matmul %32, %33, %cst_17 {dimension_numbers = #tpu.dot_dimension_numbers<[1], [0], [0], [1], [0, 0, 1, 1], [], []>} : vector<32x128xbf16>, vector<128x384xbf16>, vector<32x384xf32> -> vector<32x384xf32>
    %35 = vector.extract_strided_slice %31 {offsets = [0, 0], sizes = [32, 128], strides = [1, 1]} : vector<32x384xf32> to vector<32x128xf32>
    %36 = vector.extract_strided_slice %34 {offsets = [0, 0], sizes = [32, 128], strides = [1, 1]} : vector<32x384xf32> to vector<32x128xf32>
    %37 = arith.addf %35, %36 : vector<32x128xf32>
    %38 = arith.negf %37 : vector<32x128xf32>
    %39 = math.exp %38 : vector<32x128xf32>
    %cst_18 = arith.constant 1.000000e+00 : f32
    %40 = vector.broadcast %cst_18 : f32 to vector<32x128xf32>
    %41 = arith.addf %40, %39 : vector<32x128xf32>
    %42 = arith.divf %40, %41 : vector<32x128xf32>
    %43 = vector.extract_strided_slice %31 {offsets = [0, 128], sizes = [32, 128], strides = [1, 1]} : vector<32x384xf32> to vector<32x128xf32>
    %44 = vector.extract_strided_slice %34 {offsets = [0, 128], sizes = [32, 128], strides = [1, 1]} : vector<32x384xf32> to vector<32x128xf32>
    %45 = arith.addf %43, %44 : vector<32x128xf32>
    %46 = arith.negf %45 : vector<32x128xf32>
    %47 = math.exp %46 : vector<32x128xf32>
    %cst_19 = arith.constant 1.000000e+00 : f32
    %48 = vector.broadcast %cst_19 : f32 to vector<32x128xf32>
    %49 = arith.addf %48, %47 : vector<32x128xf32>
    %50 = arith.divf %48, %49 : vector<32x128xf32>
    %51 = vector.extract_strided_slice %31 {offsets = [0, 256], sizes = [32, 128], strides = [1, 1]} : vector<32x384xf32> to vector<32x128xf32>
    %52 = vector.extract_strided_slice %34 {offsets = [0, 256], sizes = [32, 128], strides = [1, 1]} : vector<32x384xf32> to vector<32x128xf32>
    %c0_20 = arith.constant 0 : index
    %c0_21 = arith.constant 0 : index
    %53 = vector.load %arg7[%c0_20, %c0_21] : memref<1x128xf32, #tpu.memory_space<vmem>>, vector<1x128xf32>
    %54 = vector.broadcast %53 : vector<1x128xf32> to vector<32x128xf32>
    %55 = arith.addf %52, %54 : vector<32x128xf32>
    %56 = arith.mulf %42, %55 : vector<32x128xf32>
    %57 = arith.addf %51, %56 : vector<32x128xf32>
    %58 = math.tanh %57 : vector<32x128xf32>
    %cst_22 = arith.constant 1.000000e+00 : f32
    %59 = vector.broadcast %cst_22 : f32 to vector<32x128xf32>
    %60 = arith.subf %59, %50 : vector<32x128xf32>
    %61 = arith.mulf %60, %58 : vector<32x128xf32>
    %62 = arith.mulf %50, %20 : vector<32x128xf32>
    %63 = arith.addf %61, %62 : vector<32x128xf32>
    %64 = arith.truncf %63 : vector<32x128xf32> to vector<32x128xbf16>
    %65 = arith.index_cast %29 : i32 to index
    %c0_23 = arith.constant 0 : index
    %66 = vector.load %arg12[%65, %c0_23] : memref<256x128xbf16, #tpu.memory_space<vmem>>, vector<32x128xbf16>
    tpu.vector_store %arg12[%65, %c0_23], %64 {strides = array<i32>} : memref<256x128xbf16, #tpu.memory_space<vmem>>, vector<32x128xbf16>,
    %c1_i32 = arith.constant 1 : i32
    %c32_i32_24 = arith.constant 32 : i32
    %67 = arith.muli %c1_i32, %c32_i32_24 : i32
    %68 = tpu.assume_multiple %67, 32 : i32
    %69 = arith.index_cast %68 : i32 to index
    %c0_25 = arith.constant 0 : index
    %70 = vector.load %arg11[%69, %c0_25] : memref<256x384xf32, #tpu.memory_space<vmem>>, vector<32x384xf32>
    %71 = arith.truncf %63 : vector<32x128xf32> to vector<32x128xbf16>
    %c0_26 = arith.constant 0 : index
    %c0_27 = arith.constant 0 : index
    %72 = vector.load %arg6[%c0_26, %c0_27] : memref<128x384xbf16, #tpu.memory_space<vmem>>, vector<128x384xbf16>
    %cst_28 = arith.constant dense<0.000000e+00> : vector<32x384xf32>
    %73 = tpu.matmul %71, %72, %cst_28 {dimension_numbers = #tpu.dot_dimension_numbers<[1], [0], [0], [1], [0, 0, 1, 1], [], []>} : vector<32x128xbf16>, vector<128x384xbf16>, vector<32x384xf32> -> vector<32x384xf32>
    %74 = vector.extract_strided_slice %70 {offsets = [0, 0], sizes = [32, 128], strides = [1, 1]} : vector<32x384xf32> to vector<32x128xf32>
    %75 = vector.extract_strided_slice %73 {offsets = [0, 0], sizes = [32, 128], strides = [1, 1]} : vector<32x384xf32> to vector<32x128xf32>
    %76 = arith.addf %74, %75 : vector<32x128xf32>
    %77 = arith.negf %76 : vector<32x128xf32>
    %78 = math.exp %77 : vector<32x128xf32>
    %cst_29 = arith.constant 1.000000e+00 : f32
    %79 = vector.broadcast %cst_29 : f32 to vector<32x128xf32>
    %80 = arith.addf %79, %78 : vector<32x128xf32>
    %81 = arith.divf %79, %80 : vector<32x128xf32>
    %82 = vector.extract_strided_slice %70 {offsets = [0, 128], sizes = [32, 128], strides = [1, 1]} : vector<32x384xf32> to vector<32x128xf32>
    %83 = vector.extract_strided_slice %73 {offsets = [0, 128], sizes = [32, 128], strides = [1, 1]} : vector<32x384xf32> to vector<32x128xf32>
    %84 = arith.addf %82, %83 : vector<32x128xf32>
    %85 = arith.negf %84 : vector<32x128xf32>
    %86 = math.exp %85 : vector<32x128xf32>
    %cst_30 = arith.constant 1.000000e+00 : f32
    %87 = vector.broadcast %cst_30 : f32 to vector<32x128xf32>
    %88 = arith.addf %87, %86 : vector<32x128xf32>
    %89 = arith.divf %87, %88 : vector<32x128xf32>
    %90 = vector.extract_strided_slice %70 {offsets = [0, 256], sizes = [32, 128], strides = [1, 1]} : vector<32x384xf32> to vector<32x128xf32>
    %91 = vector.extract_strided_slice %73 {offsets = [0, 256], sizes = [32, 128], strides = [1, 1]} : vector<32x384xf32> to vector<32x128xf32>
    %c0_31 = arith.constant 0 : index
    %c0_32 = arith.constant 0 : index
    %92 = vector.load %arg7[%c0_31, %c0_32] : memref<1x128xf32, #tpu.memory_space<vmem>>, vector<1x128xf32>
    %93 = vector.broadcast %92 : vector<1x128xf32> to vector<32x128xf32>
    %94 = arith.addf %91, %93 : vector<32x128xf32>
    %95 = arith.mulf %81, %94 : vector<32x128xf32>
    %96 = arith.addf %90, %95 : vector<32x128xf32>
    %97 = math.tanh %96 : vector<32x128xf32>
    %cst_33 = arith.constant 1.000000e+00 : f32
    %98 = vector.broadcast %cst_33 : f32 to vector<32x128xf32>
    %99 = arith.subf %98, %89 : vector<32x128xf32>
    %100 = arith.mulf %99, %97 : vector<32x128xf32>
    %101 = arith.mulf %89, %63 : vector<32x128xf32>
    %102 = arith.addf %100, %101 : vector<32x128xf32>
    %103 = arith.truncf %102 : vector<32x128xf32> to vector<32x128xbf16>
    %104 = arith.index_cast %68 : i32 to index
    %c0_34 = arith.constant 0 : index
    %105 = vector.load %arg12[%104, %c0_34] : memref<256x128xbf16, #tpu.memory_space<vmem>>, vector<32x128xbf16>
    tpu.vector_store %arg12[%104, %c0_34], %103 {strides = array<i32>} : memref<256x128xbf16, #tpu.memory_space<vmem>>, vector<32x128xbf16>,
    %c2_i32 = arith.constant 2 : i32
    %c32_i32_35 = arith.constant 32 : i32
    %106 = arith.muli %c2_i32, %c32_i32_35 : i32
    %107 = tpu.assume_multiple %106, 32 : i32
    %108 = arith.index_cast %107 : i32 to index
    %c0_36 = arith.constant 0 : index
    %109 = vector.load %arg11[%108, %c0_36] : memref<256x384xf32, #tpu.memory_space<vmem>>, vector<32x384xf32>
    %110 = arith.truncf %102 : vector<32x128xf32> to vector<32x128xbf16>
    %c0_37 = arith.constant 0 : index
    %c0_38 = arith.constant 0 : index
    %111 = vector.load %arg6[%c0_37, %c0_38] : memref<128x384xbf16, #tpu.memory_space<vmem>>, vector<128x384xbf16>
    %cst_39 = arith.constant dense<0.000000e+00> : vector<32x384xf32>
    %112 = tpu.matmul %110, %111, %cst_39 {dimension_numbers = #tpu.dot_dimension_numbers<[1], [0], [0], [1], [0, 0, 1, 1], [], []>} : vector<32x128xbf16>, vector<128x384xbf16>, vector<32x384xf32> -> vector<32x384xf32>
    %113 = vector.extract_strided_slice %109 {offsets = [0, 0], sizes = [32, 128], strides = [1, 1]} : vector<32x384xf32> to vector<32x128xf32>
    %114 = vector.extract_strided_slice %112 {offsets = [0, 0], sizes = [32, 128], strides = [1, 1]} : vector<32x384xf32> to vector<32x128xf32>
    %115 = arith.addf %113, %114 : vector<32x128xf32>
    %116 = arith.negf %115 : vector<32x128xf32>
    %117 = math.exp %116 : vector<32x128xf32>
    %cst_40 = arith.constant 1.000000e+00 : f32
    %118 = vector.broadcast %cst_40 : f32 to vector<32x128xf32>
    %119 = arith.addf %118, %117 : vector<32x128xf32>
    %120 = arith.divf %118, %119 : vector<32x128xf32>
    %121 = vector.extract_strided_slice %109 {offsets = [0, 128], sizes = [32, 128], strides = [1, 1]} : vector<32x384xf32> to vector<32x128xf32>
    %122 = vector.extract_strided_slice %112 {offsets = [0, 128], sizes = [32, 128], strides = [1, 1]} : vector<32x384xf32> to vector<32x128xf32>
    %123 = arith.addf %121, %122 : vector<32x128xf32>
    %124 = arith.negf %123 : vector<32x128xf32>
    %125 = math.exp %124 : vector<32x128xf32>
    %cst_41 = arith.constant 1.000000e+00 : f32
    %126 = vector.broadcast %cst_41 : f32 to vector<32x128xf32>
    %127 = arith.addf %126, %125 : vector<32x128xf32>
    %128 = arith.divf %126, %127 : vector<32x128xf32>
    %129 = vector.extract_strided_slice %109 {offsets = [0, 256], sizes = [32, 128], strides = [1, 1]} : vector<32x384xf32> to vector<32x128xf32>
    %130 = vector.extract_strided_slice %112 {offsets = [0, 256], sizes = [32, 128], strides = [1, 1]} : vector<32x384xf32> to vector<32x128xf32>
    %c0_42 = arith.constant 0 : index
    %c0_43 = arith.constant 0 : index
    %131 = vector.load %arg7[%c0_42, %c0_43] : memref<1x128xf32, #tpu.memory_space<vmem>>, vector<1x128xf32>
    %132 = vector.broadcast %131 : vector<1x128xf32> to vector<32x128xf32>
    %133 = arith.addf %130, %132 : vector<32x128xf32>
    %134 = arith.mulf %120, %133 : vector<32x128xf32>
    %135 = arith.addf %129, %134 : vector<32x128xf32>
    %136 = math.tanh %135 : vector<32x128xf32>
    %cst_44 = arith.constant 1.000000e+00 : f32
    %137 = vector.broadcast %cst_44 : f32 to vector<32x128xf32>
    %138 = arith.subf %137, %128 : vector<32x128xf32>
    %139 = arith.mulf %138, %136 : vector<32x128xf32>
    %140 = arith.mulf %128, %102 : vector<32x128xf32>
    %141 = arith.addf %139, %140 : vector<32x128xf32>
    %142 = arith.truncf %141 : vector<32x128xf32> to vector<32x128xbf16>
    %143 = arith.index_cast %107 : i32 to index
    %c0_45 = arith.constant 0 : index
    %144 = vector.load %arg12[%143, %c0_45] : memref<256x128xbf16, #tpu.memory_space<vmem>>, vector<32x128xbf16>
    tpu.vector_store %arg12[%143, %c0_45], %142 {strides = array<i32>} : memref<256x128xbf16, #tpu.memory_space<vmem>>, vector<32x128xbf16>,
    %c3_i32 = arith.constant 3 : i32
    %c32_i32_46 = arith.constant 32 : i32
    %145 = arith.muli %c3_i32, %c32_i32_46 : i32
    %146 = tpu.assume_multiple %145, 32 : i32
    %147 = arith.index_cast %146 : i32 to index
    %c0_47 = arith.constant 0 : index
    %148 = vector.load %arg11[%147, %c0_47] : memref<256x384xf32, #tpu.memory_space<vmem>>, vector<32x384xf32>
    %149 = arith.truncf %141 : vector<32x128xf32> to vector<32x128xbf16>
    %c0_48 = arith.constant 0 : index
    %c0_49 = arith.constant 0 : index
    %150 = vector.load %arg6[%c0_48, %c0_49] : memref<128x384xbf16, #tpu.memory_space<vmem>>, vector<128x384xbf16>
    %cst_50 = arith.constant dense<0.000000e+00> : vector<32x384xf32>
    %151 = tpu.matmul %149, %150, %cst_50 {dimension_numbers = #tpu.dot_dimension_numbers<[1], [0], [0], [1], [0, 0, 1, 1], [], []>} : vector<32x128xbf16>, vector<128x384xbf16>, vector<32x384xf32> -> vector<32x384xf32>
    %152 = vector.extract_strided_slice %148 {offsets = [0, 0], sizes = [32, 128], strides = [1, 1]} : vector<32x384xf32> to vector<32x128xf32>
    %153 = vector.extract_strided_slice %151 {offsets = [0, 0], sizes = [32, 128], strides = [1, 1]} : vector<32x384xf32> to vector<32x128xf32>
    %154 = arith.addf %152, %153 : vector<32x128xf32>
    %155 = arith.negf %154 : vector<32x128xf32>
    %156 = math.exp %155 : vector<32x128xf32>
    %cst_51 = arith.constant 1.000000e+00 : f32
    %157 = vector.broadcast %cst_51 : f32 to vector<32x128xf32>
    %158 = arith.addf %157, %156 : vector<32x128xf32>
    %159 = arith.divf %157, %158 : vector<32x128xf32>
    %160 = vector.extract_strided_slice %148 {offsets = [0, 128], sizes = [32, 128], strides = [1, 1]} : vector<32x384xf32> to vector<32x128xf32>
    %161 = vector.extract_strided_slice %151 {offsets = [0, 128], sizes = [32, 128], strides = [1, 1]} : vector<32x384xf32> to vector<32x128xf32>
    %162 = arith.addf %160, %161 : vector<32x128xf32>
    %163 = arith.negf %162 : vector<32x128xf32>
    %164 = math.exp %163 : vector<32x128xf32>
    %cst_52 = arith.constant 1.000000e+00 : f32
    %165 = vector.broadcast %cst_52 : f32 to vector<32x128xf32>
    %166 = arith.addf %165, %164 : vector<32x128xf32>
    %167 = arith.divf %165, %166 : vector<32x128xf32>
    %168 = vector.extract_strided_slice %148 {offsets = [0, 256], sizes = [32, 128], strides = [1, 1]} : vector<32x384xf32> to vector<32x128xf32>
    %169 = vector.extract_strided_slice %151 {offsets = [0, 256], sizes = [32, 128], strides = [1, 1]} : vector<32x384xf32> to vector<32x128xf32>
    %c0_53 = arith.constant 0 : index
    %c0_54 = arith.constant 0 : index
    %170 = vector.load %arg7[%c0_53, %c0_54] : memref<1x128xf32, #tpu.memory_space<vmem>>, vector<1x128xf32>
    %171 = vector.broadcast %170 : vector<1x128xf32> to vector<32x128xf32>
    %172 = arith.addf %169, %171 : vector<32x128xf32>
    %173 = arith.mulf %159, %172 : vector<32x128xf32>
    %174 = arith.addf %168, %173 : vector<32x128xf32>
    %175 = math.tanh %174 : vector<32x128xf32>
    %cst_55 = arith.constant 1.000000e+00 : f32
    %176 = vector.broadcast %cst_55 : f32 to vector<32x128xf32>
    %177 = arith.subf %176, %167 : vector<32x128xf32>
    %178 = arith.mulf %177, %175 : vector<32x128xf32>
    %179 = arith.mulf %167, %141 : vector<32x128xf32>
    %180 = arith.addf %178, %179 : vector<32x128xf32>
    %181 = arith.truncf %180 : vector<32x128xf32> to vector<32x128xbf16>
    %182 = arith.index_cast %146 : i32 to index
    %c0_56 = arith.constant 0 : index
    %183 = vector.load %arg12[%182, %c0_56] : memref<256x128xbf16, #tpu.memory_space<vmem>>, vector<32x128xbf16>
    tpu.vector_store %arg12[%182, %c0_56], %181 {strides = array<i32>} : memref<256x128xbf16, #tpu.memory_space<vmem>>, vector<32x128xbf16>,
    %c4_i32 = arith.constant 4 : i32
    %c32_i32_57 = arith.constant 32 : i32
    %184 = arith.muli %c4_i32, %c32_i32_57 : i32
    %185 = tpu.assume_multiple %184, 32 : i32
    %186 = arith.index_cast %185 : i32 to index
    %c0_58 = arith.constant 0 : index
    %187 = vector.load %arg11[%186, %c0_58] : memref<256x384xf32, #tpu.memory_space<vmem>>, vector<32x384xf32>
    %188 = arith.truncf %180 : vector<32x128xf32> to vector<32x128xbf16>
    %c0_59 = arith.constant 0 : index
    %c0_60 = arith.constant 0 : index
    %189 = vector.load %arg6[%c0_59, %c0_60] : memref<128x384xbf16, #tpu.memory_space<vmem>>, vector<128x384xbf16>
    %cst_61 = arith.constant dense<0.000000e+00> : vector<32x384xf32>
    %190 = tpu.matmul %188, %189, %cst_61 {dimension_numbers = #tpu.dot_dimension_numbers<[1], [0], [0], [1], [0, 0, 1, 1], [], []>} : vector<32x128xbf16>, vector<128x384xbf16>, vector<32x384xf32> -> vector<32x384xf32>
    %191 = vector.extract_strided_slice %187 {offsets = [0, 0], sizes = [32, 128], strides = [1, 1]} : vector<32x384xf32> to vector<32x128xf32>
    %192 = vector.extract_strided_slice %190 {offsets = [0, 0], sizes = [32, 128], strides = [1, 1]} : vector<32x384xf32> to vector<32x128xf32>
    %193 = arith.addf %191, %192 : vector<32x128xf32>
    %194 = arith.negf %193 : vector<32x128xf32>
    %195 = math.exp %194 : vector<32x128xf32>
    %cst_62 = arith.constant 1.000000e+00 : f32
    %196 = vector.broadcast %cst_62 : f32 to vector<32x128xf32>
    %197 = arith.addf %196, %195 : vector<32x128xf32>
    %198 = arith.divf %196, %197 : vector<32x128xf32>
    %199 = vector.extract_strided_slice %187 {offsets = [0, 128], sizes = [32, 128], strides = [1, 1]} : vector<32x384xf32> to vector<32x128xf32>
    %200 = vector.extract_strided_slice %190 {offsets = [0, 128], sizes = [32, 128], strides = [1, 1]} : vector<32x384xf32> to vector<32x128xf32>
    %201 = arith.addf %199, %200 : vector<32x128xf32>
    %202 = arith.negf %201 : vector<32x128xf32>
    %203 = math.exp %202 : vector<32x128xf32>
    %cst_63 = arith.constant 1.000000e+00 : f32
    %204 = vector.broadcast %cst_63 : f32 to vector<32x128xf32>
    %205 = arith.addf %204, %203 : vector<32x128xf32>
    %206 = arith.divf %204, %205 : vector<32x128xf32>
    %207 = vector.extract_strided_slice %187 {offsets = [0, 256], sizes = [32, 128], strides = [1, 1]} : vector<32x384xf32> to vector<32x128xf32>
    %208 = vector.extract_strided_slice %190 {offsets = [0, 256], sizes = [32, 128], strides = [1, 1]} : vector<32x384xf32> to vector<32x128xf32>
    %c0_64 = arith.constant 0 : index
    %c0_65 = arith.constant 0 : index
    %209 = vector.load %arg7[%c0_64, %c0_65] : memref<1x128xf32, #tpu.memory_space<vmem>>, vector<1x128xf32>
    %210 = vector.broadcast %209 : vector<1x128xf32> to vector<32x128xf32>
    %211 = arith.addf %208, %210 : vector<32x128xf32>
    %212 = arith.mulf %198, %211 : vector<32x128xf32>
    %213 = arith.addf %207, %212 : vector<32x128xf32>
    %214 = math.tanh %213 : vector<32x128xf32>
    %cst_66 = arith.constant 1.000000e+00 : f32
    %215 = vector.broadcast %cst_66 : f32 to vector<32x128xf32>
    %216 = arith.subf %215, %206 : vector<32x128xf32>
    %217 = arith.mulf %216, %214 : vector<32x128xf32>
    %218 = arith.mulf %206, %180 : vector<32x128xf32>
    %219 = arith.addf %217, %218 : vector<32x128xf32>
    %220 = arith.truncf %219 : vector<32x128xf32> to vector<32x128xbf16>
    %221 = arith.index_cast %185 : i32 to index
    %c0_67 = arith.constant 0 : index
    %222 = vector.load %arg12[%221, %c0_67] : memref<256x128xbf16, #tpu.memory_space<vmem>>, vector<32x128xbf16>
    tpu.vector_store %arg12[%221, %c0_67], %220 {strides = array<i32>} : memref<256x128xbf16, #tpu.memory_space<vmem>>, vector<32x128xbf16>,
    %c5_i32 = arith.constant 5 : i32
    %c32_i32_68 = arith.constant 32 : i32
    %223 = arith.muli %c5_i32, %c32_i32_68 : i32
    %224 = tpu.assume_multiple %223, 32 : i32
    %225 = arith.index_cast %224 : i32 to index
    %c0_69 = arith.constant 0 : index
    %226 = vector.load %arg11[%225, %c0_69] : memref<256x384xf32, #tpu.memory_space<vmem>>, vector<32x384xf32>
    %227 = arith.truncf %219 : vector<32x128xf32> to vector<32x128xbf16>
    %c0_70 = arith.constant 0 : index
    %c0_71 = arith.constant 0 : index
    %228 = vector.load %arg6[%c0_70, %c0_71] : memref<128x384xbf16, #tpu.memory_space<vmem>>, vector<128x384xbf16>
    %cst_72 = arith.constant dense<0.000000e+00> : vector<32x384xf32>
    %229 = tpu.matmul %227, %228, %cst_72 {dimension_numbers = #tpu.dot_dimension_numbers<[1], [0], [0], [1], [0, 0, 1, 1], [], []>} : vector<32x128xbf16>, vector<128x384xbf16>, vector<32x384xf32> -> vector<32x384xf32>
    %230 = vector.extract_strided_slice %226 {offsets = [0, 0], sizes = [32, 128], strides = [1, 1]} : vector<32x384xf32> to vector<32x128xf32>
    %231 = vector.extract_strided_slice %229 {offsets = [0, 0], sizes = [32, 128], strides = [1, 1]} : vector<32x384xf32> to vector<32x128xf32>
    %232 = arith.addf %230, %231 : vector<32x128xf32>
    %233 = arith.negf %232 : vector<32x128xf32>
    %234 = math.exp %233 : vector<32x128xf32>
    %cst_73 = arith.constant 1.000000e+00 : f32
    %235 = vector.broadcast %cst_73 : f32 to vector<32x128xf32>
    %236 = arith.addf %235, %234 : vector<32x128xf32>
    %237 = arith.divf %235, %236 : vector<32x128xf32>
    %238 = vector.extract_strided_slice %226 {offsets = [0, 128], sizes = [32, 128], strides = [1, 1]} : vector<32x384xf32> to vector<32x128xf32>
    %239 = vector.extract_strided_slice %229 {offsets = [0, 128], sizes = [32, 128], strides = [1, 1]} : vector<32x384xf32> to vector<32x128xf32>
    %240 = arith.addf %238, %239 : vector<32x128xf32>
    %241 = arith.negf %240 : vector<32x128xf32>
    %242 = math.exp %241 : vector<32x128xf32>
    %cst_74 = arith.constant 1.000000e+00 : f32
    %243 = vector.broadcast %cst_74 : f32 to vector<32x128xf32>
    %244 = arith.addf %243, %242 : vector<32x128xf32>
    %245 = arith.divf %243, %244 : vector<32x128xf32>
    %246 = vector.extract_strided_slice %226 {offsets = [0, 256], sizes = [32, 128], strides = [1, 1]} : vector<32x384xf32> to vector<32x128xf32>
    %247 = vector.extract_strided_slice %229 {offsets = [0, 256], sizes = [32, 128], strides = [1, 1]} : vector<32x384xf32> to vector<32x128xf32>
    %c0_75 = arith.constant 0 : index
    %c0_76 = arith.constant 0 : index
    %248 = vector.load %arg7[%c0_75, %c0_76] : memref<1x128xf32, #tpu.memory_space<vmem>>, vector<1x128xf32>
    %249 = vector.broadcast %248 : vector<1x128xf32> to vector<32x128xf32>
    %250 = arith.addf %247, %249 : vector<32x128xf32>
    %251 = arith.mulf %237, %250 : vector<32x128xf32>
    %252 = arith.addf %246, %251 : vector<32x128xf32>
    %253 = math.tanh %252 : vector<32x128xf32>
    %cst_77 = arith.constant 1.000000e+00 : f32
    %254 = vector.broadcast %cst_77 : f32 to vector<32x128xf32>
    %255 = arith.subf %254, %245 : vector<32x128xf32>
    %256 = arith.mulf %255, %253 : vector<32x128xf32>
    %257 = arith.mulf %245, %219 : vector<32x128xf32>
    %258 = arith.addf %256, %257 : vector<32x128xf32>
    %259 = arith.truncf %258 : vector<32x128xf32> to vector<32x128xbf16>
    %260 = arith.index_cast %224 : i32 to index
    %c0_78 = arith.constant 0 : index
    %261 = vector.load %arg12[%260, %c0_78] : memref<256x128xbf16, #tpu.memory_space<vmem>>, vector<32x128xbf16>
    tpu.vector_store %arg12[%260, %c0_78], %259 {strides = array<i32>} : memref<256x128xbf16, #tpu.memory_space<vmem>>, vector<32x128xbf16>,
    %c6_i32 = arith.constant 6 : i32
    %c32_i32_79 = arith.constant 32 : i32
    %262 = arith.muli %c6_i32, %c32_i32_79 : i32
    %263 = tpu.assume_multiple %262, 32 : i32
    %264 = arith.index_cast %263 : i32 to index
    %c0_80 = arith.constant 0 : index
    %265 = vector.load %arg11[%264, %c0_80] : memref<256x384xf32, #tpu.memory_space<vmem>>, vector<32x384xf32>
    %266 = arith.truncf %258 : vector<32x128xf32> to vector<32x128xbf16>
    %c0_81 = arith.constant 0 : index
    %c0_82 = arith.constant 0 : index
    %267 = vector.load %arg6[%c0_81, %c0_82] : memref<128x384xbf16, #tpu.memory_space<vmem>>, vector<128x384xbf16>
    %cst_83 = arith.constant dense<0.000000e+00> : vector<32x384xf32>
    %268 = tpu.matmul %266, %267, %cst_83 {dimension_numbers = #tpu.dot_dimension_numbers<[1], [0], [0], [1], [0, 0, 1, 1], [], []>} : vector<32x128xbf16>, vector<128x384xbf16>, vector<32x384xf32> -> vector<32x384xf32>
    %269 = vector.extract_strided_slice %265 {offsets = [0, 0], sizes = [32, 128], strides = [1, 1]} : vector<32x384xf32> to vector<32x128xf32>
    %270 = vector.extract_strided_slice %268 {offsets = [0, 0], sizes = [32, 128], strides = [1, 1]} : vector<32x384xf32> to vector<32x128xf32>
    %271 = arith.addf %269, %270 : vector<32x128xf32>
    %272 = arith.negf %271 : vector<32x128xf32>
    %273 = math.exp %272 : vector<32x128xf32>
    %cst_84 = arith.constant 1.000000e+00 : f32
    %274 = vector.broadcast %cst_84 : f32 to vector<32x128xf32>
    %275 = arith.addf %274, %273 : vector<32x128xf32>
    %276 = arith.divf %274, %275 : vector<32x128xf32>
    %277 = vector.extract_strided_slice %265 {offsets = [0, 128], sizes = [32, 128], strides = [1, 1]} : vector<32x384xf32> to vector<32x128xf32>
    %278 = vector.extract_strided_slice %268 {offsets = [0, 128], sizes = [32, 128], strides = [1, 1]} : vector<32x384xf32> to vector<32x128xf32>
    %279 = arith.addf %277, %278 : vector<32x128xf32>
    %280 = arith.negf %279 : vector<32x128xf32>
    %281 = math.exp %280 : vector<32x128xf32>
    %cst_85 = arith.constant 1.000000e+00 : f32
    %282 = vector.broadcast %cst_85 : f32 to vector<32x128xf32>
    %283 = arith.addf %282, %281 : vector<32x128xf32>
    %284 = arith.divf %282, %283 : vector<32x128xf32>
    %285 = vector.extract_strided_slice %265 {offsets = [0, 256], sizes = [32, 128], strides = [1, 1]} : vector<32x384xf32> to vector<32x128xf32>
    %286 = vector.extract_strided_slice %268 {offsets = [0, 256], sizes = [32, 128], strides = [1, 1]} : vector<32x384xf32> to vector<32x128xf32>
    %c0_86 = arith.constant 0 : index
    %c0_87 = arith.constant 0 : index
    %287 = vector.load %arg7[%c0_86, %c0_87] : memref<1x128xf32, #tpu.memory_space<vmem>>, vector<1x128xf32>
    %288 = vector.broadcast %287 : vector<1x128xf32> to vector<32x128xf32>
    %289 = arith.addf %286, %288 : vector<32x128xf32>
    %290 = arith.mulf %276, %289 : vector<32x128xf32>
    %291 = arith.addf %285, %290 : vector<32x128xf32>
    %292 = math.tanh %291 : vector<32x128xf32>
    %cst_88 = arith.constant 1.000000e+00 : f32
    %293 = vector.broadcast %cst_88 : f32 to vector<32x128xf32>
    %294 = arith.subf %293, %284 : vector<32x128xf32>
    %295 = arith.mulf %294, %292 : vector<32x128xf32>
    %296 = arith.mulf %284, %258 : vector<32x128xf32>
    %297 = arith.addf %295, %296 : vector<32x128xf32>
    %298 = arith.truncf %297 : vector<32x128xf32> to vector<32x128xbf16>
    %299 = arith.index_cast %263 : i32 to index
    %c0_89 = arith.constant 0 : index
    %300 = vector.load %arg12[%299, %c0_89] : memref<256x128xbf16, #tpu.memory_space<vmem>>, vector<32x128xbf16>
    tpu.vector_store %arg12[%299, %c0_89], %298 {strides = array<i32>} : memref<256x128xbf16, #tpu.memory_space<vmem>>, vector<32x128xbf16>,
    %c7_i32 = arith.constant 7 : i32
    %c32_i32_90 = arith.constant 32 : i32
    %301 = arith.muli %c7_i32, %c32_i32_90 : i32
    %302 = tpu.assume_multiple %301, 32 : i32
    %303 = arith.index_cast %302 : i32 to index
    %c0_91 = arith.constant 0 : index
    %304 = vector.load %arg11[%303, %c0_91] : memref<256x384xf32, #tpu.memory_space<vmem>>, vector<32x384xf32>
    %305 = arith.truncf %297 : vector<32x128xf32> to vector<32x128xbf16>
    %c0_92 = arith.constant 0 : index
    %c0_93 = arith.constant 0 : index
    %306 = vector.load %arg6[%c0_92, %c0_93] : memref<128x384xbf16, #tpu.memory_space<vmem>>, vector<128x384xbf16>
    %cst_94 = arith.constant dense<0.000000e+00> : vector<32x384xf32>
    %307 = tpu.matmul %305, %306, %cst_94 {dimension_numbers = #tpu.dot_dimension_numbers<[1], [0], [0], [1], [0, 0, 1, 1], [], []>} : vector<32x128xbf16>, vector<128x384xbf16>, vector<32x384xf32> -> vector<32x384xf32>
    %308 = vector.extract_strided_slice %304 {offsets = [0, 0], sizes = [32, 128], strides = [1, 1]} : vector<32x384xf32> to vector<32x128xf32>
    %309 = vector.extract_strided_slice %307 {offsets = [0, 0], sizes = [32, 128], strides = [1, 1]} : vector<32x384xf32> to vector<32x128xf32>
    %310 = arith.addf %308, %309 : vector<32x128xf32>
    %311 = arith.negf %310 : vector<32x128xf32>
    %312 = math.exp %311 : vector<32x128xf32>
    %cst_95 = arith.constant 1.000000e+00 : f32
    %313 = vector.broadcast %cst_95 : f32 to vector<32x128xf32>
    %314 = arith.addf %313, %312 : vector<32x128xf32>
    %315 = arith.divf %313, %314 : vector<32x128xf32>
    %316 = vector.extract_strided_slice %304 {offsets = [0, 128], sizes = [32, 128], strides = [1, 1]} : vector<32x384xf32> to vector<32x128xf32>
    %317 = vector.extract_strided_slice %307 {offsets = [0, 128], sizes = [32, 128], strides = [1, 1]} : vector<32x384xf32> to vector<32x128xf32>
    %318 = arith.addf %316, %317 : vector<32x128xf32>
    %319 = arith.negf %318 : vector<32x128xf32>
    %320 = math.exp %319 : vector<32x128xf32>
    %cst_96 = arith.constant 1.000000e+00 : f32
    %321 = vector.broadcast %cst_96 : f32 to vector<32x128xf32>
    %322 = arith.addf %321, %320 : vector<32x128xf32>
    %323 = arith.divf %321, %322 : vector<32x128xf32>
    %324 = vector.extract_strided_slice %304 {offsets = [0, 256], sizes = [32, 128], strides = [1, 1]} : vector<32x384xf32> to vector<32x128xf32>
    %325 = vector.extract_strided_slice %307 {offsets = [0, 256], sizes = [32, 128], strides = [1, 1]} : vector<32x384xf32> to vector<32x128xf32>
    %c0_97 = arith.constant 0 : index
    %c0_98 = arith.constant 0 : index
    %326 = vector.load %arg7[%c0_97, %c0_98] : memref<1x128xf32, #tpu.memory_space<vmem>>, vector<1x128xf32>
    %327 = vector.broadcast %326 : vector<1x128xf32> to vector<32x128xf32>
    %328 = arith.addf %325, %327 : vector<32x128xf32>
    %329 = arith.mulf %315, %328 : vector<32x128xf32>
    %330 = arith.addf %324, %329 : vector<32x128xf32>
    %331 = math.tanh %330 : vector<32x128xf32>
    %cst_99 = arith.constant 1.000000e+00 : f32
    %332 = vector.broadcast %cst_99 : f32 to vector<32x128xf32>
    %333 = arith.subf %332, %323 : vector<32x128xf32>
    %334 = arith.mulf %333, %331 : vector<32x128xf32>
    %335 = arith.mulf %323, %297 : vector<32x128xf32>
    %336 = arith.addf %334, %335 : vector<32x128xf32>
    %337 = arith.truncf %336 : vector<32x128xf32> to vector<32x128xbf16>
    %338 = arith.index_cast %302 : i32 to index
    %c0_100 = arith.constant 0 : index
    %339 = vector.load %arg12[%338, %c0_100] : memref<256x128xbf16, #tpu.memory_space<vmem>>, vector<32x128xbf16>
    tpu.vector_store %arg12[%338, %c0_100], %337 {strides = array<i32>} : memref<256x128xbf16, #tpu.memory_space<vmem>>, vector<32x128xbf16>,
    %c8_i32 = arith.constant 8 : i32
    %c0_101 = arith.constant 0 : index
    %c0_102 = arith.constant 0 : index
    %340 = vector.load %arg12[%c0_101, %c0_102] : memref<256x128xbf16, #tpu.memory_space<vmem>>, vector<256x128xbf16>
    %c0_103 = arith.constant 0 : index
    %c0_104 = arith.constant 0 : index
    %341 = vector.load %arg8[%c0_103, %c0_104] : memref<128x128xbf16, #tpu.memory_space<vmem>>, vector<128x128xbf16>
    %cst_105 = arith.constant dense<0.000000e+00> : vector<256x128xf32>
    %342 = tpu.matmul %340, %341, %cst_105 {dimension_numbers = #tpu.dot_dimension_numbers<[1], [0], [0], [1], [0, 0, 1, 1], [], []>} : vector<256x128xbf16>, vector<128x128xbf16>, vector<256x128xf32> -> vector<256x128xf32>
    %c0_106 = arith.constant 0 : index
    %c0_107 = arith.constant 0 : index
    %343 = vector.load %arg9[%c0_106, %c0_107] : memref<1x128xf32, #tpu.memory_space<vmem>>, vector<1x128xf32>
    %344 = vector.broadcast %343 : vector<1x128xf32> to vector<256x128xf32>
    %345 = arith.addf %342, %344 : vector<256x128xf32>
    %c0_108 = arith.constant 0 : index
    %c0_109 = arith.constant 0 : index
    %346 = vector.load %arg10[%c0_108, %c0_109] : memref<256x128xf32, #tpu.memory_space<vmem>>, vector<256x128xf32>
    tpu.vector_store %arg10[%c0_108, %c0_109], %345 {strides = array<i32>} : memref<256x128xf32, #tpu.memory_space<vmem>>, vector<256x128xf32>,
    return
  }
}

</mosaic_0001>

<llo_original>
// kernel: tpu_custom_call.1
$region0: #{tpu_custom_call.1}
  #allocation0 [shape = 'u32[]', space=smem, size = 0x4, offset = 0x4, fixed_abs, tag = 'smem constant byte address 0x4 - core index']
  #allocation1 [shape = 'u32[144,128]{1,0:T(1,128)}', space=vmem, size = 0x12000, scoped, tag = 'internal scratch']
  #allocation2 [shape = 'f32[256,384]{1,0:T(8,128)}', space=vmem, size = 0x60000, scoped, tag = 'scratch operand']
  #allocation3 [shape = 'bf16[256,128]{1,0:T(16,128)(2,1)}', space=vmem, size = 0x10000, scoped, tag = 'scratch operand']
  %s0 = inlined_call_operand.hbm [shape: bf16[256,128], index: 0, kind: input, shape index: {}]
  %s1 = inlined_call_operand.hbm [shape: bf16[256,128], index: 1, kind: input, shape index: {}]
  %s2 = inlined_call_operand.hbm [shape: bf16[128,128], index: 2, kind: input, shape index: {}]
  %s3 = inlined_call_operand.vmem [shape: f32[1,128], index: 3, kind: input, shape index: {}]
  %s4 = inlined_call_operand.hbm [shape: bf16[128,384], index: 4, kind: input, shape index: {}]
  %s5 = inlined_call_operand.vmem [shape: f32[1,384], index: 5, kind: input, shape index: {}]
  %s6 = inlined_call_operand.hbm [shape: bf16[128,384], index: 6, kind: input, shape index: {}]
  %s7 = inlined_call_operand.vmem [shape: f32[1,128], index: 7, kind: input, shape index: {}]
  %s8 = inlined_call_operand.hbm [shape: bf16[128,128], index: 8, kind: input, shape index: {}]
  %s9 = inlined_call_operand.vmem [shape: f32[1,128], index: 9, kind: input, shape index: {}]
  %s10 = inlined_call_operand.hbm [shape: f32[256,128], index: 10, kind: output, shape index: {}]
  %s11 = sld [smem:[#allocation0]]
  $region74: #{tpu_custom_call.1} parent=0
    _
  %s13 = ssub.s32 1, %s11
  %s14 = scalar_select 0, %s13, %s11
  $region1: #{tpu_custom_call.1} parent=0
    #allocation4 [shape = 'u8[65536]{0}', space=vmem, size = 0x10000, scoped, tag = 'input window, operand 0, single buffered']
    #allocation5 [shape = 's32[1]{0}', space=sflag, size = 0x4, scoped, tag = 'scoped memory for tpu_custom_call.1']
    #allocation6 [shape = 's32[1]{0}', space=sflag, size = 0x4, scoped, tag = 'scoped memory for tpu_custom_call.1']
    #allocation7 [shape = 'u8[65536]{0}', space=vmem, size = 0x10000, scoped, tag = 'input window, operand 1, single buffered']
    #allocation8 [shape = 's32[1]{0}', space=sflag, size = 0x4, scoped, tag = 'scoped memory for tpu_custom_call.1']
    #allocation9 [shape = 'u8[32768]{0}', space=vmem, size = 0x8000, scoped, tag = 'input window, operand 2, single buffered']
    #allocation10 [shape = 'u8[98304]{0}', space=vmem, size = 0x18000, scoped, tag = 'input window, operand 4, single buffered']
    #allocation11 [shape = 's32[1]{0}', space=sflag, size = 0x4, scoped, tag = 'scoped memory for tpu_custom_call.1']
    #allocation12 [shape = 'u8[98304]{0}', space=vmem, size = 0x18000, scoped, tag = 'input window, operand 6, single buffered']
    #allocation13 [shape = 'u8[32768]{0}', space=vmem, size = 0x8000, scoped, tag = 'input window, operand 8, single buffered']
    #allocation14 [shape = 's32[1]{0}', space=sflag, size = 0x4, scoped, tag = 'scoped memory for tpu_custom_call.1']
    #allocation15 [shape = 'u8[131072]{0}', space=vmem, size = 0x20000, scoped, tag = 'output window, operand 0, single buffered']
    %15 = vsyncpa [#allocation5], 0
    %16 = vsyncpa [#allocation8], 0
    %17 = vsyncpa [#allocation11], 0
    %18 = vsyncpa [#allocation14], 0
    %19 = vsyncpa [#allocation6], 0
    // Predicated region
    $region2: #{tpu_custom_call.1} parent=1 // pred_check
      _
    $region3: #{tpu_custom_call.1} parent=1 // pred_check_branch
      %21 = sbr.rel (0) target = $region5
    $region4: #{tpu_custom_call.1} parent=1 // pred_region
      %s23 = ssub.s32 2048, 2048
      %24 = vsyncadd [#allocation5], %s23
      %s25 = sshll.u32 [#allocation4], 4
      %s26 = int_to_ptr.vmem [resolvable:$true] %s25
      %31 = dma.hbm_to_vmem [thread:$0]  %s0, 2048, %s26, [#allocation5], 64, 64, 4
    $region5: #{tpu_custom_call.1} parent=1 // pred_fallthru
      _
    // Predicated region
    $region6: #{tpu_custom_call.1} parent=1 // pred_check
      _
    $region7: #{tpu_custom_call.1} parent=1 // pred_check_branch
      %33 = sbr.rel (0) target = $region9
    $region8: #{tpu_custom_call.1} parent=1 // pred_region
      %s35 = ssub.s32 2048, 2048
      %36 = vsyncadd [#allocation8], %s35
      %s37 = sshll.u32 [#allocation7], 4
      %s38 = int_to_ptr.vmem [resolvable:$true] %s37
      %43 = dma.hbm_to_vmem [thread:$0]  %s1, 2048, %s38, [#allocation8], 64, 64, 4
    $region9: #{tpu_custom_call.1} parent=1 // pred_fallthru
      _
    // Predicated region
    $region10: #{tpu_custom_call.1} parent=1 // pred_check
      _
    $region11: #{tpu_custom_call.1} parent=1 // pred_check_branch
      %45 = sbr.rel (0) target = $region13
    $region12: #{tpu_custom_call.1} parent=1 // pred_region
      %s47 = ssub.s32 1024, 1024
      %48 = vsyncadd [#allocation8], %s47
      %s49 = sshll.u32 [#allocation9], 4
      %s50 = int_to_ptr.vmem [resolvable:$true] %s49
      %55 = dma.hbm_to_vmem [thread:$0]  %s2, 1024, %s50, [#allocation8], 64, 64, 4
    $region13: #{tpu_custom_call.1} parent=1 // pred_fallthru
      _
    // Predicated region
    $region14: #{tpu_custom_call.1} parent=1 // pred_check
      _
    $region15: #{tpu_custom_call.1} parent=1 // pred_check_branch
      %57 = sbr.rel (0) target = $region17
    $region16: #{tpu_custom_call.1} parent=1 // pred_region
      _
    $region17: #{tpu_custom_call.1} parent=1 // pred_fallthru
      _
    // Predicated region
    $region18: #{tpu_custom_call.1} parent=1 // pred_check
      _
    $region19: #{tpu_custom_call.1} parent=1 // pred_check_branch
      %59 = sbr.rel (0) target = $region21
    $region20: #{tpu_custom_call.1} parent=1 // pred_region
      %s61 = ssub.s32 3072, 3072
      %62 = vsyncadd [#allocation11], %s61
      %s63 = sshll.u32 [#allocation10], 4
      %s64 = int_to_ptr.vmem [resolvable:$true] %s63
      %69 = dma.hbm_to_vmem [thread:$0]  %s4, 3072, %s64, [#allocation11], 192, 192, 12
    $region21: #{tpu_custom_call.1} parent=1 // pred_fallthru
      _
    // Predicated region
    $region22: #{tpu_custom_call.1} parent=1 // pred_check
      _
    $region23: #{tpu_custom_call.1} parent=1 // pred_check_branch
      %71 = sbr.rel (0) target = $region25
    $region24: #{tpu_custom_call.1} parent=1 // pred_region
      _
    $region25: #{tpu_custom_call.1} parent=1 // pred_fallthru
      _
    // Predicated region
    $region26: #{tpu_custom_call.1} parent=1 // pred_check
      _
    $region27: #{tpu_custom_call.1} parent=1 // pred_check_branch
      %73 = sbr.rel (0) target = $region29
    $region28: #{tpu_custom_call.1} parent=1 // pred_region
      %s75 = ssub.s32 3072, 3072
      %76 = vsyncadd [#allocation11], %s75
      %s77 = sshll.u32 [#allocation12], 4
      %s78 = int_to_ptr.vmem [resolvable:$true] %s77
      %83 = dma.hbm_to_vmem [thread:$0]  %s6, 3072, %s78, [#allocation11], 192, 192, 12
    $region29: #{tpu_custom_call.1} parent=1 // pred_fallthru
      _
    // Predicated region
    $region30: #{tpu_custom_call.1} parent=1 // pred_check
      _
    $region31: #{tpu_custom_call.1} parent=1 // pred_check_branch
      %85 = sbr.rel (0) target = $region33
    $region32: #{tpu_custom_call.1} parent=1 // pred_region
      _
    $region33: #{tpu_custom_call.1} parent=1 // pred_fallthru
      _
    // Predicated region
    $region34: #{tpu_custom_call.1} parent=1 // pred_check
      _
    $region35: #{tpu_custom_call.1} parent=1 // pred_check_branch
      %87 = sbr.rel (0) target = $region37
    $region36: #{tpu_custom_call.1} parent=1 // pred_region
      %s89 = ssub.s32 1024, 1024
      %90 = vsyncadd [#allocation14], %s89
      %s91 = sshll.u32 [#allocation13], 4
      %s92 = int_to_ptr.vmem [resolvable:$true] %s91
      %97 = dma.hbm_to_vmem [thread:$0]  %s8, 1024, %s92, [#allocation14], 64, 64, 4
    $region37: #{tpu_custom_call.1} parent=1 // pred_fallthru
      _
    // Predicated region
    $region38: #{tpu_custom_call.1} parent=1 // pred_check
      _
    $region39: #{tpu_custom_call.1} parent=1 // pred_check_branch
      %99 = sbr.rel (0) target = $region41
    $region40: #{tpu_custom_call.1} parent=1 // pred_region
      _
    $region41: #{tpu_custom_call.1} parent=1 // pred_fallthru
      _
    // Predicated region
    $region42: #{tpu_custom_call.1} parent=1 // pred_check
      _
    $region43: #{tpu_custom_call.1} parent=1 // pred_check_branch
      %101 = sbr.rel (0) target = $region45
    $region44: #{tpu_custom_call.1} parent=1 // pred_region
      %102 = dma.done [#allocation5], 2048
    $region45: #{tpu_custom_call.1} parent=1 // pred_fallthru
      _
    // Predicated region
    $region46: #{tpu_custom_call.1} parent=1 // pred_check
      _
    $region47: #{tpu_custom_call.1} parent=1 // pred_check_branch
      %104 = sbr.rel (0) target = $region49
    $region48: #{tpu_custom_call.1} parent=1 // pred_region
      %105 = dma.done [#allocation8], 2048
    $region49: #{tpu_custom_call.1} parent=1 // pred_fallthru
      _
    // Predicated region
    $region50: #{tpu_custom_call.1} parent=1 // pred_check
      _
    $region51: #{tpu_custom_call.1} parent=1 // pred_check_branch
      %107 = sbr.rel (0) target = $region53
    $region52: #{tpu_custom_call.1} parent=1 // pred_region
      %108 = dma.done [#allocation8], 1024
    $region53: #{tpu_custom_call.1} parent=1 // pred_fallthru
      _
    // Predicated region
    $region54: #{tpu_custom_call.1} parent=1 // pred_check
      _
    $region55: #{tpu_custom_call.1} parent=1 // pred_check_branch
      %110 = sbr.rel (0) target = $region57
    $region56: #{tpu_custom_call.1} parent=1 // pred_region
      %111 = dma.done [#allocation11], 3072
    $region57: #{tpu_custom_call.1} parent=1 // pred_fallthru
      _
    // Predicated region
    $region58: #{tpu_custom_call.1} parent=1 // pred_check
      _
    $region59: #{tpu_custom_call.1} parent=1 // pred_check_branch
      %113 = sbr.rel (0) target = $region61
    $region60: #{tpu_custom_call.1} parent=1 // pred_region
      %114 = dma.done [#allocation11], 3072
    $region61: #{tpu_custom_call.1} parent=1 // pred_fallthru
      _
    // Predicated region
    $region62: #{tpu_custom_call.1} parent=1 // pred_check
      _
    $region63: #{tpu_custom_call.1} parent=1 // pred_check_branch
      %116 = sbr.rel (0) target = $region65
    $region64: #{tpu_custom_call.1} parent=1 // pred_region
      %117 = dma.done [#allocation14], 1024
    $region65: #{tpu_custom_call.1} parent=1 // pred_fallthru
      _
    %v119 = vld [vmem:[#allocation4] sm:$0xf]
    %v120 = vld [vmem:[#allocation4 + $0x4] sm:$0xf]
    %v121 = vld [vmem:[#allocation4 + $0x8] sm:$0xf]
    %v122 = vld [vmem:[#allocation4 + $0xc] sm:$0xf]
    %v123 = vld [vmem:[#allocation4 + $0x10] sm:$0xf]
    %v124 = vld [vmem:[#allocation4 + $0x14] sm:$0xf]
    %v125 = vld [vmem:[#allocation4 + $0x18] sm:$0xf]
    %v126 = vld [vmem:[#allocation4 + $0x1c] sm:$0xf]
    %v127 = vld [vmem:[#allocation4 + $0x20] sm:$0xf]
    %v128 = vld [vmem:[#allocation4 + $0x24] sm:$0xf]
    %v129 = vld [vmem:[#allocation4 + $0x28] sm:$0xf]
    %v130 = vld [vmem:[#allocation4 + $0x2c] sm:$0xf]
    %v131 = vld [vmem:[#allocation4 + $0x30] sm:$0xf]
    %v132 = vld [vmem:[#allocation4 + $0x34] sm:$0xf]
    %v133 = vld [vmem:[#allocation4 + $0x38] sm:$0xf]
    %v134 = vld [vmem:[#allocation4 + $0x3c] sm:$0xf]
    %v135 = vld [vmem:[#allocation4 + $0x40] sm:$0xf]
    %v136 = vld [vmem:[#allocation4 + $0x44] sm:$0xf]
    %v137 = vld [vmem:[#allocation4 + $0x48] sm:$0xf]
    %v138 = vld [vmem:[#allocation4 + $0x4c] sm:$0xf]
    %v139 = vld [vmem:[#allocation4 + $0x50] sm:$0xf]
    %v140 = vld [vmem:[#allocation4 + $0x54] sm:$0xf]
    %v141 = vld [vmem:[#allocation4 + $0x58] sm:$0xf]
    %v142 = vld [vmem:[#allocation4 + $0x5c] sm:$0xf]
    %v143 = vld [vmem:[#allocation4 + $0x60] sm:$0xf]
    %v144 = vld [vmem:[#allocation4 + $0x64] sm:$0xf]
    %v145 = vld [vmem:[#allocation4 + $0x68] sm:$0xf]
    %v146 = vld [vmem:[#allocation4 + $0x6c] sm:$0xf]
    %v147 = vld [vmem:[#allocation4 + $0x70] sm:$0xf]
    %v148 = vld [vmem:[#allocation4 + $0x74] sm:$0xf]
    %v149 = vld [vmem:[#allocation4 + $0x78] sm:$0xf]
    %v150 = vld [vmem:[#allocation4 + $0x7c] sm:$0xf]
    %v151 = vld [vmem:[#allocation9] sm:$0xf]
    %v152 = vld [vmem:[#allocation9 + $0x4] sm:$0xf]
    %v153 = vld [vmem:[#allocation9 + $0x8] sm:$0xf]
    %v154 = vld [vmem:[#allocation9 + $0xc] sm:$0xf]
    %v155 = vld [vmem:[#allocation9 + $0x10] sm:$0xf]
    %v156 = vld [vmem:[#allocation9 + $0x14] sm:$0xf]
    %v157 = vld [vmem:[#allocation9 + $0x18] sm:$0xf]
    %v158 = vld [vmem:[#allocation9 + $0x1c] sm:$0xf]
    %v159 = vld [vmem:[#allocation9 + $0x20] sm:$0xf]
    %v160 = vld [vmem:[#allocation9 + $0x24] sm:$0xf]
    %v161 = vld [vmem:[#allocation9 + $0x28] sm:$0xf]
    %v162 = vld [vmem:[#allocation9 + $0x2c] sm:$0xf]
    %v163 = vld [vmem:[#allocation9 + $0x30] sm:$0xf]
    %v164 = vld [vmem:[#allocation9 + $0x34] sm:$0xf]
    %v165 = vld [vmem:[#allocation9 + $0x38] sm:$0xf]
    %v166 = vld [vmem:[#allocation9 + $0x3c] sm:$0xf]
    %v167 = vld [vmem:[%s3] sm:$0x1]
    %v169 = vlaneseq
    %v170 = vshrl.u32 %v169, 7
    %v171 = vsub.s32 0, %v170
    %v172 = vrot.slane %v167, %v171
    %v206 = vunpack.c.l.b16 %v119
    %v207 = vunpack.c.l.b16 %v120
    %v208 = vunpack.c.l.b16 %v121
    %v209 = vunpack.c.l.b16 %v122
    %v210 = vunpack.c.l.b16 %v123
    %v211 = vunpack.c.l.b16 %v124
    %v212 = vunpack.c.l.b16 %v125
    %v213 = vunpack.c.l.b16 %v126
    %v214 = vunpack.c.l.b16 %v127
    %v215 = vunpack.c.l.b16 %v128
    %v216 = vunpack.c.l.b16 %v129
    %v217 = vunpack.c.l.b16 %v130
    %v218 = vunpack.c.l.b16 %v131
    %v219 = vunpack.c.l.b16 %v132
    %v220 = vunpack.c.l.b16 %v133
    %v221 = vunpack.c.l.b16 %v134
    %v222 = vunpack.c.l.b16 %v135
    %v223 = vunpack.c.l.b16 %v136
    %v224 = vunpack.c.l.b16 %v137
    %v225 = vunpack.c.l.b16 %v138
    %v226 = vunpack.c.l.b16 %v139
    %v227 = vunpack.c.l.b16 %v140
    %v228 = vunpack.c.l.b16 %v141
    %v229 = vunpack.c.l.b16 %v142
    %v230 = vunpack.c.l.b16 %v143
    %v231 = vunpack.c.l.b16 %v144
    %v232 = vunpack.c.l.b16 %v145
    %v233 = vunpack.c.l.b16 %v146
    %v234 = vunpack.c.l.b16 %v147
    %v235 = vunpack.c.l.b16 %v148
    %v236 = vunpack.c.l.b16 %v149
    %v237 = vunpack.c.l.b16 %v150
    %v238 = vpack.c.b16 %v207, %v206
    %v239 = vpack.c.b16 %v209, %v208
    %v240 = vpack.c.b16 %v211, %v210
    %v241 = vpack.c.b16 %v213, %v212
    %v242 = vpack.c.b16 %v215, %v214
    %v243 = vpack.c.b16 %v217, %v216
    %v244 = vpack.c.b16 %v219, %v218
    %v245 = vpack.c.b16 %v221, %v220
    %v246 = vpack.c.b16 %v223, %v222
    %v247 = vpack.c.b16 %v225, %v224
    %v248 = vpack.c.b16 %v227, %v226
    %v249 = vpack.c.b16 %v229, %v228
    %v250 = vpack.c.b16 %v231, %v230
    %v251 = vpack.c.b16 %v233, %v232
    %v252 = vpack.c.b16 %v235, %v234
    %v253 = vpack.c.b16 %v237, %v236
    %v286 = vunpack.c.l.b16 %v151
    %v287 = vunpack.c.l.b16 %v152
    %v288 = vunpack.c.l.b16 %v153
    %v289 = vunpack.c.l.b16 %v154
    %v290 = vunpack.c.l.b16 %v155
    %v291 = vunpack.c.l.b16 %v156
    %v292 = vunpack.c.l.b16 %v157
    %v293 = vunpack.c.l.b16 %v158
    %v294 = vunpack.c.l.b16 %v159
    %v295 = vunpack.c.l.b16 %v160
    %v296 = vunpack.c.l.b16 %v161
    %v297 = vunpack.c.l.b16 %v162
    %v298 = vunpack.c.l.b16 %v163
    %v299 = vunpack.c.l.b16 %v164
    %v300 = vunpack.c.l.b16 %v165
    %v301 = vunpack.c.l.b16 %v166
    %v302 = vpack.c.b16 %v287, %v286
    %v303 = vpack.c.b16 %v289, %v288
    %v304 = vpack.c.b16 %v291, %v290
    %v305 = vpack.c.b16 %v293, %v292
    %v306 = vpack.c.b16 %v295, %v294
    %v307 = vpack.c.b16 %v297, %v296
    %v308 = vpack.c.b16 %v299, %v298
    %v309 = vpack.c.b16 %v301, %v300
    %318 = vmatprep.subr.bf16.mxu0 0
    %319 = vmatpush1.bf16.msra.mxu0 %v302
    %320 = vmatprep.subr.bf16.mxu0 0
    %321 = vmatpush1.bf16.msra.mxu0 %v303
    %322 = vmatprep.subr.bf16.mxu0 0
    %323 = vmatpush1.bf16.msra.mxu0 %v304
    %324 = vmatprep.subr.bf16.mxu0 0
    %325 = vmatpush1.bf16.msra.mxu0 %v305
    %326 = vmatprep.subr.bf16.mxu0 0
    %327 = vmatpush1.bf16.msra.mxu0 %v306
    %328 = vmatprep.subr.bf16.mxu0 0
    %329 = vmatpush1.bf16.msra.mxu0 %v307
    %330 = vmatprep.subr.bf16.mxu0 0
    %331 = vmatpush1.bf16.msra.mxu0 %v308
    %332 = vmatprep.subr.bf16.mxu0 0
    %333 = vmatpush1.bf16.msra.mxu0 %v309
    %334 = vmatprep.subr.bf16.mxu0 0
    %335 = vmatpush1.bf16.msra.mxu0 0
    %336 = vmatprep.subr.bf16.mxu0 0
    %337 = vmatpush1.bf16.msra.mxu0 0
    %338 = vmatprep.subr.bf16.mxu0 0
    %339 = vmatpush1.bf16.msra.mxu0 0
    %340 = vmatprep.subr.bf16.mxu0 0
    %341 = vmatpush1.bf16.msra.mxu0 0
    %342 = vmatprep.subr.bf16.mxu0 0
    %343 = vmatpush1.bf16.msra.mxu0 0
    %344 = vmatprep.subr.bf16.mxu0 0
    %345 = vmatpush1.bf16.msra.mxu0 0
    %346 = vmatprep.subr.bf16.mxu0 0
    %347 = vmatpush1.bf16.msra.mxu0 0
    %348 = vmatprep.subr.bf16.mxu0 0
    %349 = vmatpush1.bf16.msra.mxu0 0
    %350 = vmatprep.mubr.bf16.mxu0 0
    %351 = vmatmul.mubr.bf16.gmra.mrb[0].mxu0 %v238
    %v352 = vpop.f32.mrb[0].mxu0
    %v353 = vadd.f32 %v172, %v352
    %v354 = vpop.f32.mrb[0].mxu0
    %v355 = vpop.f32.mrb[0].mxu0
    %v356 = vadd.f32 %v172, %v355
    %v357 = vpop.f32.mrb[0].mxu0
    %358 = vmatprep.mubr.bf16.mxu0 0
    %359 = vmatmul.mubr.bf16.gmra.mrb[0].mxu0 %v239
    %v360 = vpop.f32.mrb[0].mxu0
    %v361 = vadd.f32 %v172, %v360
    %v362 = vpop.f32.mrb[0].mxu0
    %v363 = vpop.f32.mrb[0].mxu0
    %v364 = vadd.f32 %v172, %v363
    %v365 = vpop.f32.mrb[0].mxu0
    %366 = vmatprep.mubr.bf16.mxu0 0
    %367 = vmatmul.mubr.bf16.gmra.mrb[0].mxu0 %v240
    %v368 = vpop.f32.mrb[0].mxu0
    %v369 = vadd.f32 %v172, %v368
    %v370 = vpop.f32.mrb[0].mxu0
    %v371 = vpop.f32.mrb[0].mxu0
    %v372 = vadd.f32 %v172, %v371
    %v373 = vpop.f32.mrb[0].mxu0
    %374 = vmatprep.mubr.bf16.mxu0 0
    %375 = vmatmul.mubr.bf16.gmra.mrb[0].mxu0 %v241
    %v376 = vpop.f32.mrb[0].mxu0
    %v377 = vadd.f32 %v172, %v376
    %v378 = vpop.f32.mrb[0].mxu0
    %v379 = vpop.f32.mrb[0].mxu0
    %v380 = vadd.f32 %v172, %v379
    %v381 = vpop.f32.mrb[0].mxu0
    %382 = vmatprep.mubr.bf16.mxu0 0
    %383 = vmatmul.mubr.bf16.gmra.mrb[0].mxu0 %v242
    %v384 = vpop.f32.mrb[0].mxu0
    %v385 = vadd.f32 %v172, %v384
    %v386 = vpop.f32.mrb[0].mxu0
    %v387 = vpop.f32.mrb[0].mxu0
    %v388 = vadd.f32 %v172, %v387
    %v389 = vpop.f32.mrb[0].mxu0
    %390 = vmatprep.mubr.bf16.mxu0 0
    %391 = vmatmul.mubr.bf16.gmra.mrb[0].mxu0 %v243
    %v392 = vpop.f32.mrb[0].mxu0
    %v393 = vadd.f32 %v172, %v392
    %v394 = vpop.f32.mrb[0].mxu0
    %v395 = vpop.f32.mrb[0].mxu0
    %v396 = vadd.f32 %v172, %v395
    %v397 = vpop.f32.mrb[0].mxu0
    %398 = vmatprep.mubr.bf16.mxu0 0
    %399 = vmatmul.mubr.bf16.gmra.mrb[0].mxu0 %v244
    %v400 = vpop.f32.mrb[0].mxu0
    %v401 = vadd.f32 %v172, %v400
    %v402 = vpop.f32.mrb[0].mxu0
    %v403 = vpop.f32.mrb[0].mxu0
    %v404 = vadd.f32 %v172, %v403
    %v405 = vpop.f32.mrb[0].mxu0
    %406 = vmatprep.mubr.bf16.mxu0 0
    %407 = vmatmul.mubr.bf16.gmra.mrb[0].mxu0 %v245
    %v408 = vpop.f32.mrb[0].mxu0
    %v409 = vadd.f32 %v172, %v408
    %v410 = vpop.f32.mrb[0].mxu0
    %v411 = vpop.f32.mrb[0].mxu0
    %v412 = vadd.f32 %v172, %v411
    %v413 = vpop.f32.mrb[0].mxu0
    %414 = vmatprep.mubr.bf16.mxu0 0
    %415 = vmatmul.mubr.bf16.gmra.mrb[0].mxu0 %v246
    %v416 = vpop.f32.mrb[0].mxu0
    %v417 = vadd.f32 %v172, %v416
    %v418 = vpop.f32.mrb[0].mxu0
    %v419 = vpop.f32.mrb[0].mxu0
    %v420 = vadd.f32 %v172, %v419
    %v421 = vpop.f32.mrb[0].mxu0
    %422 = vmatprep.mubr.bf16.mxu0 0
    %423 = vmatmul.mubr.bf16.gmra.mrb[0].mxu0 %v247
    %v424 = vpop.f32.mrb[0].mxu0
    %v425 = vadd.f32 %v172, %v424
    %v426 = vpop.f32.mrb[0].mxu0
    %v427 = vpop.f32.mrb[0].mxu0
    %v428 = vadd.f32 %v172, %v427
    %v429 = vpop.f32.mrb[0].mxu0
    %430 = vmatprep.mubr.bf16.mxu0 0
    %431 = vmatmul.mubr.bf16.gmra.mrb[0].mxu0 %v248
    %v432 = vpop.f32.mrb[0].mxu0
    %v433 = vadd.f32 %v172, %v432
    %v434 = vpop.f32.mrb[0].mxu0
    %v435 = vpop.f32.mrb[0].mxu0
    %v436 = vadd.f32 %v172, %v435
    %v437 = vpop.f32.mrb[0].mxu0
    %438 = vmatprep.mubr.bf16.mxu0 0
    %439 = vmatmul.mubr.bf16.gmra.mrb[0].mxu0 %v249
    %v440 = vpop.f32.mrb[0].mxu0
    %v441 = vadd.f32 %v172, %v440
    %v442 = vpop.f32.mrb[0].mxu0
    %v443 = vpop.f32.mrb[0].mxu0
    %v444 = vadd.f32 %v172, %v443
    %v445 = vpop.f32.mrb[0].mxu0
    %446 = vmatprep.mubr.bf16.mxu0 0
    %447 = vmatmul.mubr.bf16.gmra.mrb[0].mxu0 %v250
    %v448 = vpop.f32.mrb[0].mxu0
    %v449 = vadd.f32 %v172, %v448
    %v450 = vpop.f32.mrb[0].mxu0
    %v451 = vpop.f32.mrb[0].mxu0
    %v452 = vadd.f32 %v172, %v451
    %v453 = vpop.f32.mrb[0].mxu0
    %454 = vmatprep.mubr.bf16.mxu0 0
    %455 = vmatmul.mubr.bf16.gmra.mrb[0].mxu0 %v251
    %v456 = vpop.f32.mrb[0].mxu0
    %v457 = vadd.f32 %v172, %v456
    %v458 = vpop.f32.mrb[0].mxu0
    %v459 = vpop.f32.mrb[0].mxu0
    %v460 = vadd.f32 %v172, %v459
    %v461 = vpop.f32.mrb[0].mxu0
    %462 = vmatprep.mubr.bf16.mxu0 0
    %463 = vmatmul.mubr.bf16.gmra.mrb[0].mxu0 %v252
    %v464 = vpop.f32.mrb[0].mxu0
    %v465 = vadd.f32 %v172, %v464
    %v466 = vpop.f32.mrb[0].mxu0
    %v467 = vpop.f32.mrb[0].mxu0
    %v468 = vadd.f32 %v172, %v467
    %v469 = vpop.f32.mrb[0].mxu0
    %470 = vmatprep.mubr.bf16.mxu0 0
    %471 = vmatmul.mubr.bf16.gmra.mrb[0].mxu0 %v253
    %v472 = vpop.f32.mrb[0].mxu0
    %v473 = vadd.f32 %v172, %v472
    %v474 = vpop.f32.mrb[0].mxu0
    %v475 = vpop.f32.mrb[0].mxu0
    %v476 = vadd.f32 %v172, %v475
    %v477 = vpop.f32.mrb[0].mxu0
    %478 = vdwg.mxu0
    %v479 = vmax.f32 %v353, %v369
    %v480 = vmax.f32 %v356, %v372
    %v481 = vmax.f32 %v361, %v377
    %v482 = vmax.f32 %v364, %v380
    %v483 = vmax.f32 %v479, %v385
    %v484 = vmax.f32 %v480, %v388
    %v485 = vmax.f32 %v481, %v393
    %v486 = vmax.f32 %v482, %v396
    %v487 = vmax.f32 %v483, %v401
    %v488 = vmax.f32 %v484, %v404
    %v489 = vmax.f32 %v485, %v409
    %v490 = vmax.f32 %v486, %v412
    %v491 = vmax.f32 %v487, %v417
    %v492 = vmax.f32 %v488, %v420
    %v493 = vmax.f32 %v489, %v425
    %v494 = vmax.f32 %v490, %v428
    %v495 = vmax.f32 %v491, %v433
    %v496 = vmax.f32 %v492, %v436
    %v497 = vmax.f32 %v493, %v441
    %v498 = vmax.f32 %v494, %v444
    %v499 = vmax.f32 %v495, %v449
    %v500 = vmax.f32 %v496, %v452
    %v501 = vmax.f32 %v497, %v457
    %v502 = vmax.f32 %v498, %v460
    %v503 = vmax.f32 %v499, %v465
    %v504 = vmax.f32 %v500, %v468
    %v505 = vmax.f32 %v501, %v473
    %v506 = vmax.f32 %v502, %v476
    %v507 = vld [vmem:[#allocation7] sm:$0xf]
    %v508 = vld [vmem:[#allocation7 + $0x4] sm:$0xf]
    %v509 = vld [vmem:[#allocation7 + $0x8] sm:$0xf]
    %v510 = vld [vmem:[#allocation7 + $0xc] sm:$0xf]
    %v511 = vld [vmem:[#allocation7 + $0x10] sm:$0xf]
    %v512 = vld [vmem:[#allocation7 + $0x14] sm:$0xf]
    %v513 = vld [vmem:[#allocation7 + $0x18] sm:$0xf]
    %v514 = vld [vmem:[#allocation7 + $0x1c] sm:$0xf]
    %v515 = vld [vmem:[#allocation7 + $0x20] sm:$0xf]
    %v516 = vld [vmem:[#allocation7 + $0x24] sm:$0xf]
    %v517 = vld [vmem:[#allocation7 + $0x28] sm:$0xf]
    %v518 = vld [vmem:[#allocation7 + $0x2c] sm:$0xf]
    %v519 = vld [vmem:[#allocation7 + $0x30] sm:$0xf]
    %v520 = vld [vmem:[#allocation7 + $0x34] sm:$0xf]
    %v521 = vld [vmem:[#allocation7 + $0x38] sm:$0xf]
    %v522 = vld [vmem:[#allocation7 + $0x3c] sm:$0xf]
    %v523 = vld [vmem:[#allocation7 + $0x40] sm:$0xf]
    %v524 = vld [vmem:[#allocation7 + $0x44] sm:$0xf]
    %v525 = vld [vmem:[#allocation7 + $0x48] sm:$0xf]
    %v526 = vld [vmem:[#allocation7 + $0x4c] sm:$0xf]
    %v527 = vld [vmem:[#allocation7 + $0x50] sm:$0xf]
    %v528 = vld [vmem:[#allocation7 + $0x54] sm:$0xf]
    %v529 = vld [vmem:[#allocation7 + $0x58] sm:$0xf]
    %v530 = vld [vmem:[#allocation7 + $0x5c] sm:$0xf]
    %v531 = vld [vmem:[#allocation7 + $0x60] sm:$0xf]
    %v532 = vld [vmem:[#allocation7 + $0x64] sm:$0xf]
    %v533 = vld [vmem:[#allocation7 + $0x68] sm:$0xf]
    %v534 = vld [vmem:[#allocation7 + $0x6c] sm:$0xf]
    %v535 = vld [vmem:[#allocation7 + $0x70] sm:$0xf]
    %v536 = vld [vmem:[#allocation7 + $0x74] sm:$0xf]
    %v537 = vld [vmem:[#allocation7 + $0x78] sm:$0xf]
    %v538 = vld [vmem:[#allocation7 + $0x7c] sm:$0xf]
    %v539 = vld [vmem:[#allocation10] sm:$0xff]
    %v540 = vld [vmem:[#allocation10 + $0x8] sm:$0xf]
    %v541 = vld [vmem:[#allocation10 + $0xc] sm:$0xff]
    %v542 = vld [vmem:[#allocation10 + $0x14] sm:$0xf]
    %v543 = vld [vmem:[#allocation10 + $0x18] sm:$0xff]
    %v544 = vld [vmem:[#allocation10 + $0x20] sm:$0xf]
    %v545 = vld [vmem:[#allocation10 + $0x24] sm:$0xff]
    %v546 = vld [vmem:[#allocation10 + $0x2c] sm:$0xf]
    %v547 = vld [vmem:[#allocation10 + $0x30] sm:$0xff]
    %v548 = vld [vmem:[#allocation10 + $0x38] sm:$0xf]
    %v549 = vld [vmem:[#allocation10 + $0x3c] sm:$0xff]
    %v550 = vld [vmem:[#allocation10 + $0x44] sm:$0xf]
    %v551 = vld [vmem:[#allocation10 + $0x48] sm:$0xff]
    %v552 = vld [vmem:[#allocation10 + $0x50] sm:$0xf]
    %v553 = vld [vmem:[#allocation10 + $0x54] sm:$0xff]
    %v554 = vld [vmem:[#allocation10 + $0x5c] sm:$0xf]
    %v555 = vld [vmem:[#allocation10 + $0x60] sm:$0xff]
    %v556 = vld [vmem:[#allocation10 + $0x68] sm:$0xf]
    %v557 = vld [vmem:[#allocation10 + $0x6c] sm:$0xff]
    %v558 = vld [vmem:[#allocation10 + $0x74] sm:$0xf]
    %v559 = vld [vmem:[#allocation10 + $0x78] sm:$0xff]
    %v560 = vld [vmem:[#allocation10 + $0x80] sm:$0xf]
    %v561 = vld [vmem:[#allocation10 + $0x84] sm:$0xff]
    %v562 = vld [vmem:[#allocation10 + $0x8c] sm:$0xf]
    %v563 = vld [vmem:[#allocation10 + $0x90] sm:$0xff]
    %v564 = vld [vmem:[#allocation10 + $0x98] sm:$0xf]
    %v565 = vld [vmem:[#allocation10 + $0x9c] sm:$0xff]
    %v566 = vld [vmem:[#allocation10 + $0xa4] sm:$0xf]
    %v567 = vld [vmem:[#allocation10 + $0xa8] sm:$0xff]
    %v568 = vld [vmem:[#allocation10 + $0xb0] sm:$0xf]
    %v569 = vld [vmem:[#allocation10 + $0xb4] sm:$0xff]
    %v570 = vld [vmem:[#allocation10 + $0xbc] sm:$0xf]
    %v571 = vld [vmem:[%s5] sm:$0x7]
    %v573 = vlaneseq
    %v574 = vshrl.u32 %v573, 7
    %v575 = vsub.s32 0, %v574
    %v576 = vrot.slane %v571, %v575
    %v577 = vlaneseq
    %v578 = vshrl.u32 %v577, 7
    %v579 = vsub.s32 1, %v578
    %v580 = vrot.slane %v571, %v579
    %v581 = vlaneseq
    %v582 = vshrl.u32 %v581, 7
    %v583 = vsub.s32 2, %v582
    %v584 = vrot.slane %v571, %v583
    %v620 = vunpack.c.l.b16 %v507
    %v621 = vunpack.c.l.b16 %v508
    %v622 = vunpack.c.l.b16 %v509
    %v623 = vunpack.c.l.b16 %v510
    %v624 = vunpack.c.l.b16 %v511
    %v625 = vunpack.c.l.b16 %v512
    %v626 = vunpack.c.l.b16 %v513
    %v627 = vunpack.c.l.b16 %v514
    %v628 = vunpack.c.l.b16 %v515
    %v629 = vunpack.c.l.b16 %v516
    %v630 = vunpack.c.l.b16 %v517
    %v631 = vunpack.c.l.b16 %v518
    %v632 = vunpack.c.l.b16 %v519
    %v633 = vunpack.c.l.b16 %v520
    %v634 = vunpack.c.l.b16 %v521
    %v635 = vunpack.c.l.b16 %v522
    %v636 = vunpack.c.l.b16 %v523
    %v637 = vunpack.c.l.b16 %v524
    %v638 = vunpack.c.l.b16 %v525
    %v639 = vunpack.c.l.b16 %v526
    %v640 = vunpack.c.l.b16 %v527
    %v641 = vunpack.c.l.b16 %v528
    %v642 = vunpack.c.l.b16 %v529
    %v643 = vunpack.c.l.b16 %v530
    %v644 = vunpack.c.l.b16 %v531
    %v645 = vunpack.c.l.b16 %v532
    %v646 = vunpack.c.l.b16 %v533
    %v647 = vunpack.c.l.b16 %v534
    %v648 = vunpack.c.l.b16 %v535
    %v649 = vunpack.c.l.b16 %v536
    %v650 = vunpack.c.l.b16 %v537
    %v651 = vunpack.c.l.b16 %v538
    %v652 = vpack.c.b16 %v621, %v620
    %v653 = vpack.c.b16 %v623, %v622
    %v654 = vpack.c.b16 %v625, %v624
    %v655 = vpack.c.b16 %v627, %v626
    %v656 = vpack.c.b16 %v629, %v628
    %v657 = vpack.c.b16 %v631, %v630
    %v658 = vpack.c.b16 %v633, %v632
    %v659 = vpack.c.b16 %v635, %v634
    %v660 = vpack.c.b16 %v637, %v636
    %v661 = vpack.c.b16 %v639, %v638
    %v662 = vpack.c.b16 %v641, %v640
    %v663 = vpack.c.b16 %v643, %v642
    %v664 = vpack.c.b16 %v645, %v644
    %v665 = vpack.c.b16 %v647, %v646
    %v666 = vpack.c.b16 %v649, %v648
    %v667 = vpack.c.b16 %v651, %v650
    %v716 = vunpack.c.l.b16 %v539
    %v717 = vunpack.c.h.b16 %v539
    %v718 = vunpack.c.l.b16 %v540
    %v719 = vunpack.c.l.b16 %v541
    %v720 = vunpack.c.h.b16 %v541
    %v721 = vunpack.c.l.b16 %v542
    %v722 = vunpack.c.l.b16 %v543
    %v723 = vunpack.c.h.b16 %v543
    %v724 = vunpack.c.l.b16 %v544
    %v725 = vunpack.c.l.b16 %v545
    %v726 = vunpack.c.h.b16 %v545
    %v727 = vunpack.c.l.b16 %v546
    %v728 = vunpack.c.l.b16 %v547
    %v729 = vunpack.c.h.b16 %v547
    %v730 = vunpack.c.l.b16 %v548
    %v731 = vunpack.c.l.b16 %v549
    %v732 = vunpack.c.h.b16 %v549
    %v733 = vunpack.c.l.b16 %v550
    %v734 = vunpack.c.l.b16 %v551
    %v735 = vunpack.c.h.b16 %v551
    %v736 = vunpack.c.l.b16 %v552
    %v737 = vunpack.c.l.b16 %v553
    %v738 = vunpack.c.h.b16 %v553
    %v739 = vunpack.c.l.b16 %v554
    %v740 = vunpack.c.l.b16 %v555
    %v741 = vunpack.c.h.b16 %v555
    %v742 = vunpack.c.l.b16 %v556
    %v743 = vunpack.c.l.b16 %v557
    %v744 = vunpack.c.h.b16 %v557
    %v745 = vunpack.c.l.b16 %v558
    %v746 = vunpack.c.l.b16 %v559
    %v747 = vunpack.c.h.b16 %v559
    %v748 = vunpack.c.l.b16 %v560
    %v749 = vunpack.c.l.b16 %v561
    %v750 = vunpack.c.h.b16 %v561
    %v751 = vunpack.c.l.b16 %v562
    %v752 = vunpack.c.l.b16 %v563
    %v753 = vunpack.c.h.b16 %v563
    %v754 = vunpack.c.l.b16 %v564
    %v755 = vunpack.c.l.b16 %v565
    %v756 = vunpack.c.h.b16 %v565
    %v757 = vunpack.c.l.b16 %v566
    %v758 = vunpack.c.l.b16 %v567
    %v759 = vunpack.c.h.b16 %v567
    %v760 = vunpack.c.l.b16 %v568
    %v761 = vunpack.c.l.b16 %v569
    %v762 = vunpack.c.h.b16 %v569
    %v763 = vunpack.c.l.b16 %v570
    %v764 = vpack.c.b16 %v719, %v716
    %v765 = vpack.c.b16 %v720, %v717
    %v766 = vpack.c.b16 %v721, %v718
    %v767 = vpack.c.b16 %v725, %v722
    %v768 = vpack.c.b16 %v726, %v723
    %v769 = vpack.c.b16 %v727, %v724
    %v770 = vpack.c.b16 %v731, %v728
    %v771 = vpack.c.b16 %v732, %v729
    %v772 = vpack.c.b16 %v733, %v730
    %v773 = vpack.c.b16 %v737, %v734
    %v774 = vpack.c.b16 %v738, %v735
    %v775 = vpack.c.b16 %v739, %v736
    %v776 = vpack.c.b16 %v743, %v740
    %v777 = vpack.c.b16 %v744, %v741
    %v778 = vpack.c.b16 %v745, %v742
    %v779 = vpack.c.b16 %v749, %v746
    %v780 = vpack.c.b16 %v750, %v747
    %v781 = vpack.c.b16 %v751, %v748
    %v782 = vpack.c.b16 %v755, %v752
    %v783 = vpack.c.b16 %v756, %v753
    %v784 = vpack.c.b16 %v757, %v754
    %v785 = vpack.c.b16 %v761, %v758
    %v786 = vpack.c.b16 %v762, %v759
    %v787 = vpack.c.b16 %v763, %v760
    %812 = vmatprep.subr.bf16.mxu0 %v765
    %813 = vmatpush1.bf16.msra.mxu0 %v764
    %814 = vmatprep.subr.bf16.mxu0 %v768
    %815 = vmatpush1.bf16.msra.mxu0 %v767
    %816 = vmatprep.subr.bf16.mxu0 %v771
    %817 = vmatpush1.bf16.msra.mxu0 %v770
    %818 = vmatprep.subr.bf16.mxu0 %v774
    %819 = vmatpush1.bf16.msra.mxu0 %v773
    %820 = vmatprep.subr.bf16.mxu0 %v777
    %821 = vmatpush1.bf16.msra.mxu0 %v776
    %822 = vmatprep.subr.bf16.mxu0 %v780
    %823 = vmatpush1.bf16.msra.mxu0 %v779
    %824 = vmatprep.subr.bf16.mxu0 %v783
    %825 = vmatpush1.bf16.msra.mxu0 %v782
    %826 = vmatprep.subr.bf16.mxu0 %v786
    %827 = vmatpush1.bf16.msra.mxu0 %v785
    %828 = vmatprep.subr.bf16.mxu0 0
    %829 = vmatpush1.bf16.msra.mxu0 0
    %830 = vmatprep.subr.bf16.mxu0 0
    %831 = vmatpush1.bf16.msra.mxu0 0
    %832 = vmatprep.subr.bf16.mxu0 0
    %833 = vmatpush1.bf16.msra.mxu0 0
    %834 = vmatprep.subr.bf16.mxu0 0
    %835 = vmatpush1.bf16.msra.mxu0 0
    %836 = vmatprep.subr.bf16.mxu0 0
    %837 = vmatpush1.bf16.msra.mxu0 0
    %838 = vmatprep.subr.bf16.mxu0 0
    %839 = vmatpush1.bf16.msra.mxu0 0
    %840 = vmatprep.subr.bf16.mxu0 0
    %841 = vmatpush1.bf16.msra.mxu0 0
    %842 = vmatprep.subr.bf16.mxu0 0
    %843 = vmatpush1.bf16.msra.mxu0 0
    %844 = vmatprep.mubr.bf16.mxu0 0
    %845 = vmatmul.mubr.bf16.gmra.mrb[0].mxu0 %v652
    %v846 = vpop.f32.mrb[0].mxu0
    %v847 = vadd.f32 %v576, %v846
    %v848 = vpop.f32.mrb[0].mxu0
    %v849 = vadd.f32 %v580, %v848
    %v850 = vpop.f32.mrb[0].mxu0
    %v851 = vadd.f32 %v576, %v850
    %v852 = vpop.f32.mrb[0].mxu0
    %v853 = vadd.f32 %v580, %v852
    %854 = vmatprep.mubr.bf16.mxu0 0
    %855 = vmatmul.mubr.bf16.gmra.mrb[0].mxu0 %v653
    %v856 = vpop.f32.mrb[0].mxu0
    %v857 = vadd.f32 %v576, %v856
    %v858 = vpop.f32.mrb[0].mxu0
    %v859 = vadd.f32 %v580, %v858
    %v860 = vpop.f32.mrb[0].mxu0
    %v861 = vadd.f32 %v576, %v860
    %v862 = vpop.f32.mrb[0].mxu0
    %v863 = vadd.f32 %v580, %v862
    %864 = vmatprep.mubr.bf16.mxu0 0
    %865 = vmatmul.mubr.bf16.gmra.mrb[0].mxu0 %v654
    %v866 = vpop.f32.mrb[0].mxu0
    %v867 = vadd.f32 %v576, %v866
    %v868 = vpop.f32.mrb[0].mxu0
    %v869 = vadd.f32 %v580, %v868
    %v870 = vpop.f32.mrb[0].mxu0
    %v871 = vadd.f32 %v576, %v870
    %v872 = vpop.f32.mrb[0].mxu0
    %v873 = vadd.f32 %v580, %v872
    %874 = vmatprep.mubr.bf16.mxu0 0
    %875 = vmatmul.mubr.bf16.gmra.mrb[0].mxu0 %v655
    %v876 = vpop.f32.mrb[0].mxu0
    %v877 = vadd.f32 %v576, %v876
    %v878 = vpop.f32.mrb[0].mxu0
    %v879 = vadd.f32 %v580, %v878
    %v880 = vpop.f32.mrb[0].mxu0
    %v881 = vadd.f32 %v576, %v880
    %v882 = vpop.f32.mrb[0].mxu0
    %v883 = vadd.f32 %v580, %v882
    %884 = vmatprep.mubr.bf16.mxu0 0
    %885 = vmatmul.mubr.bf16.gmra.mrb[0].mxu0 %v656
    %v886 = vpop.f32.mrb[0].mxu0
    %v887 = vadd.f32 %v576, %v886
    %v888 = vpop.f32.mrb[0].mxu0
    %v889 = vadd.f32 %v580, %v888
    %v890 = vpop.f32.mrb[0].mxu0
    %v891 = vadd.f32 %v576, %v890
    %v892 = vpop.f32.mrb[0].mxu0
    %v893 = vadd.f32 %v580, %v892
    %894 = vmatprep.mubr.bf16.mxu0 0
    %895 = vmatmul.mubr.bf16.gmra.mrb[0].mxu0 %v657
    %v896 = vpop.f32.mrb[0].mxu0
    %v897 = vadd.f32 %v576, %v896
    %v898 = vpop.f32.mrb[0].mxu0
    %v899 = vadd.f32 %v580, %v898
    %v900 = vpop.f32.mrb[0].mxu0
    %v901 = vadd.f32 %v576, %v900
    %v902 = vpop.f32.mrb[0].mxu0
    %v903 = vadd.f32 %v580, %v902
    %904 = vmatprep.mubr.bf16.mxu0 0
    %905 = vmatmul.mubr.bf16.gmra.mrb[0].mxu0 %v658
    %v906 = vpop.f32.mrb[0].mxu0
    %v907 = vadd.f32 %v576, %v906
    %v908 = vpop.f32.mrb[0].mxu0
    %v909 = vadd.f32 %v580, %v908
    %v910 = vpop.f32.mrb[0].mxu0
    %v911 = vadd.f32 %v576, %v910
    %v912 = vpop.f32.mrb[0].mxu0
    %v913 = vadd.f32 %v580, %v912
    %914 = vmatprep.mubr.bf16.mxu0 0
    %915 = vmatmul.mubr.bf16.gmra.mrb[0].mxu0 %v659
    %v916 = vpop.f32.mrb[0].mxu0
    %v917 = vadd.f32 %v576, %v916
    %v918 = vpop.f32.mrb[0].mxu0
    %v919 = vadd.f32 %v580, %v918
    %v920 = vpop.f32.mrb[0].mxu0
    %v921 = vadd.f32 %v576, %v920
    %v922 = vpop.f32.mrb[0].mxu0
    %v923 = vadd.f32 %v580, %v922
    %924 = vmatprep.mubr.bf16.mxu0 0
    %925 = vmatmul.mubr.bf16.gmra.mrb[0].mxu0 %v660
    %v926 = vpop.f32.mrb[0].mxu0
    %v927 = vadd.f32 %v576, %v926
    %v928 = vpop.f32.mrb[0].mxu0
    %v929 = vadd.f32 %v580, %v928
    %v930 = vpop.f32.mrb[0].mxu0
    %v931 = vadd.f32 %v576, %v930
    %v932 = vpop.f32.mrb[0].mxu0
    %v933 = vadd.f32 %v580, %v932
    %934 = vmatprep.mubr.bf16.mxu0 0
    %935 = vmatmul.mubr.bf16.gmra.mrb[0].mxu0 %v661
    %v936 = vpop.f32.mrb[0].mxu0
    %v937 = vadd.f32 %v576, %v936
    %v938 = vpop.f32.mrb[0].mxu0
    %v939 = vadd.f32 %v580, %v938
    %v940 = vpop.f32.mrb[0].mxu0
    %v941 = vadd.f32 %v576, %v940
    %v942 = vpop.f32.mrb[0].mxu0
    %v943 = vadd.f32 %v580, %v942
    %944 = vmatprep.mubr.bf16.mxu0 0
    %945 = vmatmul.mubr.bf16.gmra.mrb[0].mxu0 %v662
    %v946 = vpop.f32.mrb[0].mxu0
    %v947 = vadd.f32 %v576, %v946
    %v948 = vpop.f32.mrb[0].mxu0
    %v949 = vadd.f32 %v580, %v948
    %v950 = vpop.f32.mrb[0].mxu0
    %v951 = vadd.f32 %v576, %v950
    %v952 = vpop.f32.mrb[0].mxu0
    %v953 = vadd.f32 %v580, %v952
    %954 = vmatprep.mubr.bf16.mxu0 0
    %955 = vmatmul.mubr.bf16.gmra.mrb[0].mxu0 %v663
    %v956 = vpop.f32.mrb[0].mxu0
    %v957 = vadd.f32 %v576, %v956
    %v958 = vpop.f32.mrb[0].mxu0
    %v959 = vadd.f32 %v580, %v958
    %v960 = vpop.f32.mrb[0].mxu0
    %v961 = vadd.f32 %v576, %v960
    %v962 = vpop.f32.mrb[0].mxu0
    %v963 = vadd.f32 %v580, %v962
    %964 = vmatprep.mubr.bf16.mxu0 0
    %965 = vmatmul.mubr.bf16.gmra.mrb[0].mxu0 %v664
    %v966 = vpop.f32.mrb[0].mxu0
    %v967 = vadd.f32 %v576, %v966
    %v968 = vpop.f32.mrb[0].mxu0
    %v969 = vadd.f32 %v580, %v968
    %v970 = vpop.f32.mrb[0].mxu0
    %v971 = vadd.f32 %v576, %v970
    %v972 = vpop.f32.mrb[0].mxu0
    %v973 = vadd.f32 %v580, %v972
    %974 = vmatprep.mubr.bf16.mxu0 0
    %975 = vmatmul.mubr.bf16.gmra.mrb[0].mxu0 %v665
    %v976 = vpop.f32.mrb[0].mxu0
    %v977 = vadd.f32 %v576, %v976
    %v978 = vpop.f32.mrb[0].mxu0
    %v979 = vadd.f32 %v580, %v978
    %v980 = vpop.f32.mrb[0].mxu0
    %v981 = vadd.f32 %v576, %v980
    %v982 = vpop.f32.mrb[0].mxu0
    %v983 = vadd.f32 %v580, %v982
    %984 = vmatprep.mubr.bf16.mxu0 0
    %985 = vmatmul.mubr.bf16.gmra.mrb[0].mxu0 %v666
    %v986 = vpop.f32.mrb[0].mxu0
    %v987 = vadd.f32 %v576, %v986
    %v988 = vpop.f32.mrb[0].mxu0
    %v989 = vadd.f32 %v580, %v988
    %v990 = vpop.f32.mrb[0].mxu0
    %v991 = vadd.f32 %v576, %v990
    %v992 = vpop.f32.mrb[0].mxu0
    %v993 = vadd.f32 %v580, %v992
    %994 = vmatprep.mubr.bf16.mxu0 0
    %995 = vmatmul.mubr.bf16.gmra.mrb[0].mxu0 %v667
    %v996 = vpop.f32.mrb[0].mxu0
    %v997 = vadd.f32 %v576, %v996
    %v998 = vpop.f32.mrb[0].mxu0
    %v999 = vadd.f32 %v580, %v998
    %v1000 = vpop.f32.mrb[0].mxu0
    %v1001 = vadd.f32 %v576, %v1000
    %v1002 = vpop.f32.mrb[0].mxu0
    %v1003 = vadd.f32 %v580, %v1002
    %1004 = vdwg.mxu0
    %1005 = vmatprep.subr.bf16.mxu0 0
    %1006 = vmatpush1.bf16.msra.mxu0 %v766
    %1007 = vmatprep.subr.bf16.mxu0 0
    %1008 = vmatpush1.bf16.msra.mxu0 %v769
    %1009 = vmatprep.subr.bf16.mxu0 0
    %1010 = vmatpush1.bf16.msra.mxu0 %v772
    %1011 = vmatprep.subr.bf16.mxu0 0
    %1012 = vmatpush1.bf16.msra.mxu0 %v775
    %1013 = vmatprep.subr.bf16.mxu0 0
    %1014 = vmatpush1.bf16.msra.mxu0 %v778
    %1015 = vmatprep.subr.bf16.mxu0 0
    %1016 = vmatpush1.bf16.msra.mxu0 %v781
    %1017 = vmatprep.subr.bf16.mxu0 0
    %1018 = vmatpush1.bf16.msra.mxu0 %v784
    %1019 = vmatprep.subr.bf16.mxu0 0
    %1020 = vmatpush1.bf16.msra.mxu0 %v787
    %1021 = vmatprep.subr.bf16.mxu0 0
    %1022 = vmatpush1.bf16.msra.mxu0 0
    %1023 = vmatprep.subr.bf16.mxu0 0
    %1024 = vmatpush1.bf16.msra.mxu0 0
    %1025 = vmatprep.subr.bf16.mxu0 0
    %1026 = vmatpush1.bf16.msra.mxu0 0
    %1027 = vmatprep.subr.bf16.mxu0 0
    %1028 = vmatpush1.bf16.msra.mxu0 0
    %1029 = vmatprep.subr.bf16.mxu0 0
    %1030 = vmatpush1.bf16.msra.mxu0 0
    %1031 = vmatprep.subr.bf16.mxu0 0
    %1032 = vmatpush1.bf16.msra.mxu0 0
    %1033 = vmatprep.subr.bf16.mxu0 0
    %1034 = vmatpush1.bf16.msra.mxu0 0
    %1035 = vmatprep.subr.bf16.mxu0 0
    %1036 = vmatpush1.bf16.msra.mxu0 0
    %1037 = vmatprep.mubr.bf16.mxu0 0
    %1038 = vmatmul.mubr.bf16.gmra.mrb[0].mxu0 %v652
    %v1039 = vpop.f32.mrb[0].mxu0
    %v1040 = vadd.f32 %v584, %v1039
    %v1041 = vpop.f32.mrb[0].mxu0
    %v1042 = vpop.f32.mrb[0].mxu0
    %v1043 = vadd.f32 %v584, %v1042
    %v1044 = vpop.f32.mrb[0].mxu0
    %1045 = vmatprep.mubr.bf16.mxu0 0
    %1046 = vmatmul.mubr.bf16.gmra.mrb[0].mxu0 %v653
    %v1047 = vpop.f32.mrb[0].mxu0
    %v1048 = vadd.f32 %v584, %v1047
    %v1049 = vpop.f32.mrb[0].mxu0
    %v1050 = vpop.f32.mrb[0].mxu0
    %v1051 = vadd.f32 %v584, %v1050
    %v1052 = vpop.f32.mrb[0].mxu0
    %1053 = vmatprep.mubr.bf16.mxu0 0
    %1054 = vmatmul.mubr.bf16.gmra.mrb[0].mxu0 %v654
    %v1055 = vpop.f32.mrb[0].mxu0
    %v1056 = vadd.f32 %v584, %v1055
    %v1057 = vpop.f32.mrb[0].mxu0
    %v1058 = vpop.f32.mrb[0].mxu0
    %v1059 = vadd.f32 %v584, %v1058
    %v1060 = vpop.f32.mrb[0].mxu0
    %1061 = vmatprep.mubr.bf16.mxu0 0
    %1062 = vmatmul.mubr.bf16.gmra.mrb[0].mxu0 %v655
    %v1063 = vpop.f32.mrb[0].mxu0
    %v1064 = vadd.f32 %v584, %v1063
    %v1065 = vpop.f32.mrb[0].mxu0
    %v1066 = vpop.f32.mrb[0].mxu0
    %v1067 = vadd.f32 %v584, %v1066
    %v1068 = vpop.f32.mrb[0].mxu0
    %1069 = vmatprep.mubr.bf16.mxu0 0
    %1070 = vmatmul.mubr.bf16.gmra.mrb[0].mxu0 %v656
    %v1071 = vpop.f32.mrb[0].mxu0
    %v1072 = vadd.f32 %v584, %v1071
    %v1073 = vpop.f32.mrb[0].mxu0
    %v1074 = vpop.f32.mrb[0].mxu0
    %v1075 = vadd.f32 %v584, %v1074
    %v1076 = vpop.f32.mrb[0].mxu0
    %1077 = vmatprep.mubr.bf16.mxu0 0
    %1078 = vmatmul.mubr.bf16.gmra.mrb[0].mxu0 %v657
    %v1079 = vpop.f32.mrb[0].mxu0
    %v1080 = vadd.f32 %v584, %v1079
    %v1081 = vpop.f32.mrb[0].mxu0
    %v1082 = vpop.f32.mrb[0].mxu0
    %v1083 = vadd.f32 %v584, %v1082
    %v1084 = vpop.f32.mrb[0].mxu0
    %1085 = vmatprep.mubr.bf16.mxu0 0
    %1086 = vmatmul.mubr.bf16.gmra.mrb[0].mxu0 %v658
    %v1087 = vpop.f32.mrb[0].mxu0
    %v1088 = vadd.f32 %v584, %v1087
    %v1089 = vpop.f32.mrb[0].mxu0
    %v1090 = vpop.f32.mrb[0].mxu0
    %v1091 = vadd.f32 %v584, %v1090
    %v1092 = vpop.f32.mrb[0].mxu0
    %1093 = vmatprep.mubr.bf16.mxu0 0
    %1094 = vmatmul.mubr.bf16.gmra.mrb[0].mxu0 %v659
    %v1095 = vpop.f32.mrb[0].mxu0
    %v1096 = vadd.f32 %v584, %v1095
    %v1097 = vpop.f32.mrb[0].mxu0
    %v1098 = vpop.f32.mrb[0].mxu0
    %v1099 = vadd.f32 %v584, %v1098
    %v1100 = vpop.f32.mrb[0].mxu0
    %1101 = vmatprep.mubr.bf16.mxu0 0
    %1102 = vmatmul.mubr.bf16.gmra.mrb[0].mxu0 %v660
    %v1103 = vpop.f32.mrb[0].mxu0
    %v1104 = vadd.f32 %v584, %v1103
    %v1105 = vpop.f32.mrb[0].mxu0
    %v1106 = vpop.f32.mrb[0].mxu0
    %v1107 = vadd.f32 %v584, %v1106
    %v1108 = vpop.f32.mrb[0].mxu0
    %1109 = vmatprep.mubr.bf16.mxu0 0
    %1110 = vmatmul.mubr.bf16.gmra.mrb[0].mxu0 %v661
    %v1111 = vpop.f32.mrb[0].mxu0
    %v1112 = vadd.f32 %v584, %v1111
    %v1113 = vpop.f32.mrb[0].mxu0
    %v1114 = vpop.f32.mrb[0].mxu0
    %v1115 = vadd.f32 %v584, %v1114
    %v1116 = vpop.f32.mrb[0].mxu0
    %1117 = vmatprep.mubr.bf16.mxu0 0
    %1118 = vmatmul.mubr.bf16.gmra.mrb[0].mxu0 %v662
    %v1119 = vpop.f32.mrb[0].mxu0
    %v1120 = vadd.f32 %v584, %v1119
    %v1121 = vpop.f32.mrb[0].mxu0
    %v1122 = vpop.f32.mrb[0].mxu0
    %v1123 = vadd.f32 %v584, %v1122
    %v1124 = vpop.f32.mrb[0].mxu0
    %1125 = vmatprep.mubr.bf16.mxu0 0
    %1126 = vmatmul.mubr.bf16.gmra.mrb[0].mxu0 %v663
    %v1127 = vpop.f32.mrb[0].mxu0
    %v1128 = vadd.f32 %v584, %v1127
    %v1129 = vpop.f32.mrb[0].mxu0
    %v1130 = vpop.f32.mrb[0].mxu0
    %v1131 = vadd.f32 %v584, %v1130
    %v1132 = vpop.f32.mrb[0].mxu0
    %1133 = vmatprep.mubr.bf16.mxu0 0
    %1134 = vmatmul.mubr.bf16.gmra.mrb[0].mxu0 %v664
    %v1135 = vpop.f32.mrb[0].mxu0
    %v1136 = vadd.f32 %v584, %v1135
    %v1137 = vpop.f32.mrb[0].mxu0
    %v1138 = vpop.f32.mrb[0].mxu0
    %v1139 = vadd.f32 %v584, %v1138
    %v1140 = vpop.f32.mrb[0].mxu0
    %1141 = vmatprep.mubr.bf16.mxu0 0
    %1142 = vmatmul.mubr.bf16.gmra.mrb[0].mxu0 %v665
    %v1143 = vpop.f32.mrb[0].mxu0
    %v1144 = vadd.f32 %v584, %v1143
    %v1145 = vpop.f32.mrb[0].mxu0
    %v1146 = vpop.f32.mrb[0].mxu0
    %v1147 = vadd.f32 %v584, %v1146
    %v1148 = vpop.f32.mrb[0].mxu0
    %1149 = vmatprep.mubr.bf16.mxu0 0
    %1150 = vmatmul.mubr.bf16.gmra.mrb[0].mxu0 %v666
    %v1151 = vpop.f32.mrb[0].mxu0
    %v1152 = vadd.f32 %v584, %v1151
    %v1153 = vpop.f32.mrb[0].mxu0
    %v1154 = vpop.f32.mrb[0].mxu0
    %v1155 = vadd.f32 %v584, %v1154
    %v1156 = vpop.f32.mrb[0].mxu0
    %1157 = vmatprep.mubr.bf16.mxu0 0
    %1158 = vmatmul.mubr.bf16.gmra.mrb[0].mxu0 %v667
    %v1159 = vpop.f32.mrb[0].mxu0
    %v1160 = vadd.f32 %v584, %v1159
    %v1161 = vpop.f32.mrb[0].mxu0
    %v1162 = vpop.f32.mrb[0].mxu0
    %v1163 = vadd.f32 %v584, %v1162
    %v1164 = vpop.f32.mrb[0].mxu0
    %1165 = vdwg.mxu0
    %1166 = vst [vmem:[#allocation2] sm:$0xff] %v847
    %1167 = vst [vmem:[#allocation2 + $0x8] sm:$0xff] %v849
    %1168 = vst [vmem:[#allocation2 + $0x10] sm:$0xff] %v1040
    %1169 = vst [vmem:[#allocation2 + $0x18] sm:$0xff] %v851
    %1170 = vst [vmem:[#allocation2 + $0x20] sm:$0xff] %v853
    %1171 = vst [vmem:[#allocation2 + $0x28] sm:$0xff] %v1043
    %1172 = vst [vmem:[#allocation2 + $0x30] sm:$0xff] %v857
    %1173 = vst [vmem:[#allocation2 + $0x38] sm:$0xff] %v859
    %1174 = vst [vmem:[#allocation2 + $0x40] sm:$0xff] %v1048
    %1175 = vst [vmem:[#allocation2 + $0x48] sm:$0xff] %v861
    %1176 = vst [vmem:[#allocation2 + $0x50] sm:$0xff] %v863
    %1177 = vst [vmem:[#allocation2 + $0x58] sm:$0xff] %v1051
    %1178 = vst [vmem:[#allocation2 + $0x60] sm:$0xff] %v867
    %1179 = vst [vmem:[#allocation2 + $0x68] sm:$0xff] %v869
    %1180 = vst [vmem:[#allocation2 + $0x70] sm:$0xff] %v1056
    %1181 = vst [vmem:[#allocation2 + $0x78] sm:$0xff] %v871
    %1182 = vst [vmem:[#allocation2 + $0x80] sm:$0xff] %v873
    %1183 = vst [vmem:[#allocation2 + $0x88] sm:$0xff] %v1059
    %1184 = vst [vmem:[#allocation2 + $0x90] sm:$0xff] %v877
    %1185 = vst [vmem:[#allocation2 + $0x98] sm:$0xff] %v879
    %1186 = vst [vmem:[#allocation2 + $0xa0] sm:$0xff] %v1064
    %1187 = vst [vmem:[#allocation2 + $0xa8] sm:$0xff] %v881
    %1188 = vst [vmem:[#allocation2 + $0xb0] sm:$0xff] %v883
    %1189 = vst [vmem:[#allocation2 + $0xb8] sm:$0xff] %v1067
    %1190 = vst [vmem:[#allocation2 + $0xc0] sm:$0xff] %v887
    %1191 = vst [vmem:[#allocation2 + $0xc8] sm:$0xff] %v889
    %1192 = vst [vmem:[#allocation2 + $0xd0] sm:$0xff] %v1072
    %1193 = vst [vmem:[#allocation2 + $0xd8] sm:$0xff] %v891
    %1194 = vst [vmem:[#allocation2 + $0xe0] sm:$0xff] %v893
    %1195 = vst [vmem:[#allocation2 + $0xe8] sm:$0xff] %v1075
    %1196 = vst [vmem:[#allocation2 + $0xf0] sm:$0xff] %v897
    %1197 = vst [vmem:[#allocation2 + $0xf8] sm:$0xff] %v899
    %1198 = vst [vmem:[#allocation2 + $0x100] sm:$0xff] %v1080
    %1199 = vst [vmem:[#allocation2 + $0x108] sm:$0xff] %v901
    %1200 = vst [vmem:[#allocation2 + $0x110] sm:$0xff] %v903
    %1201 = vst [vmem:[#allocation2 + $0x118] sm:$0xff] %v1083
    %1202 = vst [vmem:[#allocation2 + $0x120] sm:$0xff] %v907
    %1203 = vst [vmem:[#allocation2 + $0x128] sm:$0xff] %v909
    %1204 = vst [vmem:[#allocation2 + $0x130] sm:$0xff] %v1088
    %1205 = vst [vmem:[#allocation2 + $0x138] sm:$0xff] %v911
    %1206 = vst [vmem:[#allocation2 + $0x140] sm:$0xff] %v913
    %1207 = vst [vmem:[#allocation2 + $0x148] sm:$0xff] %v1091
    %1208 = vst [vmem:[#allocation2 + $0x150] sm:$0xff] %v917
    %1209 = vst [vmem:[#allocation2 + $0x158] sm:$0xff] %v919
    %1210 = vst [vmem:[#allocation2 + $0x160] sm:$0xff] %v1096
    %1211 = vst [vmem:[#allocation2 + $0x168] sm:$0xff] %v921
    %1212 = vst [vmem:[#allocation2 + $0x170] sm:$0xff] %v923
    %1213 = vst [vmem:[#allocation2 + $0x178] sm:$0xff] %v1099
    %1214 = vst [vmem:[#allocation2 + $0x180] sm:$0xff] %v927
    %1215 = vst [vmem:[#allocation2 + $0x188] sm:$0xff] %v929
    %1216 = vst [vmem:[#allocation2 + $0x190] sm:$0xff] %v1104
    %1217 = vst [vmem:[#allocation2 + $0x198] sm:$0xff] %v931
    %1218 = vst [vmem:[#allocation2 + $0x1a0] sm:$0xff] %v933
    %1219 = vst [vmem:[#allocation2 + $0x1a8] sm:$0xff] %v1107
    %1220 = vst [vmem:[#allocation2 + $0x1b0] sm:$0xff] %v937
    %1221 = vst [vmem:[#allocation2 + $0x1b8] sm:$0xff] %v939
    %1222 = vst [vmem:[#allocation2 + $0x1c0] sm:$0xff] %v1112
    %1223 = vst [vmem:[#allocation2 + $0x1c8] sm:$0xff] %v941
    %1224 = vst [vmem:[#allocation2 + $0x1d0] sm:$0xff] %v943
    %1225 = vst [vmem:[#allocation2 + $0x1d8] sm:$0xff] %v1115
    %1226 = vst [vmem:[#allocation2 + $0x1e0] sm:$0xff] %v947
    %1227 = vst [vmem:[#allocation2 + $0x1e8] sm:$0xff] %v949
    %1228 = vst [vmem:[#allocation2 + $0x1f0] sm:$0xff] %v1120
    %1229 = vst [vmem:[#allocation2 + $0x1f8] sm:$0xff] %v951
    %1230 = vst [vmem:[#allocation2 + $0x200] sm:$0xff] %v953
    %1231 = vst [vmem:[#allocation2 + $0x208] sm:$0xff] %v1123
    %1232 = vst [vmem:[#allocation2 + $0x210] sm:$0xff] %v957
    %1233 = vst [vmem:[#allocation2 + $0x218] sm:$0xff] %v959
    %1234 = vst [vmem:[#allocation2 + $0x220] sm:$0xff] %v1128
    %1235 = vst [vmem:[#allocation2 + $0x228] sm:$0xff] %v961
    %1236 = vst [vmem:[#allocation2 + $0x230] sm:$0xff] %v963
    %1237 = vst [vmem:[#allocation2 + $0x238] sm:$0xff] %v1131
    %1238 = vst [vmem:[#allocation2 + $0x240] sm:$0xff] %v967
    %1239 = vst [vmem:[#allocation2 + $0x248] sm:$0xff] %v969
    %1240 = vst [vmem:[#allocation2 + $0x250] sm:$0xff] %v1136
    %1241 = vst [vmem:[#allocation2 + $0x258] sm:$0xff] %v971
    %1242 = vst [vmem:[#allocation2 + $0x260] sm:$0xff] %v973
    %1243 = vst [vmem:[#allocation2 + $0x268] sm:$0xff] %v1139
    %1244 = vst [vmem:[#allocation2 + $0x270] sm:$0xff] %v977
    %1245 = vst [vmem:[#allocation2 + $0x278] sm:$0xff] %v979
    %1246 = vst [vmem:[#allocation2 + $0x280] sm:$0xff] %v1144
    %1247 = vst [vmem:[#allocation2 + $0x288] sm:$0xff] %v981
    %1248 = vst [vmem:[#allocation2 + $0x290] sm:$0xff] %v983
    %1249 = vst [vmem:[#allocation2 + $0x298] sm:$0xff] %v1147
    %1250 = vst [vmem:[#allocation2 + $0x2a0] sm:$0xff] %v987
    %1251 = vst [vmem:[#allocation2 + $0x2a8] sm:$0xff] %v989
    %1252 = vst [vmem:[#allocation2 + $0x2b0] sm:$0xff] %v1152
    %1253 = vst [vmem:[#allocation2 + $0x2b8] sm:$0xff] %v991
    %1254 = vst [vmem:[#allocation2 + $0x2c0] sm:$0xff] %v993
    %1255 = vst [vmem:[#allocation2 + $0x2c8] sm:$0xff] %v1155
    %1256 = vst [vmem:[#allocation2 + $0x2d0] sm:$0xff] %v997
    %1257 = vst [vmem:[#allocation2 + $0x2d8] sm:$0xff] %v999
    %1258 = vst [vmem:[#allocation2 + $0x2e0] sm:$0xff] %v1160
    %1259 = vst [vmem:[#allocation2 + $0x2e8] sm:$0xff] %v1001
    %1260 = vst [vmem:[#allocation2 + $0x2f0] sm:$0xff] %v1003
    %1261 = vst [vmem:[#allocation2 + $0x2f8] sm:$0xff] %v1163
    %s1262 = smul.u32 0, 3
    %s1263 = smul.addr %s1262, 8
    %s1264 = scalar_lea.vmem [#allocation2], %s1263
    %v1265 = vld [vmem:[%s1264] sm:$0xff]
    %v1266 = vld [vmem:[%s1264 + $0x8] sm:$0xff]
    %v1267 = vld [vmem:[%s1264 + $0x10] sm:$0xff]
    %v1268 = vld [vmem:[%s1264 + $0x18] sm:$0xff]
    %v1269 = vld [vmem:[%s1264 + $0x20] sm:$0xff]
    %v1270 = vld [vmem:[%s1264 + $0x28] sm:$0xff]
    %v1271 = vld [vmem:[%s1264 + $0x30] sm:$0xff]
    %v1272 = vld [vmem:[%s1264 + $0x38] sm:$0xff]
    %v1273 = vld [vmem:[%s1264 + $0x40] sm:$0xff]
    %v1274 = vld [vmem:[%s1264 + $0x48] sm:$0xff]
    %v1275 = vld [vmem:[%s1264 + $0x50] sm:$0xff]
    %v1276 = vld [vmem:[%s1264 + $0x58] sm:$0xff]
    %v1277 = vpack.c.bf16 %v504, %v503
    %v1278 = vpack.c.bf16 %v506, %v505
    %v1279 = vld [vmem:[#allocation12] sm:$0xff]
    %v1280 = vld [vmem:[#allocation12 + $0x8] sm:$0xf]
    %v1281 = vld [vmem:[#allocation12 + $0xc] sm:$0xff]
    %v1282 = vld [vmem:[#allocation12 + $0x14] sm:$0xf]
    %v1283 = vld [vmem:[#allocation12 + $0x18] sm:$0xff]
    %v1284 = vld [vmem:[#allocation12 + $0x20] sm:$0xf]
    %v1285 = vld [vmem:[#allocation12 + $0x24] sm:$0xff]
    %v1286 = vld [vmem:[#allocation12 + $0x2c] sm:$0xf]
    %v1287 = vld [vmem:[#allocation12 + $0x30] sm:$0xff]
    %v1288 = vld [vmem:[#allocation12 + $0x38] sm:$0xf]
    %v1289 = vld [vmem:[#allocation12 + $0x3c] sm:$0xff]
    %v1290 = vld [vmem:[#allocation12 + $0x44] sm:$0xf]
    %v1291 = vld [vmem:[#allocation12 + $0x48] sm:$0xff]
    %v1292 = vld [vmem:[#allocation12 + $0x50] sm:$0xf]
    %v1293 = vld [vmem:[#allocation12 + $0x54] sm:$0xff]
    %v1294 = vld [vmem:[#allocation12 + $0x5c] sm:$0xf]
    %v1295 = vld [vmem:[#allocation12 + $0x60] sm:$0xff]
    %v1296 = vld [vmem:[#allocation12 + $0x68] sm:$0xf]
    %v1297 = vld [vmem:[#allocation12 + $0x6c] sm:$0xff]
    %v1298 = vld [vmem:[#allocation12 + $0x74] sm:$0xf]
    %v1299 = vld [vmem:[#allocation12 + $0x78] sm:$0xff]
    %v1300 = vld [vmem:[#allocation12 + $0x80] sm:$0xf]
    %v1301 = vld [vmem:[#allocation12 + $0x84] sm:$0xff]
    %v1302 = vld [vmem:[#allocation12 + $0x8c] sm:$0xf]
    %v1303 = vld [vmem:[#allocation12 + $0x90] sm:$0xff]
    %v1304 = vld [vmem:[#allocation12 + $0x98] sm:$0xf]
    %v1305 = vld [vmem:[#allocation12 + $0x9c] sm:$0xff]
    %v1306 = vld [vmem:[#allocation12 + $0xa4] sm:$0xf]
    %v1307 = vld [vmem:[#allocation12 + $0xa8] sm:$0xff]
    %v1308 = vld [vmem:[#allocation12 + $0xb0] sm:$0xf]
    %v1309 = vld [vmem:[#allocation12 + $0xb4] sm:$0xff]
    %v1310 = vld [vmem:[#allocation12 + $0xbc] sm:$0xf]
    %v1343 = vunpack.c.l.b16 %v1279
    %v1344 = vunpack.c.h.b16 %v1279
    %v1345 = vunpack.c.l.b16 %v1280
    %v1346 = vunpack.c.l.b16 %v1281
    %v1347 = vunpack.c.h.b16 %v1281
    %v1348 = vunpack.c.l.b16 %v1282
    %v1349 = vunpack.c.l.b16 %v1283
    %v1350 = vunpack.c.h.b16 %v1283
    %v1351 = vunpack.c.l.b16 %v1284
    %v1352 = vunpack.c.l.b16 %v1285
    %v1353 = vunpack.c.h.b16 %v1285
    %v1354 = vunpack.c.l.b16 %v1286
    %v1355 = vunpack.c.l.b16 %v1287
    %v1356 = vunpack.c.h.b16 %v1287
    %v1357 = vunpack.c.l.b16 %v1288
    %v1358 = vunpack.c.l.b16 %v1289
    %v1359 = vunpack.c.h.b16 %v1289
    %v1360 = vunpack.c.l.b16 %v1290
    %v1361 = vunpack.c.l.b16 %v1291
    %v1362 = vunpack.c.h.b16 %v1291
    %v1363 = vunpack.c.l.b16 %v1292
    %v1364 = vunpack.c.l.b16 %v1293
    %v1365 = vunpack.c.h.b16 %v1293
    %v1366 = vunpack.c.l.b16 %v1294
    %v1367 = vunpack.c.l.b16 %v1295
    %v1368 = vunpack.c.h.b16 %v1295
    %v1369 = vunpack.c.l.b16 %v1296
    %v1370 = vunpack.c.l.b16 %v1297
    %v1371 = vunpack.c.h.b16 %v1297
    %v1372 = vunpack.c.l.b16 %v1298
    %v1373 = vunpack.c.l.b16 %v1299
    %v1374 = vunpack.c.h.b16 %v1299
    %v1375 = vunpack.c.l.b16 %v1300
    %v1376 = vunpack.c.l.b16 %v1301
    %v1377 = vunpack.c.h.b16 %v1301
    %v1378 = vunpack.c.l.b16 %v1302
    %v1379 = vunpack.c.l.b16 %v1303
    %v1380 = vunpack.c.h.b16 %v1303
    %v1381 = vunpack.c.l.b16 %v1304
    %v1382 = vunpack.c.l.b16 %v1305
    %v1383 = vunpack.c.h.b16 %v1305
    %v1384 = vunpack.c.l.b16 %v1306
    %v1385 = vunpack.c.l.b16 %v1307
    %v1386 = vunpack.c.h.b16 %v1307
    %v1387 = vunpack.c.l.b16 %v1308
    %v1388 = vunpack.c.l.b16 %v1309
    %v1389 = vunpack.c.h.b16 %v1309
    %v1390 = vunpack.c.l.b16 %v1310
    %v1391 = vpack.c.b16 %v1346, %v1343
    %v1392 = vpack.c.b16 %v1347, %v1344
    %v1393 = vpack.c.b16 %v1348, %v1345
    %v1394 = vpack.c.b16 %v1352, %v1349
    %v1395 = vpack.c.b16 %v1353, %v1350
    %v1396 = vpack.c.b16 %v1354, %v1351
    %v1397 = vpack.c.b16 %v1358, %v1355
    %v1398 = vpack.c.b16 %v1359, %v1356
    %v1399 = vpack.c.b16 %v1360, %v1357
    %v1400 = vpack.c.b16 %v1364, %v1361
    %v1401 = vpack.c.b16 %v1365, %v1362
    %v1402 = vpack.c.b16 %v1366, %v1363
    %v1403 = vpack.c.b16 %v1370, %v1367
    %v1404 = vpack.c.b16 %v1371, %v1368
    %v1405 = vpack.c.b16 %v1372, %v1369
    %v1406 = vpack.c.b16 %v1376, %v1373
    %v1407 = vpack.c.b16 %v1377, %v1374
    %v1408 = vpack.c.b16 %v1378, %v1375
    %v1409 = vpack.c.b16 %v1382, %v1379
    %v1410 = vpack.c.b16 %v1383, %v1380
    %v1411 = vpack.c.b16 %v1384, %v1381
    %v1412 = vpack.c.b16 %v1388, %v1385
    %v1413 = vpack.c.b16 %v1389, %v1386
    %v1414 = vpack.c.b16 %v1390, %v1387
    %1439 = vmatprep.subr.bf16.mxu0 %v1392
    %1440 = vmatpush1.bf16.msra.mxu0 %v1391
    %1441 = vmatprep.subr.bf16.mxu0 %v1395
    %1442 = vmatpush1.bf16.msra.mxu0 %v1394
    %1443 = vmatprep.subr.bf16.mxu0 %v1398
    %1444 = vmatpush1.bf16.msra.mxu0 %v1397
    %1445 = vmatprep.subr.bf16.mxu0 %v1401
    %1446 = vmatpush1.bf16.msra.mxu0 %v1400
    %1447 = vmatprep.subr.bf16.mxu0 %v1404
    %1448 = vmatpush1.bf16.msra.mxu0 %v1403
    %1449 = vmatprep.subr.bf16.mxu0 %v1407
    %1450 = vmatpush1.bf16.msra.mxu0 %v1406
    %1451 = vmatprep.subr.bf16.mxu0 %v1410
    %1452 = vmatpush1.bf16.msra.mxu0 %v1409
    %1453 = vmatprep.subr.bf16.mxu0 %v1413
    %1454 = vmatpush1.bf16.msra.mxu0 %v1412
    %1455 = vmatprep.subr.bf16.mxu0 0
    %1456 = vmatpush1.bf16.msra.mxu0 0
    %1457 = vmatprep.subr.bf16.mxu0 0
    %1458 = vmatpush1.bf16.msra.mxu0 0
    %1459 = vmatprep.subr.bf16.mxu0 0
    %1460 = vmatpush1.bf16.msra.mxu0 0
    %1461 = vmatprep.subr.bf16.mxu0 0
    %1462 = vmatpush1.bf16.msra.mxu0 0
    %1463 = vmatprep.subr.bf16.mxu0 0
    %1464 = vmatpush1.bf16.msra.mxu0 0
    %1465 = vmatprep.subr.bf16.mxu0 0
    %1466 = vmatpush1.bf16.msra.mxu0 0
    %1467 = vmatprep.subr.bf16.mxu0 0
    %1468 = vmatpush1.bf16.msra.mxu0 0
    %1469 = vmatprep.subr.bf16.mxu0 0
    %1470 = vmatpush1.bf16.msra.mxu0 0
    %1471 = vmatprep.mubr.bf16.mxu0 0
    %1472 = vmatmul.mubr.bf16.gmra.mrb[0].mxu0 %v1277
    %v1473 = vpop.f32.mrb[0].mxu0
    %v1474 = vadd.f32 0.0, %v1473
    %v1475 = vpop.f32.mrb[0].mxu0
    %v1476 = vadd.f32 0.0, %v1475
    %v1477 = vpop.f32.mrb[0].mxu0
    %v1478 = vadd.f32 0.0, %v1477
    %v1479 = vpop.f32.mrb[0].mxu0
    %v1480 = vadd.f32 0.0, %v1479
    %1481 = vmatprep.mubr.bf16.mxu0 0
    %1482 = vmatmul.mubr.bf16.gmra.mrb[0].mxu0 %v1278
    %v1483 = vpop.f32.mrb[0].mxu0
    %v1484 = vadd.f32 0.0, %v1483
    %v1485 = vpop.f32.mrb[0].mxu0
    %v1486 = vadd.f32 0.0, %v1485
    %v1487 = vpop.f32.mrb[0].mxu0
    %v1488 = vadd.f32 0.0, %v1487
    %v1489 = vpop.f32.mrb[0].mxu0
    %v1490 = vadd.f32 0.0, %v1489
    %1491 = vdwg.mxu0
    %1492 = vmatprep.subr.bf16.mxu0 0
    %1493 = vmatpush1.bf16.msra.mxu0 %v1393
    %1494 = vmatprep.subr.bf16.mxu0 0
    %1495 = vmatpush1.bf16.msra.mxu0 %v1396
    %1496 = vmatprep.subr.bf16.mxu0 0
    %1497 = vmatpush1.bf16.msra.mxu0 %v1399
    %1498 = vmatprep.subr.bf16.mxu0 0
    %1499 = vmatpush1.bf16.msra.mxu0 %v1402
    %1500 = vmatprep.subr.bf16.mxu0 0
    %1501 = vmatpush1.bf16.msra.mxu0 %v1405
    %1502 = vmatprep.subr.bf16.mxu0 0
    %1503 = vmatpush1.bf16.msra.mxu0 %v1408
    %1504 = vmatprep.subr.bf16.mxu0 0
    %1505 = vmatpush1.bf16.msra.mxu0 %v1411
    %1506 = vmatprep.subr.bf16.mxu0 0
    %1507 = vmatpush1.bf16.msra.mxu0 %v1414
    %1508 = vmatprep.subr.bf16.mxu0 0
    %1509 = vmatpush1.bf16.msra.mxu0 0
    %1510 = vmatprep.subr.bf16.mxu0 0
    %1511 = vmatpush1.bf16.msra.mxu0 0
    %1512 = vmatprep.subr.bf16.mxu0 0
    %1513 = vmatpush1.bf16.msra.mxu0 0
    %1514 = vmatprep.subr.bf16.mxu0 0
    %1515 = vmatpush1.bf16.msra.mxu0 0
    %1516 = vmatprep.subr.bf16.mxu0 0
    %1517 = vmatpush1.bf16.msra.mxu0 0
    %1518 = vmatprep.subr.bf16.mxu0 0
    %1519 = vmatpush1.bf16.msra.mxu0 0
    %1520 = vmatprep.subr.bf16.mxu0 0
    %1521 = vmatpush1.bf16.msra.mxu0 0
    %1522 = vmatprep.subr.bf16.mxu0 0
    %1523 = vmatpush1.bf16.msra.mxu0 0
    %1524 = vmatprep.mubr.bf16.mxu0 0
    %1525 = vmatmul.mubr.bf16.gmra.mrb[0].mxu0 %v1277
    %v1526 = vpop.f32.mrb[0].mxu0
    %v1527 = vadd.f32 0.0, %v1526
    %v1528 = vpop.f32.mrb[0].mxu0
    %v1529 = vpop.f32.mrb[0].mxu0
    %v1530 = vadd.f32 0.0, %v1529
    %v1531 = vpop.f32.mrb[0].mxu0
    %1532 = vmatprep.mubr.bf16.mxu0 0
    %1533 = vmatmul.mubr.bf16.gmra.mrb[0].mxu0 %v1278
    %v1534 = vpop.f32.mrb[0].mxu0
    %v1535 = vadd.f32 0.0, %v1534
    %v1536 = vpop.f32.mrb[0].mxu0
    %v1537 = vpop.f32.mrb[0].mxu0
    %v1538 = vadd.f32 0.0, %v1537
    %v1539 = vpop.f32.mrb[0].mxu0
    %1540 = vdwg.mxu0
    %v1541 = vadd.f32 %v1265, %v1474
    %v1542 = vadd.f32 %v1268, %v1478
    %v1543 = vadd.f32 %v1271, %v1484
    %v1544 = vadd.f32 %v1274, %v1488
    %v1545 = vxor.u32 %v1541, 2147483648
    %v1546 = vxor.u32 %v1542, 2147483648
    %v1547 = vxor.u32 %v1543, 2147483648
    %v1548 = vxor.u32 %v1544, 2147483648
    %v1549 = vmul.f32 %v1545, 1.442695
    %v1550 = vpow.pop %v1549
    %v1551 = vmul.f32 %v1546, 1.442695
    %v1552 = vpow.pop %v1551
    %v1553 = vmul.f32 %v1547, 1.442695
    %v1554 = vpow.pop %v1553
    %v1555 = vmul.f32 %v1548, 1.442695
    %v1556 = vpow.pop %v1555
    %v1557 = vadd.f32 %v1550, 1.0
    %v1558 = vadd.f32 %v1552, 1.0
    %v1559 = vadd.f32 %v1554, 1.0
    %v1560 = vadd.f32 %v1556, 1.0
    %v1561 = vrcp.pop %v1557
    %v1562 = vmul.f32 1.0, %v1561
    %v1563 = vrcp.pop %v1558
    %v1564 = vmul.f32 1.0, %v1563
    %v1565 = vrcp.pop %v1559
    %v1566 = vmul.f32 1.0, %v1565
    %v1567 = vrcp.pop %v1560
    %v1568 = vmul.f32 1.0, %v1567
    %v1569 = vadd.f32 %v1266, %v1476
    %v1570 = vadd.f32 %v1269, %v1480
    %v1571 = vadd.f32 %v1272, %v1486
    %v1572 = vadd.f32 %v1275, %v1490
    %v1573 = vxor.u32 %v1569, 2147483648
    %v1574 = vxor.u32 %v1570, 2147483648
    %v1575 = vxor.u32 %v1571, 2147483648
    %v1576 = vxor.u32 %v1572, 2147483648
    %v1577 = vmul.f32 %v1573, 1.442695
    %v1578 = vpow.pop %v1577
    %v1579 = vmul.f32 %v1574, 1.442695
    %v1580 = vpow.pop %v1579
    %v1581 = vmul.f32 %v1575, 1.442695
    %v1582 = vpow.pop %v1581
    %v1583 = vmul.f32 %v1576, 1.442695
    %v1584 = vpow.pop %v1583
    %v1585 = vadd.f32 %v1578, 1.0
    %v1586 = vadd.f32 %v1580, 1.0
    %v1587 = vadd.f32 %v1582, 1.0
    %v1588 = vadd.f32 %v1584, 1.0
    %v1589 = vrcp.pop %v1585
    %v1590 = vmul.f32 1.0, %v1589
    %v1591 = vrcp.pop %v1586
    %v1592 = vmul.f32 1.0, %v1591
    %v1593 = vrcp.pop %v1587
    %v1594 = vmul.f32 1.0, %v1593
    %v1595 = vrcp.pop %v1588
    %v1596 = vmul.f32 1.0, %v1595
    %v1597 = vld [vmem:[%s7] sm:$0x1]
    %v1599 = vlaneseq
    %v1600 = vshrl.u32 %v1599, 7
    %v1601 = vsub.s32 0, %v1600
    %v1602 = vrot.slane %v1597, %v1601
    %v1604 = vadd.f32 %v1527, %v1602
    %v1605 = vadd.f32 %v1530, %v1602
    %v1606 = vadd.f32 %v1535, %v1602
    %v1607 = vadd.f32 %v1538, %v1602
    %v1608 = vmul.f32 %v1562, %v1604
    %v1609 = vmul.f32 %v1564, %v1605
    %v1610 = vmul.f32 %v1566, %v1606
    %v1611 = vmul.f32 %v1568, %v1607
    %v1612 = vadd.f32 %v1267, %v1608
    %v1613 = vadd.f32 %v1270, %v1609
    %v1614 = vadd.f32 %v1273, %v1610
    %v1615 = vadd.f32 %v1276, %v1611
    %v1616 = vtanh.pop %v1612
    %v1617 = vtanh.pop %v1613
    %v1618 = vtanh.pop %v1614
    %v1619 = vtanh.pop %v1615
    %v1620 = vsub.f32 1.0, %v1590
    %v1621 = vsub.f32 1.0, %v1592
    %v1622 = vsub.f32 1.0, %v1594
    %v1623 = vsub.f32 1.0, %v1596
    %v1624 = vmul.f32 %v1620, %v1616
    %v1625 = vmul.f32 %v1621, %v1617
    %v1626 = vmul.f32 %v1622, %v1618
    %v1627 = vmul.f32 %v1623, %v1619
    %v1628 = vmul.f32 %v1590, %v503
    %v1629 = vmul.f32 %v1592, %v504
    %v1630 = vmul.f32 %v1594, %v505
    %v1631 = vmul.f32 %v1596, %v506
    %v1632 = vadd.f32 %v1624, %v1628
    %v1633 = vadd.f32 %v1625, %v1629
    %v1634 = vadd.f32 %v1626, %v1630
    %v1635 = vadd.f32 %v1627, %v1631
    %v1636 = vpack.c.bf16 %v1633, %v1632
    %v1637 = vpack.c.bf16 %v1635, %v1634
    %1638 = vst [vmem:[#allocation3] sm:$0xff] %v1636
    %1639 = vst [vmem:[#allocation3 + $0x8] sm:$0xff] %v1637
    %s1640 = smul.u32 4, 3
    %s1641 = smul.addr %s1640, 8
    %s1642 = scalar_lea.vmem [#allocation2], %s1641
    %v1643 = vld [vmem:[%s1642] sm:$0xff]
    %v1644 = vld [vmem:[%s1642 + $0x8] sm:$0xff]
    %v1645 = vld [vmem:[%s1642 + $0x10] sm:$0xff]
    %v1646 = vld [vmem:[%s1642 + $0x18] sm:$0xff]
    %v1647 = vld [vmem:[%s1642 + $0x20] sm:$0xff]
    %v1648 = vld [vmem:[%s1642 + $0x28] sm:$0xff]
    %v1649 = vld [vmem:[%s1642 + $0x30] sm:$0xff]
    %v1650 = vld [vmem:[%s1642 + $0x38] sm:$0xff]
    %v1651 = vld [vmem:[%s1642 + $0x40] sm:$0xff]
    %v1652 = vld [vmem:[%s1642 + $0x48] sm:$0xff]
    %v1653 = vld [vmem:[%s1642 + $0x50] sm:$0xff]
    %v1654 = vld [vmem:[%s1642 + $0x58] sm:$0xff]
    %v1655 = vld [vmem:[#allocation12] sm:$0xff]
    %v1656 = vld [vmem:[#allocation12 + $0x8] sm:$0xf]
    %v1657 = vld [vmem:[#allocation12 + $0xc] sm:$0xff]
    %v1658 = vld [vmem:[#allocation12 + $0x14] sm:$0xf]
    %v1659 = vld [vmem:[#allocation12 + $0x18] sm:$0xff]
    %v1660 = vld [vmem:[#allocation12 + $0x20] sm:$0xf]
    %v1661 = vld [vmem:[#allocation12 + $0x24] sm:$0xff]
    %v1662 = vld [vmem:[#allocation12 + $0x2c] sm:$0xf]
    %v1663 = vld [vmem:[#allocation12 + $0x30] sm:$0xff]
    %v1664 = vld [vmem:[#allocation12 + $0x38] sm:$0xf]
    %v1665 = vld [vmem:[#allocation12 + $0x3c] sm:$0xff]
    %v1666 = vld [vmem:[#allocation12 + $0x44] sm:$0xf]
    %v1667 = vld [vmem:[#allocation12 + $0x48] sm:$0xff]
    %v1668 = vld [vmem:[#allocation12 + $0x50] sm:$0xf]
    %v1669 = vld [vmem:[#allocation12 + $0x54] sm:$0xff]
    %v1670 = vld [vmem:[#allocation12 + $0x5c] sm:$0xf]
    %v1671 = vld [vmem:[#allocation12 + $0x60] sm:$0xff]
    %v1672 = vld [vmem:[#allocation12 + $0x68] sm:$0xf]
    %v1673 = vld [vmem:[#allocation12 + $0x6c] sm:$0xff]
    %v1674 = vld [vmem:[#allocation12 + $0x74] sm:$0xf]
    %v1675 = vld [vmem:[#allocation12 + $0x78] sm:$0xff]
    %v1676 = vld [vmem:[#allocation12 + $0x80] sm:$0xf]
    %v1677 = vld [vmem:[#allocation12 + $0x84] sm:$0xff]
    %v1678 = vld [vmem:[#allocation12 + $0x8c] sm:$0xf]
    %v1679 = vld [vmem:[#allocation12 + $0x90] sm:$0xff]
    %v1680 = vld [vmem:[#allocation12 + $0x98] sm:$0xf]
    %v1681 = vld [vmem:[#allocation12 + $0x9c] sm:$0xff]
    %v1682 = vld [vmem:[#allocation12 + $0xa4] sm:$0xf]
    %v1683 = vld [vmem:[#allocation12 + $0xa8] sm:$0xff]
    %v1684 = vld [vmem:[#allocation12 + $0xb0] sm:$0xf]
    %v1685 = vld [vmem:[#allocation12 + $0xb4] sm:$0xff]
    %v1686 = vld [vmem:[#allocation12 + $0xbc] sm:$0xf]
    %v1719 = vunpack.c.l.b16 %v1655
    %v1720 = vunpack.c.h.b16 %v1655
    %v1721 = vunpack.c.l.b16 %v1656
    %v1722 = vunpack.c.l.b16 %v1657
    %v1723 = vunpack.c.h.b16 %v1657
    %v1724 = vunpack.c.l.b16 %v1658
    %v1725 = vunpack.c.l.b16 %v1659
    %v1726 = vunpack.c.h.b16 %v1659
    %v1727 = vunpack.c.l.b16 %v1660
    %v1728 = vunpack.c.l.b16 %v1661
    %v1729 = vunpack.c.h.b16 %v1661
    %v1730 = vunpack.c.l.b16 %v1662
    %v1731 = vunpack.c.l.b16 %v1663
    %v1732 = vunpack.c.h.b16 %v1663
    %v1733 = vunpack.c.l.b16 %v1664
    %v1734 = vunpack.c.l.b16 %v1665
    %v1735 = vunpack.c.h.b16 %v1665
    %v1736 = vunpack.c.l.b16 %v1666
    %v1737 = vunpack.c.l.b16 %v1667
    %v1738 = vunpack.c.h.b16 %v1667
    %v1739 = vunpack.c.l.b16 %v1668
    %v1740 = vunpack.c.l.b16 %v1669
    %v1741 = vunpack.c.h.b16 %v1669
    %v1742 = vunpack.c.l.b16 %v1670
    %v1743 = vunpack.c.l.b16 %v1671
    %v1744 = vunpack.c.h.b16 %v1671
    %v1745 = vunpack.c.l.b16 %v1672
    %v1746 = vunpack.c.l.b16 %v1673
    %v1747 = vunpack.c.h.b16 %v1673
    %v1748 = vunpack.c.l.b16 %v1674
    %v1749 = vunpack.c.l.b16 %v1675
    %v1750 = vunpack.c.h.b16 %v1675
    %v1751 = vunpack.c.l.b16 %v1676
    %v1752 = vunpack.c.l.b16 %v1677
    %v1753 = vunpack.c.h.b16 %v1677
    %v1754 = vunpack.c.l.b16 %v1678
    %v1755 = vunpack.c.l.b16 %v1679
    %v1756 = vunpack.c.h.b16 %v1679
    %v1757 = vunpack.c.l.b16 %v1680
    %v1758 = vunpack.c.l.b16 %v1681
    %v1759 = vunpack.c.h.b16 %v1681
    %v1760 = vunpack.c.l.b16 %v1682
    %v1761 = vunpack.c.l.b16 %v1683
    %v1762 = vunpack.c.h.b16 %v1683
    %v1763 = vunpack.c.l.b16 %v1684
    %v1764 = vunpack.c.l.b16 %v1685
    %v1765 = vunpack.c.h.b16 %v1685
    %v1766 = vunpack.c.l.b16 %v1686
    %v1767 = vpack.c.b16 %v1722, %v1719
    %v1768 = vpack.c.b16 %v1723, %v1720
    %v1769 = vpack.c.b16 %v1724, %v1721
    %v1770 = vpack.c.b16 %v1728, %v1725
    %v1771 = vpack.c.b16 %v1729, %v1726
    %v1772 = vpack.c.b16 %v1730, %v1727
    %v1773 = vpack.c.b16 %v1734, %v1731
    %v1774 = vpack.c.b16 %v1735, %v1732
    %v1775 = vpack.c.b16 %v1736, %v1733
    %v1776 = vpack.c.b16 %v1740, %v1737
    %v1777 = vpack.c.b16 %v1741, %v1738
    %v1778 = vpack.c.b16 %v1742, %v1739
    %v1779 = vpack.c.b16 %v1746, %v1743
    %v1780 = vpack.c.b16 %v1747, %v1744
    %v1781 = vpack.c.b16 %v1748, %v1745
    %v1782 = vpack.c.b16 %v1752, %v1749
    %v1783 = vpack.c.b16 %v1753, %v1750
    %v1784 = vpack.c.b16 %v1754, %v1751
    %v1785 = vpack.c.b16 %v1758, %v1755
    %v1786 = vpack.c.b16 %v1759, %v1756
    %v1787 = vpack.c.b16 %v1760, %v1757
    %v1788 = vpack.c.b16 %v1764, %v1761
    %v1789 = vpack.c.b16 %v1765, %v1762
    %v1790 = vpack.c.b16 %v1766, %v1763
    %1815 = vmatprep.subr.bf16.mxu0 %v1768
    %1816 = vmatpush1.bf16.msra.mxu0 %v1767
    %1817 = vmatprep.subr.bf16.mxu0 %v1771
    %1818 = vmatpush1.bf16.msra.mxu0 %v1770
    %1819 = vmatprep.subr.bf16.mxu0 %v1774
    %1820 = vmatpush1.bf16.msra.mxu0 %v1773
    %1821 = vmatprep.subr.bf16.mxu0 %v1777
    %1822 = vmatpush1.bf16.msra.mxu0 %v1776
    %1823 = vmatprep.subr.bf16.mxu0 %v1780
    %1824 = vmatpush1.bf16.msra.mxu0 %v1779
    %1825 = vmatprep.subr.bf16.mxu0 %v1783
    %1826 = vmatpush1.bf16.msra.mxu0 %v1782
    %1827 = vmatprep.subr.bf16.mxu0 %v1786
    %1828 = vmatpush1.bf16.msra.mxu0 %v1785
    %1829 = vmatprep.subr.bf16.mxu0 %v1789
    %1830 = vmatpush1.bf16.msra.mxu0 %v1788
    %1831 = vmatprep.subr.bf16.mxu0 0
    %1832 = vmatpush1.bf16.msra.mxu0 0
    %1833 = vmatprep.subr.bf16.mxu0 0
    %1834 = vmatpush1.bf16.msra.mxu0 0
    %1835 = vmatprep.subr.bf16.mxu0 0
    %1836 = vmatpush1.bf16.msra.mxu0 0
    %1837 = vmatprep.subr.bf16.mxu0 0
    %1838 = vmatpush1.bf16.msra.mxu0 0
    %1839 = vmatprep.subr.bf16.mxu0 0
    %1840 = vmatpush1.bf16.msra.mxu0 0
    %1841 = vmatprep.subr.bf16.mxu0 0
    %1842 = vmatpush1.bf16.msra.mxu0 0
    %1843 = vmatprep.subr.bf16.mxu0 0
    %1844 = vmatpush1.bf16.msra.mxu0 0
    %1845 = vmatprep.subr.bf16.mxu0 0
    %1846 = vmatpush1.bf16.msra.mxu0 0
    %1847 = vmatprep.mubr.bf16.mxu0 0
    %1848 = vmatmul.mubr.bf16.gmra.mrb[0].mxu0 %v1636
    %v1849 = vpop.f32.mrb[0].mxu0
    %v1850 = vadd.f32 0.0, %v1849
    %v1851 = vpop.f32.mrb[0].mxu0
    %v1852 = vadd.f32 0.0, %v1851
    %v1853 = vpop.f32.mrb[0].mxu0
    %v1854 = vadd.f32 0.0, %v1853
    %v1855 = vpop.f32.mrb[0].mxu0
    %v1856 = vadd.f32 0.0, %v1855
    %1857 = vmatprep.mubr.bf16.mxu0 0
    %1858 = vmatmul.mubr.bf16.gmra.mrb[0].mxu0 %v1637
    %v1859 = vpop.f32.mrb[0].mxu0
    %v1860 = vadd.f32 0.0, %v1859
    %v1861 = vpop.f32.mrb[0].mxu0
    %v1862 = vadd.f32 0.0, %v1861
    %v1863 = vpop.f32.mrb[0].mxu0
    %v1864 = vadd.f32 0.0, %v1863
    %v1865 = vpop.f32.mrb[0].mxu0
    %v1866 = vadd.f32 0.0, %v1865
    %1867 = vdwg.mxu0
    %1868 = vmatprep.subr.bf16.mxu0 0
    %1869 = vmatpush1.bf16.msra.mxu0 %v1769
    %1870 = vmatprep.subr.bf16.mxu0 0
    %1871 = vmatpush1.bf16.msra.mxu0 %v1772
    %1872 = vmatprep.subr.bf16.mxu0 0
    %1873 = vmatpush1.bf16.msra.mxu0 %v1775
    %1874 = vmatprep.subr.bf16.mxu0 0
    %1875 = vmatpush1.bf16.msra.mxu0 %v1778
    %1876 = vmatprep.subr.bf16.mxu0 0
    %1877 = vmatpush1.bf16.msra.mxu0 %v1781
    %1878 = vmatprep.subr.bf16.mxu0 0
    %1879 = vmatpush1.bf16.msra.mxu0 %v1784
    %1880 = vmatprep.subr.bf16.mxu0 0
    %1881 = vmatpush1.bf16.msra.mxu0 %v1787
    %1882 = vmatprep.subr.bf16.mxu0 0
    %1883 = vmatpush1.bf16.msra.mxu0 %v1790
    %1884 = vmatprep.subr.bf16.mxu0 0
    %1885 = vmatpush1.bf16.msra.mxu0 0
    %1886 = vmatprep.subr.bf16.mxu0 0
    %1887 = vmatpush1.bf16.msra.mxu0 0
    %1888 = vmatprep.subr.bf16.mxu0 0
    %1889 = vmatpush1.bf16.msra.mxu0 0
    %1890 = vmatprep.subr.bf16.mxu0 0
    %1891 = vmatpush1.bf16.msra.mxu0 0
    %1892 = vmatprep.subr.bf16.mxu0 0
    %1893 = vmatpush1.bf16.msra.mxu0 0
    %1894 = vmatprep.subr.bf16.mxu0 0
    %1895 = vmatpush1.bf16.msra.mxu0 0
    %1896 = vmatprep.subr.bf16.mxu0 0
    %1897 = vmatpush1.bf16.msra.mxu0 0
    %1898 = vmatprep.subr.bf16.mxu0 0
    %1899 = vmatpush1.bf16.msra.mxu0 0
    %1900 = vmatprep.mubr.bf16.mxu0 0
    %1901 = vmatmul.mubr.bf16.gmra.mrb[0].mxu0 %v1636
    %v1902 = vpop.f32.mrb[0].mxu0
    %v1903 = vadd.f32 0.0, %v1902
    %v1904 = vpop.f32.mrb[0].mxu0
    %v1905 = vpop.f32.mrb[0].mxu0
    %v1906 = vadd.f32 0.0, %v1905
    %v1907 = vpop.f32.mrb[0].mxu0
    %1908 = vmatprep.mubr.bf16.mxu0 0
    %1909 = vmatmul.mubr.bf16.gmra.mrb[0].mxu0 %v1637
    %v1910 = vpop.f32.mrb[0].mxu0
    %v1911 = vadd.f32 0.0, %v1910
    %v1912 = vpop.f32.mrb[0].mxu0
    %v1913 = vpop.f32.mrb[0].mxu0
    %v1914 = vadd.f32 0.0, %v1913
    %v1915 = vpop.f32.mrb[0].mxu0
    %1916 = vdwg.mxu0
    %v1917 = vadd.f32 %v1643, %v1850
    %v1918 = vadd.f32 %v1646, %v1854
    %v1919 = vadd.f32 %v1649, %v1860
    %v1920 = vadd.f32 %v1652, %v1864
    %v1921 = vxor.u32 %v1917, 2147483648
    %v1922 = vxor.u32 %v1918, 2147483648
    %v1923 = vxor.u32 %v1919, 2147483648
    %v1924 = vxor.u32 %v1920, 2147483648
    %v1925 = vmul.f32 %v1921, 1.442695
    %v1926 = vpow.pop %v1925
    %v1927 = vmul.f32 %v1922, 1.442695
    %v1928 = vpow.pop %v1927
    %v1929 = vmul.f32 %v1923, 1.442695
    %v1930 = vpow.pop %v1929
    %v1931 = vmul.f32 %v1924, 1.442695
    %v1932 = vpow.pop %v1931
    %v1933 = vadd.f32 %v1926, 1.0
    %v1934 = vadd.f32 %v1928, 1.0
    %v1935 = vadd.f32 %v1930, 1.0
    %v1936 = vadd.f32 %v1932, 1.0
    %v1937 = vrcp.pop %v1933
    %v1938 = vmul.f32 1.0, %v1937
    %v1939 = vrcp.pop %v1934
    %v1940 = vmul.f32 1.0, %v1939
    %v1941 = vrcp.pop %v1935
    %v1942 = vmul.f32 1.0, %v1941
    %v1943 = vrcp.pop %v1936
    %v1944 = vmul.f32 1.0, %v1943
    %v1945 = vadd.f32 %v1644, %v1852
    %v1946 = vadd.f32 %v1647, %v1856
    %v1947 = vadd.f32 %v1650, %v1862
    %v1948 = vadd.f32 %v1653, %v1866
    %v1949 = vxor.u32 %v1945, 2147483648
    %v1950 = vxor.u32 %v1946, 2147483648
    %v1951 = vxor.u32 %v1947, 2147483648
    %v1952 = vxor.u32 %v1948, 2147483648
    %v1953 = vmul.f32 %v1949, 1.442695
    %v1954 = vpow.pop %v1953
    %v1955 = vmul.f32 %v1950, 1.442695
    %v1956 = vpow.pop %v1955
    %v1957 = vmul.f32 %v1951, 1.442695
    %v1958 = vpow.pop %v1957
    %v1959 = vmul.f32 %v1952, 1.442695
    %v1960 = vpow.pop %v1959
    %v1961 = vadd.f32 %v1954, 1.0
    %v1962 = vadd.f32 %v1956, 1.0
    %v1963 = vadd.f32 %v1958, 1.0
    %v1964 = vadd.f32 %v1960, 1.0
    %v1965 = vrcp.pop %v1961
    %v1966 = vmul.f32 1.0, %v1965
    %v1967 = vrcp.pop %v1962
    %v1968 = vmul.f32 1.0, %v1967
    %v1969 = vrcp.pop %v1963
    %v1970 = vmul.f32 1.0, %v1969
    %v1971 = vrcp.pop %v1964
    %v1972 = vmul.f32 1.0, %v1971
    %v1973 = vld [vmem:[%s7] sm:$0x1]
    %v1975 = vlaneseq
    %v1976 = vshrl.u32 %v1975, 7
    %v1977 = vsub.s32 0, %v1976
    %v1978 = vrot.slane %v1973, %v1977
    %v1980 = vadd.f32 %v1903, %v1978
    %v1981 = vadd.f32 %v1906, %v1978
    %v1982 = vadd.f32 %v1911, %v1978
    %v1983 = vadd.f32 %v1914, %v1978
    %v1984 = vmul.f32 %v1938, %v1980
    %v1985 = vmul.f32 %v1940, %v1981
    %v1986 = vmul.f32 %v1942, %v1982
    %v1987 = vmul.f32 %v1944, %v1983
    %v1988 = vadd.f32 %v1645, %v1984
    %v1989 = vadd.f32 %v1648, %v1985
    %v1990 = vadd.f32 %v1651, %v1986
    %v1991 = vadd.f32 %v1654, %v1987
    %v1992 = vtanh.pop %v1988
    %v1993 = vtanh.pop %v1989
    %v1994 = vtanh.pop %v1990
    %v1995 = vtanh.pop %v1991
    %v1996 = vsub.f32 1.0, %v1966
    %v1997 = vsub.f32 1.0, %v1968
    %v1998 = vsub.f32 1.0, %v1970
    %v1999 = vsub.f32 1.0, %v1972
    %v2000 = vmul.f32 %v1996, %v1992
    %v2001 = vmul.f32 %v1997, %v1993
    %v2002 = vmul.f32 %v1998, %v1994
    %v2003 = vmul.f32 %v1999, %v1995
    %v2004 = vmul.f32 %v1966, %v1632
    %v2005 = vmul.f32 %v1968, %v1633
    %v2006 = vmul.f32 %v1970, %v1634
    %v2007 = vmul.f32 %v1972, %v1635
    %v2008 = vadd.f32 %v2000, %v2004
    %v2009 = vadd.f32 %v2001, %v2005
    %v2010 = vadd.f32 %v2002, %v2006
    %v2011 = vadd.f32 %v2003, %v2007
    %v2012 = vpack.c.bf16 %v2009, %v2008
    %v2013 = vpack.c.bf16 %v2011, %v2010
    %s2014 = scalar_lea.vmem [#allocation3], 16
    %2015 = vst [vmem:[%s2014] sm:$0xff] %v2012
    %2016 = vst [vmem:[%s2014 + $0x8] sm:$0xff] %v2013
    %s2017 = smul.u32 8, 3
    %s2018 = smul.addr %s2017, 8
    %s2019 = scalar_lea.vmem [#allocation2], %s2018
    %v2020 = vld [vmem:[%s2019] sm:$0xff]
    %v2021 = vld [vmem:[%s2019 + $0x8] sm:$0xff]
    %v2022 = vld [vmem:[%s2019 + $0x10] sm:$0xff]
    %v2023 = vld [vmem:[%s2019 + $0x18] sm:$0xff]
    %v2024 = vld [vmem:[%s2019 + $0x20] sm:$0xff]
    %v2025 = vld [vmem:[%s2019 + $0x28] sm:$0xff]
    %v2026 = vld [vmem:[%s2019 + $0x30] sm:$0xff]
    %v2027 = vld [vmem:[%s2019 + $0x38] sm:$0xff]
    %v2028 = vld [vmem:[%s2019 + $0x40] sm:$0xff]
    %v2029 = vld [vmem:[%s2019 + $0x48] sm:$0xff]
    %v2030 = vld [vmem:[%s2019 + $0x50] sm:$0xff]
    %v2031 = vld [vmem:[%s2019 + $0x58] sm:$0xff]
    %v2032 = vld [vmem:[#allocation12] sm:$0xff]
    %v2033 = vld [vmem:[#allocation12 + $0x8] sm:$0xf]
    %v2034 = vld [vmem:[#allocation12 + $0xc] sm:$0xff]
    %v2035 = vld [vmem:[#allocation12 + $0x14] sm:$0xf]
    %v2036 = vld [vmem:[#allocation12 + $0x18] sm:$0xff]
    %v2037 = vld [vmem:[#allocation12 + $0x20] sm:$0xf]
    %v2038 = vld [vmem:[#allocation12 + $0x24] sm:$0xff]
    %v2039 = vld [vmem:[#allocation12 + $0x2c] sm:$0xf]
    %v2040 = vld [vmem:[#allocation12 + $0x30] sm:$0xff]
    %v2041 = vld [vmem:[#allocation12 + $0x38] sm:$0xf]
    %v2042 = vld [vmem:[#allocation12 + $0x3c] sm:$0xff]
    %v2043 = vld [vmem:[#allocation12 + $0x44] sm:$0xf]
    %v2044 = vld [vmem:[#allocation12 + $0x48] sm:$0xff]
    %v2045 = vld [vmem:[#allocation12 + $0x50] sm:$0xf]
    %v2046 = vld [vmem:[#allocation12 + $0x54] sm:$0xff]
    %v2047 = vld [vmem:[#allocation12 + $0x5c] sm:$0xf]
    %v2048 = vld [vmem:[#allocation12 + $0x60] sm:$0xff]
    %v2049 = vld [vmem:[#allocation12 + $0x68] sm:$0xf]
    %v2050 = vld [vmem:[#allocation12 + $0x6c] sm:$0xff]
    %v2051 = vld [vmem:[#allocation12 + $0x74] sm:$0xf]
    %v2052 = vld [vmem:[#allocation12 + $0x78] sm:$0xff]
    %v2053 = vld [vmem:[#allocation12 + $0x80] sm:$0xf]
    %v2054 = vld [vmem:[#allocation12 + $0x84] sm:$0xff]
    %v2055 = vld [vmem:[#allocation12 + $0x8c] sm:$0xf]
    %v2056 = vld [vmem:[#allocation12 + $0x90] sm:$0xff]
    %v2057 = vld [vmem:[#allocation12 + $0x98] sm:$0xf]
    %v2058 = vld [vmem:[#allocation12 + $0x9c] sm:$0xff]
    %v2059 = vld [vmem:[#allocation12 + $0xa4] sm:$0xf]
    %v2060 = vld [vmem:[#allocation12 + $0xa8] sm:$0xff]
    %v2061 = vld [vmem:[#allocation12 + $0xb0] sm:$0xf]
    %v2062 = vld [vmem:[#allocation12 + $0xb4] sm:$0xff]
    %v2063 = vld [vmem:[#allocation12 + $0xbc] sm:$0xf]
    %v2096 = vunpack.c.l.b16 %v2032
    %v2097 = vunpack.c.h.b16 %v2032
    %v2098 = vunpack.c.l.b16 %v2033
    %v2099 = vunpack.c.l.b16 %v2034
    %v2100 = vunpack.c.h.b16 %v2034
    %v2101 = vunpack.c.l.b16 %v2035
    %v2102 = vunpack.c.l.b16 %v2036
    %v2103 = vunpack.c.h.b16 %v2036
    %v2104 = vunpack.c.l.b16 %v2037
    %v2105 = vunpack.c.l.b16 %v2038
    %v2106 = vunpack.c.h.b16 %v2038
    %v2107 = vunpack.c.l.b16 %v2039
    %v2108 = vunpack.c.l.b16 %v2040
    %v2109 = vunpack.c.h.b16 %v2040
    %v2110 = vunpack.c.l.b16 %v2041
    %v2111 = vunpack.c.l.b16 %v2042
    %v2112 = vunpack.c.h.b16 %v2042
    %v2113 = vunpack.c.l.b16 %v2043
    %v2114 = vunpack.c.l.b16 %v2044
    %v2115 = vunpack.c.h.b16 %v2044
    %v2116 = vunpack.c.l.b16 %v2045
    %v2117 = vunpack.c.l.b16 %v2046
    %v2118 = vunpack.c.h.b16 %v2046
    %v2119 = vunpack.c.l.b16 %v2047
    %v2120 = vunpack.c.l.b16 %v2048
    %v2121 = vunpack.c.h.b16 %v2048
    %v2122 = vunpack.c.l.b16 %v2049
    %v2123 = vunpack.c.l.b16 %v2050
    %v2124 = vunpack.c.h.b16 %v2050
    %v2125 = vunpack.c.l.b16 %v2051
    %v2126 = vunpack.c.l.b16 %v2052
    %v2127 = vunpack.c.h.b16 %v2052
    %v2128 = vunpack.c.l.b16 %v2053
    %v2129 = vunpack.c.l.b16 %v2054
    %v2130 = vunpack.c.h.b16 %v2054
    %v2131 = vunpack.c.l.b16 %v2055
    %v2132 = vunpack.c.l.b16 %v2056
    %v2133 = vunpack.c.h.b16 %v2056
    %v2134 = vunpack.c.l.b16 %v2057
    %v2135 = vunpack.c.l.b16 %v2058
    %v2136 = vunpack.c.h.b16 %v2058
    %v2137 = vunpack.c.l.b16 %v2059
    %v2138 = vunpack.c.l.b16 %v2060
    %v2139 = vunpack.c.h.b16 %v2060
    %v2140 = vunpack.c.l.b16 %v2061
    %v2141 = vunpack.c.l.b16 %v2062
    %v2142 = vunpack.c.h.b16 %v2062
    %v2143 = vunpack.c.l.b16 %v2063
    %v2144 = vpack.c.b16 %v2099, %v2096
    %v2145 = vpack.c.b16 %v2100, %v2097
    %v2146 = vpack.c.b16 %v2101, %v2098
    %v2147 = vpack.c.b16 %v2105, %v2102
    %v2148 = vpack.c.b16 %v2106, %v2103
    %v2149 = vpack.c.b16 %v2107, %v2104
    %v2150 = vpack.c.b16 %v2111, %v2108
    %v2151 = vpack.c.b16 %v2112, %v2109
    %v2152 = vpack.c.b16 %v2113, %v2110
    %v2153 = vpack.c.b16 %v2117, %v2114
    %v2154 = vpack.c.b16 %v2118, %v2115
    %v2155 = vpack.c.b16 %v2119, %v2116
    %v2156 = vpack.c.b16 %v2123, %v2120
    %v2157 = vpack.c.b16 %v2124, %v2121
    %v2158 = vpack.c.b16 %v2125, %v2122
    %v2159 = vpack.c.b16 %v2129, %v2126
    %v2160 = vpack.c.b16 %v2130, %v2127
    %v2161 = vpack.c.b16 %v2131, %v2128
    %v2162 = vpack.c.b16 %v2135, %v2132
    %v2163 = vpack.c.b16 %v2136, %v2133
    %v2164 = vpack.c.b16 %v2137, %v2134
    %v2165 = vpack.c.b16 %v2141, %v2138
    %v2166 = vpack.c.b16 %v2142, %v2139
    %v2167 = vpack.c.b16 %v2143, %v2140
    %2192 = vmatprep.subr.bf16.mxu0 %v2145
    %2193 = vmatpush1.bf16.msra.mxu0 %v2144
    %2194 = vmatprep.subr.bf16.mxu0 %v2148
    %2195 = vmatpush1.bf16.msra.mxu0 %v2147
    %2196 = vmatprep.subr.bf16.mxu0 %v2151
    %2197 = vmatpush1.bf16.msra.mxu0 %v2150
    %2198 = vmatprep.subr.bf16.mxu0 %v2154
    %2199 = vmatpush1.bf16.msra.mxu0 %v2153
    %2200 = vmatprep.subr.bf16.mxu0 %v2157
    %2201 = vmatpush1.bf16.msra.mxu0 %v2156
    %2202 = vmatprep.subr.bf16.mxu0 %v2160
    %2203 = vmatpush1.bf16.msra.mxu0 %v2159
    %2204 = vmatprep.subr.bf16.mxu0 %v2163
    %2205 = vmatpush1.bf16.msra.mxu0 %v2162
    %2206 = vmatprep.subr.bf16.mxu0 %v2166
    %2207 = vmatpush1.bf16.msra.mxu0 %v2165
    %2208 = vmatprep.subr.bf16.mxu0 0
    %2209 = vmatpush1.bf16.msra.mxu0 0
    %2210 = vmatprep.subr.bf16.mxu0 0
    %2211 = vmatpush1.bf16.msra.mxu0 0
    %2212 = vmatprep.subr.bf16.mxu0 0
    %2213 = vmatpush1.bf16.msra.mxu0 0
    %2214 = vmatprep.subr.bf16.mxu0 0
    %2215 = vmatpush1.bf16.msra.mxu0 0
    %2216 = vmatprep.subr.bf16.mxu0 0
    %2217 = vmatpush1.bf16.msra.mxu0 0
    %2218 = vmatprep.subr.bf16.mxu0 0
    %2219 = vmatpush1.bf16.msra.mxu0 0
    %2220 = vmatprep.subr.bf16.mxu0 0
    %2221 = vmatpush1.bf16.msra.mxu0 0
    %2222 = vmatprep.subr.bf16.mxu0 0
    %2223 = vmatpush1.bf16.msra.mxu0 0
    %2224 = vmatprep.mubr.bf16.mxu0 0
    %2225 = vmatmul.mubr.bf16.gmra.mrb[0].mxu0 %v2012
    %v2226 = vpop.f32.mrb[0].mxu0
    %v2227 = vadd.f32 0.0, %v2226
    %v2228 = vpop.f32.mrb[0].mxu0
    %v2229 = vadd.f32 0.0, %v2228
    %v2230 = vpop.f32.mrb[0].mxu0
    %v2231 = vadd.f32 0.0, %v2230
    %v2232 = vpop.f32.mrb[0].mxu0
    %v2233 = vadd.f32 0.0, %v2232
    %2234 = vmatprep.mubr.bf16.mxu0 0
    %2235 = vmatmul.mubr.bf16.gmra.mrb[0].mxu0 %v2013
    %v2236 = vpop.f32.mrb[0].mxu0
    %v2237 = vadd.f32 0.0, %v2236
    %v2238 = vpop.f32.mrb[0].mxu0
    %v2239 = vadd.f32 0.0, %v2238
    %v2240 = vpop.f32.mrb[0].mxu0
    %v2241 = vadd.f32 0.0, %v2240
    %v2242 = vpop.f32.mrb[0].mxu0
    %v2243 = vadd.f32 0.0, %v2242
    %2244 = vdwg.mxu0
    %2245 = vmatprep.subr.bf16.mxu0 0
    %2246 = vmatpush1.bf16.msra.mxu0 %v2146
    %2247 = vmatprep.subr.bf16.mxu0 0
    %2248 = vmatpush1.bf16.msra.mxu0 %v2149
    %2249 = vmatprep.subr.bf16.mxu0 0
    %2250 = vmatpush1.bf16.msra.mxu0 %v2152
    %2251 = vmatprep.subr.bf16.mxu0 0
    %2252 = vmatpush1.bf16.msra.mxu0 %v2155
    %2253 = vmatprep.subr.bf16.mxu0 0
    %2254 = vmatpush1.bf16.msra.mxu0 %v2158
    %2255 = vmatprep.subr.bf16.mxu0 0
    %2256 = vmatpush1.bf16.msra.mxu0 %v2161
    %2257 = vmatprep.subr.bf16.mxu0 0
    %2258 = vmatpush1.bf16.msra.mxu0 %v2164
    %2259 = vmatprep.subr.bf16.mxu0 0
    %2260 = vmatpush1.bf16.msra.mxu0 %v2167
    %2261 = vmatprep.subr.bf16.mxu0 0
    %2262 = vmatpush1.bf16.msra.mxu0 0
    %2263 = vmatprep.subr.bf16.mxu0 0
    %2264 = vmatpush1.bf16.msra.mxu0 0
    %2265 = vmatprep.subr.bf16.mxu0 0
    %2266 = vmatpush1.bf16.msra.mxu0 0
    %2267 = vmatprep.subr.bf16.mxu0 0
    %2268 = vmatpush1.bf16.msra.mxu0 0
    %2269 = vmatprep.subr.bf16.mxu0 0
    %2270 = vmatpush1.bf16.msra.mxu0 0
    %2271 = vmatprep.subr.bf16.mxu0 0
    %2272 = vmatpush1.bf16.msra.mxu0 0
    %2273 = vmatprep.subr.bf16.mxu0 0
    %2274 = vmatpush1.bf16.msra.mxu0 0
    %2275 = vmatprep.subr.bf16.mxu0 0
    %2276 = vmatpush1.bf16.msra.mxu0 0
    %2277 = vmatprep.mubr.bf16.mxu0 0
    %2278 = vmatmul.mubr.bf16.gmra.mrb[0].mxu0 %v2012
    %v2279 = vpop.f32.mrb[0].mxu0
    %v2280 = vadd.f32 0.0, %v2279
    %v2281 = vpop.f32.mrb[0].mxu0
    %v2282 = vpop.f32.mrb[0].mxu0
    %v2283 = vadd.f32 0.0, %v2282
    %v2284 = vpop.f32.mrb[0].mxu0
    %2285 = vmatprep.mubr.bf16.mxu0 0
    %2286 = vmatmul.mubr.bf16.gmra.mrb[0].mxu0 %v2013
    %v2287 = vpop.f32.mrb[0].mxu0
    %v2288 = vadd.f32 0.0, %v2287
    %v2289 = vpop.f32.mrb[0].mxu0
    %v2290 = vpop.f32.mrb[0].mxu0
    %v2291 = vadd.f32 0.0, %v2290
    %v2292 = vpop.f32.mrb[0].mxu0
    %2293 = vdwg.mxu0
    %v2294 = vadd.f32 %v2020, %v2227
    %v2295 = vadd.f32 %v2023, %v2231
    %v2296 = vadd.f32 %v2026, %v2237
    %v2297 = vadd.f32 %v2029, %v2241
    %v2298 = vxor.u32 %v2294, 2147483648
    %v2299 = vxor.u32 %v2295, 2147483648
    %v2300 = vxor.u32 %v2296, 2147483648
    %v2301 = vxor.u32 %v2297, 2147483648
    %v2302 = vmul.f32 %v2298, 1.442695
    %v2303 = vpow.pop %v2302
    %v2304 = vmul.f32 %v2299, 1.442695
    %v2305 = vpow.pop %v2304
    %v2306 = vmul.f32 %v2300, 1.442695
    %v2307 = vpow.pop %v2306
    %v2308 = vmul.f32 %v2301, 1.442695
    %v2309 = vpow.pop %v2308
    %v2310 = vadd.f32 %v2303, 1.0
    %v2311 = vadd.f32 %v2305, 1.0
    %v2312 = vadd.f32 %v2307, 1.0
    %v2313 = vadd.f32 %v2309, 1.0
    %v2314 = vrcp.pop %v2310
    %v2315 = vmul.f32 1.0, %v2314
    %v2316 = vrcp.pop %v2311
    %v2317 = vmul.f32 1.0, %v2316
    %v2318 = vrcp.pop %v2312
    %v2319 = vmul.f32 1.0, %v2318
    %v2320 = vrcp.pop %v2313
    %v2321 = vmul.f32 1.0, %v2320
    %v2322 = vadd.f32 %v2021, %v2229
    %v2323 = vadd.f32 %v2024, %v2233
    %v2324 = vadd.f32 %v2027, %v2239
    %v2325 = vadd.f32 %v2030, %v2243
    %v2326 = vxor.u32 %v2322, 2147483648
    %v2327 = vxor.u32 %v2323, 2147483648
    %v2328 = vxor.u32 %v2324, 2147483648
    %v2329 = vxor.u32 %v2325, 2147483648
    %v2330 = vmul.f32 %v2326, 1.442695
    %v2331 = vpow.pop %v2330
    %v2332 = vmul.f32 %v2327, 1.442695
    %v2333 = vpow.pop %v2332
    %v2334 = vmul.f32 %v2328, 1.442695
    %v2335 = vpow.pop %v2334
    %v2336 = vmul.f32 %v2329, 1.442695
    %v2337 = vpow.pop %v2336
    %v2338 = vadd.f32 %v2331, 1.0
    %v2339 = vadd.f32 %v2333, 1.0
    %v2340 = vadd.f32 %v2335, 1.0
    %v2341 = vadd.f32 %v2337, 1.0
    %v2342 = vrcp.pop %v2338
    %v2343 = vmul.f32 1.0, %v2342
    %v2344 = vrcp.pop %v2339
    %v2345 = vmul.f32 1.0, %v2344
    %v2346 = vrcp.pop %v2340
    %v2347 = vmul.f32 1.0, %v2346
    %v2348 = vrcp.pop %v2341
    %v2349 = vmul.f32 1.0, %v2348
    %v2350 = vld [vmem:[%s7] sm:$0x1]
    %v2352 = vlaneseq
    %v2353 = vshrl.u32 %v2352, 7
    %v2354 = vsub.s32 0, %v2353
    %v2355 = vrot.slane %v2350, %v2354
    %v2357 = vadd.f32 %v2280, %v2355
    %v2358 = vadd.f32 %v2283, %v2355
    %v2359 = vadd.f32 %v2288, %v2355
    %v2360 = vadd.f32 %v2291, %v2355
    %v2361 = vmul.f32 %v2315, %v2357
    %v2362 = vmul.f32 %v2317, %v2358
    %v2363 = vmul.f32 %v2319, %v2359
    %v2364 = vmul.f32 %v2321, %v2360
    %v2365 = vadd.f32 %v2022, %v2361
    %v2366 = vadd.f32 %v2025, %v2362
    %v2367 = vadd.f32 %v2028, %v2363
    %v2368 = vadd.f32 %v2031, %v2364
    %v2369 = vtanh.pop %v2365
    %v2370 = vtanh.pop %v2366
    %v2371 = vtanh.pop %v2367
    %v2372 = vtanh.pop %v2368
    %v2373 = vsub.f32 1.0, %v2343
    %v2374 = vsub.f32 1.0, %v2345
    %v2375 = vsub.f32 1.0, %v2347
    %v2376 = vsub.f32 1.0, %v2349
    %v2377 = vmul.f32 %v2373, %v2369
    %v2378 = vmul.f32 %v2374, %v2370
    %v2379 = vmul.f32 %v2375, %v2371
    %v2380 = vmul.f32 %v2376, %v2372
    %v2381 = vmul.f32 %v2343, %v2008
    %v2382 = vmul.f32 %v2345, %v2009
    %v2383 = vmul.f32 %v2347, %v2010
    %v2384 = vmul.f32 %v2349, %v2011
    %v2385 = vadd.f32 %v2377, %v2381
    %v2386 = vadd.f32 %v2378, %v2382
    %v2387 = vadd.f32 %v2379, %v2383
    %v2388 = vadd.f32 %v2380, %v2384
    %v2389 = vpack.c.bf16 %v2386, %v2385
    %v2390 = vpack.c.bf16 %v2388, %v2387
    %s2391 = scalar_lea.vmem [#allocation3], 32
    %2392 = vst [vmem:[%s2391] sm:$0xff] %v2389
    %2393 = vst [vmem:[%s2391 + $0x8] sm:$0xff] %v2390
    %s2394 = smul.u32 12, 3
    %s2395 = smul.addr %s2394, 8
    %s2396 = scalar_lea.vmem [#allocation2], %s2395
    %v2397 = vld [vmem:[%s2396] sm:$0xff]
    %v2398 = vld [vmem:[%s2396 + $0x8] sm:$0xff]
    %v2399 = vld [vmem:[%s2396 + $0x10] sm:$0xff]
    %v2400 = vld [vmem:[%s2396 + $0x18] sm:$0xff]
    %v2401 = vld [vmem:[%s2396 + $0x20] sm:$0xff]
    %v2402 = vld [vmem:[%s2396 + $0x28] sm:$0xff]
    %v2403 = vld [vmem:[%s2396 + $0x30] sm:$0xff]
    %v2404 = vld [vmem:[%s2396 + $0x38] sm:$0xff]
    %v2405 = vld [vmem:[%s2396 + $0x40] sm:$0xff]
    %v2406 = vld [vmem:[%s2396 + $0x48] sm:$0xff]
    %v2407 = vld [vmem:[%s2396 + $0x50] sm:$0xff]
    %v2408 = vld [vmem:[%s2396 + $0x58] sm:$0xff]
    %v2409 = vld [vmem:[#allocation12] sm:$0xff]
    %v2410 = vld [vmem:[#allocation12 + $0x8] sm:$0xf]
    %v2411 = vld [vmem:[#allocation12 + $0xc] sm:$0xff]
    %v2412 = vld [vmem:[#allocation12 + $0x14] sm:$0xf]
    %v2413 = vld [vmem:[#allocation12 + $0x18] sm:$0xff]
    %v2414 = vld [vmem:[#allocation12 + $0x20] sm:$0xf]
    %v2415 = vld [vmem:[#allocation12 + $0x24] sm:$0xff]
    %v2416 = vld [vmem:[#allocation12 + $0x2c] sm:$0xf]
    %v2417 = vld [vmem:[#allocation12 + $0x30] sm:$0xff]
    %v2418 = vld [vmem:[#allocation12 + $0x38] sm:$0xf]
    %v2419 = vld [vmem:[#allocation12 + $0x3c] sm:$0xff]
    %v2420 = vld [vmem:[#allocation12 + $0x44] sm:$0xf]
    %v2421 = vld [vmem:[#allocation12 + $0x48] sm:$0xff]
    %v2422 = vld [vmem:[#allocation12 + $0x50] sm:$0xf]
    %v2423 = vld [vmem:[#allocation12 + $0x54] sm:$0xff]
    %v2424 = vld [vmem:[#allocation12 + $0x5c] sm:$0xf]
    %v2425 = vld [vmem:[#allocation12 + $0x60] sm:$0xff]
    %v2426 = vld [vmem:[#allocation12 + $0x68] sm:$0xf]
    %v2427 = vld [vmem:[#allocation12 + $0x6c] sm:$0xff]
    %v2428 = vld [vmem:[#allocation12 + $0x74] sm:$0xf]
    %v2429 = vld [vmem:[#allocation12 + $0x78] sm:$0xff]
    %v2430 = vld [vmem:[#allocation12 + $0x80] sm:$0xf]
    %v2431 = vld [vmem:[#allocation12 + $0x84] sm:$0xff]
    %v2432 = vld [vmem:[#allocation12 + $0x8c] sm:$0xf]
    %v2433 = vld [vmem:[#allocation12 + $0x90] sm:$0xff]
    %v2434 = vld [vmem:[#allocation12 + $0x98] sm:$0xf]
    %v2435 = vld [vmem:[#allocation12 + $0x9c] sm:$0xff]
    %v2436 = vld [vmem:[#allocation12 + $0xa4] sm:$0xf]
    %v2437 = vld [vmem:[#allocation12 + $0xa8] sm:$0xff]
    %v2438 = vld [vmem:[#allocation12 + $0xb0] sm:$0xf]
    %v2439 = vld [vmem:[#allocation12 + $0xb4] sm:$0xff]
    %v2440 = vld [vmem:[#allocation12 + $0xbc] sm:$0xf]
    %v2473 = vunpack.c.l.b16 %v2409
    %v2474 = vunpack.c.h.b16 %v2409
    %v2475 = vunpack.c.l.b16 %v2410
    %v2476 = vunpack.c.l.b16 %v2411
    %v2477 = vunpack.c.h.b16 %v2411
    %v2478 = vunpack.c.l.b16 %v2412
    %v2479 = vunpack.c.l.b16 %v2413
    %v2480 = vunpack.c.h.b16 %v2413
    %v2481 = vunpack.c.l.b16 %v2414
    %v2482 = vunpack.c.l.b16 %v2415
    %v2483 = vunpack.c.h.b16 %v2415
    %v2484 = vunpack.c.l.b16 %v2416
    %v2485 = vunpack.c.l.b16 %v2417
    %v2486 = vunpack.c.h.b16 %v2417
    %v2487 = vunpack.c.l.b16 %v2418
    %v2488 = vunpack.c.l.b16 %v2419
    %v2489 = vunpack.c.h.b16 %v2419
    %v2490 = vunpack.c.l.b16 %v2420
    %v2491 = vunpack.c.l.b16 %v2421
    %v2492 = vunpack.c.h.b16 %v2421
    %v2493 = vunpack.c.l.b16 %v2422
    %v2494 = vunpack.c.l.b16 %v2423
    %v2495 = vunpack.c.h.b16 %v2423
    %v2496 = vunpack.c.l.b16 %v2424
    %v2497 = vunpack.c.l.b16 %v2425
    %v2498 = vunpack.c.h.b16 %v2425
    %v2499 = vunpack.c.l.b16 %v2426
    %v2500 = vunpack.c.l.b16 %v2427
    %v2501 = vunpack.c.h.b16 %v2427
    %v2502 = vunpack.c.l.b16 %v2428
    %v2503 = vunpack.c.l.b16 %v2429
    %v2504 = vunpack.c.h.b16 %v2429
    %v2505 = vunpack.c.l.b16 %v2430
    %v2506 = vunpack.c.l.b16 %v2431
    %v2507 = vunpack.c.h.b16 %v2431
    %v2508 = vunpack.c.l.b16 %v2432
    %v2509 = vunpack.c.l.b16 %v2433
    %v2510 = vunpack.c.h.b16 %v2433
    %v2511 = vunpack.c.l.b16 %v2434
    %v2512 = vunpack.c.l.b16 %v2435
    %v2513 = vunpack.c.h.b16 %v2435
    %v2514 = vunpack.c.l.b16 %v2436
    %v2515 = vunpack.c.l.b16 %v2437
    %v2516 = vunpack.c.h.b16 %v2437
    %v2517 = vunpack.c.l.b16 %v2438
    %v2518 = vunpack.c.l.b16 %v2439
    %v2519 = vunpack.c.h.b16 %v2439
    %v2520 = vunpack.c.l.b16 %v2440
    %v2521 = vpack.c.b16 %v2476, %v2473
    %v2522 = vpack.c.b16 %v2477, %v2474
    %v2523 = vpack.c.b16 %v2478, %v2475
    %v2524 = vpack.c.b16 %v2482, %v2479
    %v2525 = vpack.c.b16 %v2483, %v2480
    %v2526 = vpack.c.b16 %v2484, %v2481
    %v2527 = vpack.c.b16 %v2488, %v2485
    %v2528 = vpack.c.b16 %v2489, %v2486
    %v2529 = vpack.c.b16 %v2490, %v2487
    %v2530 = vpack.c.b16 %v2494, %v2491
    %v2531 = vpack.c.b16 %v2495, %v2492
    %v2532 = vpack.c.b16 %v2496, %v2493
    %v2533 = vpack.c.b16 %v2500, %v2497
    %v2534 = vpack.c.b16 %v2501, %v2498
    %v2535 = vpack.c.b16 %v2502, %v2499
    %v2536 = vpack.c.b16 %v2506, %v2503
    %v2537 = vpack.c.b16 %v2507, %v2504
    %v2538 = vpack.c.b16 %v2508, %v2505
    %v2539 = vpack.c.b16 %v2512, %v2509
    %v2540 = vpack.c.b16 %v2513, %v2510
    %v2541 = vpack.c.b16 %v2514, %v2511
    %v2542 = vpack.c.b16 %v2518, %v2515
    %v2543 = vpack.c.b16 %v2519, %v2516
    %v2544 = vpack.c.b16 %v2520, %v2517
    %2569 = vmatprep.subr.bf16.mxu0 %v2522
    %2570 = vmatpush1.bf16.msra.mxu0 %v2521
    %2571 = vmatprep.subr.bf16.mxu0 %v2525
    %2572 = vmatpush1.bf16.msra.mxu0 %v2524
    %2573 = vmatprep.subr.bf16.mxu0 %v2528
    %2574 = vmatpush1.bf16.msra.mxu0 %v2527
    %2575 = vmatprep.subr.bf16.mxu0 %v2531
    %2576 = vmatpush1.bf16.msra.mxu0 %v2530
    %2577 = vmatprep.subr.bf16.mxu0 %v2534
    %2578 = vmatpush1.bf16.msra.mxu0 %v2533
    %2579 = vmatprep.subr.bf16.mxu0 %v2537
    %2580 = vmatpush1.bf16.msra.mxu0 %v2536
    %2581 = vmatprep.subr.bf16.mxu0 %v2540
    %2582 = vmatpush1.bf16.msra.mxu0 %v2539
    %2583 = vmatprep.subr.bf16.mxu0 %v2543
    %2584 = vmatpush1.bf16.msra.mxu0 %v2542
    %2585 = vmatprep.subr.bf16.mxu0 0
    %2586 = vmatpush1.bf16.msra.mxu0 0
    %2587 = vmatprep.subr.bf16.mxu0 0
    %2588 = vmatpush1.bf16.msra.mxu0 0
    %2589 = vmatprep.subr.bf16.mxu0 0
    %2590 = vmatpush1.bf16.msra.mxu0 0
    %2591 = vmatprep.subr.bf16.mxu0 0
    %2592 = vmatpush1.bf16.msra.mxu0 0
    %2593 = vmatprep.subr.bf16.mxu0 0
    %2594 = vmatpush1.bf16.msra.mxu0 0
    %2595 = vmatprep.subr.bf16.mxu0 0
    %2596 = vmatpush1.bf16.msra.mxu0 0
    %2597 = vmatprep.subr.bf16.mxu0 0
    %2598 = vmatpush1.bf16.msra.mxu0 0
    %2599 = vmatprep.subr.bf16.mxu0 0
    %2600 = vmatpush1.bf16.msra.mxu0 0
    %2601 = vmatprep.mubr.bf16.mxu0 0
    %2602 = vmatmul.mubr.bf16.gmra.mrb[0].mxu0 %v2389
    %v2603 = vpop.f32.mrb[0].mxu0
    %v2604 = vadd.f32 0.0, %v2603
    %v2605 = vpop.f32.mrb[0].mxu0
    %v2606 = vadd.f32 0.0, %v2605
    %v2607 = vpop.f32.mrb[0].mxu0
    %v2608 = vadd.f32 0.0, %v2607
    %v2609 = vpop.f32.mrb[0].mxu0
    %v2610 = vadd.f32 0.0, %v2609
    %2611 = vmatprep.mubr.bf16.mxu0 0
    %2612 = vmatmul.mubr.bf16.gmra.mrb[0].mxu0 %v2390
    %v2613 = vpop.f32.mrb[0].mxu0
    %v2614 = vadd.f32 0.0, %v2613
    %v2615 = vpop.f32.mrb[0].mxu0
    %v2616 = vadd.f32 0.0, %v2615
    %v2617 = vpop.f32.mrb[0].mxu0
    %v2618 = vadd.f32 0.0, %v2617
    %v2619 = vpop.f32.mrb[0].mxu0
    %v2620 = vadd.f32 0.0, %v2619
    %2621 = vdwg.mxu0
    %2622 = vmatprep.subr.bf16.mxu0 0
    %2623 = vmatpush1.bf16.msra.mxu0 %v2523
    %2624 = vmatprep.subr.bf16.mxu0 0
    %2625 = vmatpush1.bf16.msra.mxu0 %v2526
    %2626 = vmatprep.subr.bf16.mxu0 0
    %2627 = vmatpush1.bf16.msra.mxu0 %v2529
    %2628 = vmatprep.subr.bf16.mxu0 0
    %2629 = vmatpush1.bf16.msra.mxu0 %v2532
    %2630 = vmatprep.subr.bf16.mxu0 0
    %2631 = vmatpush1.bf16.msra.mxu0 %v2535
    %2632 = vmatprep.subr.bf16.mxu0 0
    %2633 = vmatpush1.bf16.msra.mxu0 %v2538
    %2634 = vmatprep.subr.bf16.mxu0 0
    %2635 = vmatpush1.bf16.msra.mxu0 %v2541
    %2636 = vmatprep.subr.bf16.mxu0 0
    %2637 = vmatpush1.bf16.msra.mxu0 %v2544
    %2638 = vmatprep.subr.bf16.mxu0 0
    %2639 = vmatpush1.bf16.msra.mxu0 0
    %2640 = vmatprep.subr.bf16.mxu0 0
    %2641 = vmatpush1.bf16.msra.mxu0 0
    %2642 = vmatprep.subr.bf16.mxu0 0
    %2643 = vmatpush1.bf16.msra.mxu0 0
    %2644 = vmatprep.subr.bf16.mxu0 0
    %2645 = vmatpush1.bf16.msra.mxu0 0
    %2646 = vmatprep.subr.bf16.mxu0 0
    %2647 = vmatpush1.bf16.msra.mxu0 0
    %2648 = vmatprep.subr.bf16.mxu0 0
    %2649 = vmatpush1.bf16.msra.mxu0 0
    %2650 = vmatprep.subr.bf16.mxu0 0
    %2651 = vmatpush1.bf16.msra.mxu0 0
    %2652 = vmatprep.subr.bf16.mxu0 0
    %2653 = vmatpush1.bf16.msra.mxu0 0
    %2654 = vmatprep.mubr.bf16.mxu0 0
    %2655 = vmatmul.mubr.bf16.gmra.mrb[0].mxu0 %v2389
    %v2656 = vpop.f32.mrb[0].mxu0
    %v2657 = vadd.f32 0.0, %v2656
    %v2658 = vpop.f32.mrb[0].mxu0
    %v2659 = vpop.f32.mrb[0].mxu0
    %v2660 = vadd.f32 0.0, %v2659
    %v2661 = vpop.f32.mrb[0].mxu0
    %2662 = vmatprep.mubr.bf16.mxu0 0
    %2663 = vmatmul.mubr.bf16.gmra.mrb[0].mxu0 %v2390
    %v2664 = vpop.f32.mrb[0].mxu0
    %v2665 = vadd.f32 0.0, %v2664
    %v2666 = vpop.f32.mrb[0].mxu0
    %v2667 = vpop.f32.mrb[0].mxu0
    %v2668 = vadd.f32 0.0, %v2667
    %v2669 = vpop.f32.mrb[0].mxu0
    %2670 = vdwg.mxu0
    %v2671 = vadd.f32 %v2397, %v2604
    %v2672 = vadd.f32 %v2400, %v2608
    %v2673 = vadd.f32 %v2403, %v2614
    %v2674 = vadd.f32 %v2406, %v2618
    %v2675 = vxor.u32 %v2671, 2147483648
    %v2676 = vxor.u32 %v2672, 2147483648
    %v2677 = vxor.u32 %v2673, 2147483648
    %v2678 = vxor.u32 %v2674, 2147483648
    %v2679 = vmul.f32 %v2675, 1.442695
    %v2680 = vpow.pop %v2679
    %v2681 = vmul.f32 %v2676, 1.442695
    %v2682 = vpow.pop %v2681
    %v2683 = vmul.f32 %v2677, 1.442695
    %v2684 = vpow.pop %v2683
    %v2685 = vmul.f32 %v2678, 1.442695
    %v2686 = vpow.pop %v2685
    %v2687 = vadd.f32 %v2680, 1.0
    %v2688 = vadd.f32 %v2682, 1.0
    %v2689 = vadd.f32 %v2684, 1.0
    %v2690 = vadd.f32 %v2686, 1.0
    %v2691 = vrcp.pop %v2687
    %v2692 = vmul.f32 1.0, %v2691
    %v2693 = vrcp.pop %v2688
    %v2694 = vmul.f32 1.0, %v2693
    %v2695 = vrcp.pop %v2689
    %v2696 = vmul.f32 1.0, %v2695
    %v2697 = vrcp.pop %v2690
    %v2698 = vmul.f32 1.0, %v2697
    %v2699 = vadd.f32 %v2398, %v2606
    %v2700 = vadd.f32 %v2401, %v2610
    %v2701 = vadd.f32 %v2404, %v2616
    %v2702 = vadd.f32 %v2407, %v2620
    %v2703 = vxor.u32 %v2699, 2147483648
    %v2704 = vxor.u32 %v2700, 2147483648
    %v2705 = vxor.u32 %v2701, 2147483648
    %v2706 = vxor.u32 %v2702, 2147483648
    %v2707 = vmul.f32 %v2703, 1.442695
    %v2708 = vpow.pop %v2707
    %v2709 = vmul.f32 %v2704, 1.442695
    %v2710 = vpow.pop %v2709
    %v2711 = vmul.f32 %v2705, 1.442695
    %v2712 = vpow.pop %v2711
    %v2713 = vmul.f32 %v2706, 1.442695
    %v2714 = vpow.pop %v2713
    %v2715 = vadd.f32 %v2708, 1.0
    %v2716 = vadd.f32 %v2710, 1.0
    %v2717 = vadd.f32 %v2712, 1.0
    %v2718 = vadd.f32 %v2714, 1.0
    %v2719 = vrcp.pop %v2715
    %v2720 = vmul.f32 1.0, %v2719
    %v2721 = vrcp.pop %v2716
    %v2722 = vmul.f32 1.0, %v2721
    %v2723 = vrcp.pop %v2717
    %v2724 = vmul.f32 1.0, %v2723
    %v2725 = vrcp.pop %v2718
    %v2726 = vmul.f32 1.0, %v2725
    %v2727 = vld [vmem:[%s7] sm:$0x1]
    %v2729 = vlaneseq
    %v2730 = vshrl.u32 %v2729, 7
    %v2731 = vsub.s32 0, %v2730
    %v2732 = vrot.slane %v2727, %v2731
    %v2734 = vadd.f32 %v2657, %v2732
    %v2735 = vadd.f32 %v2660, %v2732
    %v2736 = vadd.f32 %v2665, %v2732
    %v2737 = vadd.f32 %v2668, %v2732
    %v2738 = vmul.f32 %v2692, %v2734
    %v2739 = vmul.f32 %v2694, %v2735
    %v2740 = vmul.f32 %v2696, %v2736
    %v2741 = vmul.f32 %v2698, %v2737
    %v2742 = vadd.f32 %v2399, %v2738
    %v2743 = vadd.f32 %v2402, %v2739
    %v2744 = vadd.f32 %v2405, %v2740
    %v2745 = vadd.f32 %v2408, %v2741
    %v2746 = vtanh.pop %v2742
    %v2747 = vtanh.pop %v2743
    %v2748 = vtanh.pop %v2744
    %v2749 = vtanh.pop %v2745
    %v2750 = vsub.f32 1.0, %v2720
    %v2751 = vsub.f32 1.0, %v2722
    %v2752 = vsub.f32 1.0, %v2724
    %v2753 = vsub.f32 1.0, %v2726
    %v2754 = vmul.f32 %v2750, %v2746
    %v2755 = vmul.f32 %v2751, %v2747
    %v2756 = vmul.f32 %v2752, %v2748
    %v2757 = vmul.f32 %v2753, %v2749
    %v2758 = vmul.f32 %v2720, %v2385
    %v2759 = vmul.f32 %v2722, %v2386
    %v2760 = vmul.f32 %v2724, %v2387
    %v2761 = vmul.f32 %v2726, %v2388
    %v2762 = vadd.f32 %v2754, %v2758
    %v2763 = vadd.f32 %v2755, %v2759
    %v2764 = vadd.f32 %v2756, %v2760
    %v2765 = vadd.f32 %v2757, %v2761
    %v2766 = vpack.c.bf16 %v2763, %v2762
    %v2767 = vpack.c.bf16 %v2765, %v2764
    %s2768 = scalar_lea.vmem [#allocation3], 48
    %2769 = vst [vmem:[%s2768] sm:$0xff] %v2766
    %2770 = vst [vmem:[%s2768 + $0x8] sm:$0xff] %v2767
    %s2771 = smul.u32 16, 3
    %s2772 = smul.addr %s2771, 8
    %s2773 = scalar_lea.vmem [#allocation2], %s2772
    %v2774 = vld [vmem:[%s2773] sm:$0xff]
    %v2775 = vld [vmem:[%s2773 + $0x8] sm:$0xff]
    %v2776 = vld [vmem:[%s2773 + $0x10] sm:$0xff]
    %v2777 = vld [vmem:[%s2773 + $0x18] sm:$0xff]
    %v2778 = vld [vmem:[%s2773 + $0x20] sm:$0xff]
    %v2779 = vld [vmem:[%s2773 + $0x28] sm:$0xff]
    %v2780 = vld [vmem:[%s2773 + $0x30] sm:$0xff]
    %v2781 = vld [vmem:[%s2773 + $0x38] sm:$0xff]
    %v2782 = vld [vmem:[%s2773 + $0x40] sm:$0xff]
    %v2783 = vld [vmem:[%s2773 + $0x48] sm:$0xff]
    %v2784 = vld [vmem:[%s2773 + $0x50] sm:$0xff]
    %v2785 = vld [vmem:[%s2773 + $0x58] sm:$0xff]
    %v2786 = vld [vmem:[#allocation12] sm:$0xff]
    %v2787 = vld [vmem:[#allocation12 + $0x8] sm:$0xf]
    %v2788 = vld [vmem:[#allocation12 + $0xc] sm:$0xff]
    %v2789 = vld [vmem:[#allocation12 + $0x14] sm:$0xf]
    %v2790 = vld [vmem:[#allocation12 + $0x18] sm:$0xff]
    %v2791 = vld [vmem:[#allocation12 + $0x20] sm:$0xf]
    %v2792 = vld [vmem:[#allocation12 + $0x24] sm:$0xff]
    %v2793 = vld [vmem:[#allocation12 + $0x2c] sm:$0xf]
    %v2794 = vld [vmem:[#allocation12 + $0x30] sm:$0xff]
    %v2795 = vld [vmem:[#allocation12 + $0x38] sm:$0xf]
    %v2796 = vld [vmem:[#allocation12 + $0x3c] sm:$0xff]
    %v2797 = vld [vmem:[#allocation12 + $0x44] sm:$0xf]
    %v2798 = vld [vmem:[#allocation12 + $0x48] sm:$0xff]
    %v2799 = vld [vmem:[#allocation12 + $0x50] sm:$0xf]
    %v2800 = vld [vmem:[#allocation12 + $0x54] sm:$0xff]
    %v2801 = vld [vmem:[#allocation12 + $0x5c] sm:$0xf]
    %v2802 = vld [vmem:[#allocation12 + $0x60] sm:$0xff]
    %v2803 = vld [vmem:[#allocation12 + $0x68] sm:$0xf]
    %v2804 = vld [vmem:[#allocation12 + $0x6c] sm:$0xff]
    %v2805 = vld [vmem:[#allocation12 + $0x74] sm:$0xf]
    %v2806 = vld [vmem:[#allocation12 + $0x78] sm:$0xff]
    %v2807 = vld [vmem:[#allocation12 + $0x80] sm:$0xf]
    %v2808 = vld [vmem:[#allocation12 + $0x84] sm:$0xff]
    %v2809 = vld [vmem:[#allocation12 + $0x8c] sm:$0xf]
    %v2810 = vld [vmem:[#allocation12 + $0x90] sm:$0xff]
    %v2811 = vld [vmem:[#allocation12 + $0x98] sm:$0xf]
    %v2812 = vld [vmem:[#allocation12 + $0x9c] sm:$0xff]
    %v2813 = vld [vmem:[#allocation12 + $0xa4] sm:$0xf]
    %v2814 = vld [vmem:[#allocation12 + $0xa8] sm:$0xff]
    %v2815 = vld [vmem:[#allocation12 + $0xb0] sm:$0xf]
    %v2816 = vld [vmem:[#allocation12 + $0xb4] sm:$0xff]
    %v2817 = vld [vmem:[#allocation12 + $0xbc] sm:$0xf]
    %v2850 = vunpack.c.l.b16 %v2786
    %v2851 = vunpack.c.h.b16 %v2786
    %v2852 = vunpack.c.l.b16 %v2787
    %v2853 = vunpack.c.l.b16 %v2788
    %v2854 = vunpack.c.h.b16 %v2788
    %v2855 = vunpack.c.l.b16 %v2789
    %v2856 = vunpack.c.l.b16 %v2790
    %v2857 = vunpack.c.h.b16 %v2790
    %v2858 = vunpack.c.l.b16 %v2791
    %v2859 = vunpack.c.l.b16 %v2792
    %v2860 = vunpack.c.h.b16 %v2792
    %v2861 = vunpack.c.l.b16 %v2793
    %v2862 = vunpack.c.l.b16 %v2794
    %v2863 = vunpack.c.h.b16 %v2794
    %v2864 = vunpack.c.l.b16 %v2795
    %v2865 = vunpack.c.l.b16 %v2796
    %v2866 = vunpack.c.h.b16 %v2796
    %v2867 = vunpack.c.l.b16 %v2797
    %v2868 = vunpack.c.l.b16 %v2798
    %v2869 = vunpack.c.h.b16 %v2798
    %v2870 = vunpack.c.l.b16 %v2799
    %v2871 = vunpack.c.l.b16 %v2800
    %v2872 = vunpack.c.h.b16 %v2800
    %v2873 = vunpack.c.l.b16 %v2801
    %v2874 = vunpack.c.l.b16 %v2802
    %v2875 = vunpack.c.h.b16 %v2802
    %v2876 = vunpack.c.l.b16 %v2803
    %v2877 = vunpack.c.l.b16 %v2804
    %v2878 = vunpack.c.h.b16 %v2804
    %v2879 = vunpack.c.l.b16 %v2805
    %v2880 = vunpack.c.l.b16 %v2806
    %v2881 = vunpack.c.h.b16 %v2806
    %v2882 = vunpack.c.l.b16 %v2807
    %v2883 = vunpack.c.l.b16 %v2808
    %v2884 = vunpack.c.h.b16 %v2808
    %v2885 = vunpack.c.l.b16 %v2809
    %v2886 = vunpack.c.l.b16 %v2810
    %v2887 = vunpack.c.h.b16 %v2810
    %v2888 = vunpack.c.l.b16 %v2811
    %v2889 = vunpack.c.l.b16 %v2812
    %v2890 = vunpack.c.h.b16 %v2812
    %v2891 = vunpack.c.l.b16 %v2813
    %v2892 = vunpack.c.l.b16 %v2814
    %v2893 = vunpack.c.h.b16 %v2814
    %v2894 = vunpack.c.l.b16 %v2815
    %v2895 = vunpack.c.l.b16 %v2816
    %v2896 = vunpack.c.h.b16 %v2816
    %v2897 = vunpack.c.l.b16 %v2817
    %v2898 = vpack.c.b16 %v2853, %v2850
    %v2899 = vpack.c.b16 %v2854, %v2851
    %v2900 = vpack.c.b16 %v2855, %v2852
    %v2901 = vpack.c.b16 %v2859, %v2856
    %v2902 = vpack.c.b16 %v2860, %v2857
    %v2903 = vpack.c.b16 %v2861, %v2858
    %v2904 = vpack.c.b16 %v2865, %v2862
    %v2905 = vpack.c.b16 %v2866, %v2863
    %v2906 = vpack.c.b16 %v2867, %v2864
    %v2907 = vpack.c.b16 %v2871, %v2868
    %v2908 = vpack.c.b16 %v2872, %v2869
    %v2909 = vpack.c.b16 %v2873, %v2870
    %v2910 = vpack.c.b16 %v2877, %v2874
    %v2911 = vpack.c.b16 %v2878, %v2875
    %v2912 = vpack.c.b16 %v2879, %v2876
    %v2913 = vpack.c.b16 %v2883, %v2880
    %v2914 = vpack.c.b16 %v2884, %v2881
    %v2915 = vpack.c.b16 %v2885, %v2882
    %v2916 = vpack.c.b16 %v2889, %v2886
    %v2917 = vpack.c.b16 %v2890, %v2887
    %v2918 = vpack.c.b16 %v2891, %v2888
    %v2919 = vpack.c.b16 %v2895, %v2892
    %v2920 = vpack.c.b16 %v2896, %v2893
    %v2921 = vpack.c.b16 %v2897, %v2894
    %2946 = vmatprep.subr.bf16.mxu0 %v2899
    %2947 = vmatpush1.bf16.msra.mxu0 %v2898
    %2948 = vmatprep.subr.bf16.mxu0 %v2902
    %2949 = vmatpush1.bf16.msra.mxu0 %v2901
    %2950 = vmatprep.subr.bf16.mxu0 %v2905
    %2951 = vmatpush1.bf16.msra.mxu0 %v2904
    %2952 = vmatprep.subr.bf16.mxu0 %v2908
    %2953 = vmatpush1.bf16.msra.mxu0 %v2907
    %2954 = vmatprep.subr.bf16.mxu0 %v2911
    %2955 = vmatpush1.bf16.msra.mxu0 %v2910
    %2956 = vmatprep.subr.bf16.mxu0 %v2914
    %2957 = vmatpush1.bf16.msra.mxu0 %v2913
    %2958 = vmatprep.subr.bf16.mxu0 %v2917
    %2959 = vmatpush1.bf16.msra.mxu0 %v2916
    %2960 = vmatprep.subr.bf16.mxu0 %v2920
    %2961 = vmatpush1.bf16.msra.mxu0 %v2919
    %2962 = vmatprep.subr.bf16.mxu0 0
    %2963 = vmatpush1.bf16.msra.mxu0 0
    %2964 = vmatprep.subr.bf16.mxu0 0
    %2965 = vmatpush1.bf16.msra.mxu0 0
    %2966 = vmatprep.subr.bf16.mxu0 0
    %2967 = vmatpush1.bf16.msra.mxu0 0
    %2968 = vmatprep.subr.bf16.mxu0 0
    %2969 = vmatpush1.bf16.msra.mxu0 0
    %2970 = vmatprep.subr.bf16.mxu0 0
    %2971 = vmatpush1.bf16.msra.mxu0 0
    %2972 = vmatprep.subr.bf16.mxu0 0
    %2973 = vmatpush1.bf16.msra.mxu0 0
    %2974 = vmatprep.subr.bf16.mxu0 0
    %2975 = vmatpush1.bf16.msra.mxu0 0
    %2976 = vmatprep.subr.bf16.mxu0 0
    %2977 = vmatpush1.bf16.msra.mxu0 0
    %2978 = vmatprep.mubr.bf16.mxu0 0
    %2979 = vmatmul.mubr.bf16.gmra.mrb[0].mxu0 %v2766
    %v2980 = vpop.f32.mrb[0].mxu0
    %v2981 = vadd.f32 0.0, %v2980
    %v2982 = vpop.f32.mrb[0].mxu0
    %v2983 = vadd.f32 0.0, %v2982
    %v2984 = vpop.f32.mrb[0].mxu0
    %v2985 = vadd.f32 0.0, %v2984
    %v2986 = vpop.f32.mrb[0].mxu0
    %v2987 = vadd.f32 0.0, %v2986
    %2988 = vmatprep.mubr.bf16.mxu0 0
    %2989 = vmatmul.mubr.bf16.gmra.mrb[0].mxu0 %v2767
    %v2990 = vpop.f32.mrb[0].mxu0
    %v2991 = vadd.f32 0.0, %v2990
    %v2992 = vpop.f32.mrb[0].mxu0
    %v2993 = vadd.f32 0.0, %v2992
    %v2994 = vpop.f32.mrb[0].mxu0
    %v2995 = vadd.f32 0.0, %v2994
    %v2996 = vpop.f32.mrb[0].mxu0
    %v2997 = vadd.f32 0.0, %v2996
    %2998 = vdwg.mxu0
    %2999 = vmatprep.subr.bf16.mxu0 0
    %3000 = vmatpush1.bf16.msra.mxu0 %v2900
    %3001 = vmatprep.subr.bf16.mxu0 0
    %3002 = vmatpush1.bf16.msra.mxu0 %v2903
    %3003 = vmatprep.subr.bf16.mxu0 0
    %3004 = vmatpush1.bf16.msra.mxu0 %v2906
    %3005 = vmatprep.subr.bf16.mxu0 0
    %3006 = vmatpush1.bf16.msra.mxu0 %v2909
    %3007 = vmatprep.subr.bf16.mxu0 0
    %3008 = vmatpush1.bf16.msra.mxu0 %v2912
    %3009 = vmatprep.subr.bf16.mxu0 0
    %3010 = vmatpush1.bf16.msra.mxu0 %v2915
    %3011 = vmatprep.subr.bf16.mxu0 0
    %3012 = vmatpush1.bf16.msra.mxu0 %v2918
    %3013 = vmatprep.subr.bf16.mxu0 0
    %3014 = vmatpush1.bf16.msra.mxu0 %v2921
    %3015 = vmatprep.subr.bf16.mxu0 0
    %3016 = vmatpush1.bf16.msra.mxu0 0
    %3017 = vmatprep.subr.bf16.mxu0 0
    %3018 = vmatpush1.bf16.msra.mxu0 0
    %3019 = vmatprep.subr.bf16.mxu0 0
    %3020 = vmatpush1.bf16.msra.mxu0 0
    %3021 = vmatprep.subr.bf16.mxu0 0
    %3022 = vmatpush1.bf16.msra.mxu0 0
    %3023 = vmatprep.subr.bf16.mxu0 0
    %3024 = vmatpush1.bf16.msra.mxu0 0
    %3025 = vmatprep.subr.bf16.mxu0 0
    %3026 = vmatpush1.bf16.msra.mxu0 0
    %3027 = vmatprep.subr.bf16.mxu0 0
    %3028 = vmatpush1.bf16.msra.mxu0 0
    %3029 = vmatprep.subr.bf16.mxu0 0
    %3030 = vmatpush1.bf16.msra.mxu0 0
    %3031 = vmatprep.mubr.bf16.mxu0 0
    %3032 = vmatmul.mubr.bf16.gmra.mrb[0].mxu0 %v2766
    %v3033 = vpop.f32.mrb[0].mxu0
    %v3034 = vadd.f32 0.0, %v3033
    %v3035 = vpop.f32.mrb[0].mxu0
    %v3036 = vpop.f32.mrb[0].mxu0
    %v3037 = vadd.f32 0.0, %v3036
    %v3038 = vpop.f32.mrb[0].mxu0
    %3039 = vmatprep.mubr.bf16.mxu0 0
    %3040 = vmatmul.mubr.bf16.gmra.mrb[0].mxu0 %v2767
    %v3041 = vpop.f32.mrb[0].mxu0
    %v3042 = vadd.f32 0.0, %v3041
    %v3043 = vpop.f32.mrb[0].mxu0
    %v3044 = vpop.f32.mrb[0].mxu0
    %v3045 = vadd.f32 0.0, %v3044
    %v3046 = vpop.f32.mrb[0].mxu0
    %3047 = vdwg.mxu0
    %v3048 = vadd.f32 %v2774, %v2981
    %v3049 = vadd.f32 %v2777, %v2985
    %v3050 = vadd.f32 %v2780, %v2991
    %v3051 = vadd.f32 %v2783, %v2995
    %v3052 = vxor.u32 %v3048, 2147483648
    %v3053 = vxor.u32 %v3049, 2147483648
    %v3054 = vxor.u32 %v3050, 2147483648
    %v3055 = vxor.u32 %v3051, 2147483648
    %v3056 = vmul.f32 %v3052, 1.442695
    %v3057 = vpow.pop %v3056
    %v3058 = vmul.f32 %v3053, 1.442695
    %v3059 = vpow.pop %v3058
    %v3060 = vmul.f32 %v3054, 1.442695
    %v3061 = vpow.pop %v3060
    %v3062 = vmul.f32 %v3055, 1.442695
    %v3063 = vpow.pop %v3062
    %v3064 = vadd.f32 %v3057, 1.0
    %v3065 = vadd.f32 %v3059, 1.0
    %v3066 = vadd.f32 %v3061, 1.0
    %v3067 = vadd.f32 %v3063, 1.0
    %v3068 = vrcp.pop %v3064
    %v3069 = vmul.f32 1.0, %v3068
    %v3070 = vrcp.pop %v3065
    %v3071 = vmul.f32 1.0, %v3070
    %v3072 = vrcp.pop %v3066
    %v3073 = vmul.f32 1.0, %v3072
    %v3074 = vrcp.pop %v3067
    %v3075 = vmul.f32 1.0, %v3074
    %v3076 = vadd.f32 %v2775, %v2983
    %v3077 = vadd.f32 %v2778, %v2987
    %v3078 = vadd.f32 %v2781, %v2993
    %v3079 = vadd.f32 %v2784, %v2997
    %v3080 = vxor.u32 %v3076, 2147483648
    %v3081 = vxor.u32 %v3077, 2147483648
    %v3082 = vxor.u32 %v3078, 2147483648
    %v3083 = vxor.u32 %v3079, 2147483648
    %v3084 = vmul.f32 %v3080, 1.442695
    %v3085 = vpow.pop %v3084
    %v3086 = vmul.f32 %v3081, 1.442695
    %v3087 = vpow.pop %v3086
    %v3088 = vmul.f32 %v3082, 1.442695
    %v3089 = vpow.pop %v3088
    %v3090 = vmul.f32 %v3083, 1.442695
    %v3091 = vpow.pop %v3090
    %v3092 = vadd.f32 %v3085, 1.0
    %v3093 = vadd.f32 %v3087, 1.0
    %v3094 = vadd.f32 %v3089, 1.0
    %v3095 = vadd.f32 %v3091, 1.0
    %v3096 = vrcp.pop %v3092
    %v3097 = vmul.f32 1.0, %v3096
    %v3098 = vrcp.pop %v3093
    %v3099 = vmul.f32 1.0, %v3098
    %v3100 = vrcp.pop %v3094
    %v3101 = vmul.f32 1.0, %v3100
    %v3102 = vrcp.pop %v3095
    %v3103 = vmul.f32 1.0, %v3102
    %v3104 = vld [vmem:[%s7] sm:$0x1]
    %v3106 = vlaneseq
    %v3107 = vshrl.u32 %v3106, 7
    %v3108 = vsub.s32 0, %v3107
    %v3109 = vrot.slane %v3104, %v3108
    %v3111 = vadd.f32 %v3034, %v3109
    %v3112 = vadd.f32 %v3037, %v3109
    %v3113 = vadd.f32 %v3042, %v3109
    %v3114 = vadd.f32 %v3045, %v3109
    %v3115 = vmul.f32 %v3069, %v3111
    %v3116 = vmul.f32 %v3071, %v3112
    %v3117 = vmul.f32 %v3073, %v3113
    %v3118 = vmul.f32 %v3075, %v3114
    %v3119 = vadd.f32 %v2776, %v3115
    %v3120 = vadd.f32 %v2779, %v3116
    %v3121 = vadd.f32 %v2782, %v3117
    %v3122 = vadd.f32 %v2785, %v3118
    %v3123 = vtanh.pop %v3119
    %v3124 = vtanh.pop %v3120
    %v3125 = vtanh.pop %v3121
    %v3126 = vtanh.pop %v3122
    %v3127 = vsub.f32 1.0, %v3097
    %v3128 = vsub.f32 1.0, %v3099
    %v3129 = vsub.f32 1.0, %v3101
    %v3130 = vsub.f32 1.0, %v3103
    %v3131 = vmul.f32 %v3127, %v3123
    %v3132 = vmul.f32 %v3128, %v3124
    %v3133 = vmul.f32 %v3129, %v3125
    %v3134 = vmul.f32 %v3130, %v3126
    %v3135 = vmul.f32 %v3097, %v2762
    %v3136 = vmul.f32 %v3099, %v2763
    %v3137 = vmul.f32 %v3101, %v2764
    %v3138 = vmul.f32 %v3103, %v2765
    %v3139 = vadd.f32 %v3131, %v3135
    %v3140 = vadd.f32 %v3132, %v3136
    %v3141 = vadd.f32 %v3133, %v3137
    %v3142 = vadd.f32 %v3134, %v3138
    %v3143 = vpack.c.bf16 %v3140, %v3139
    %v3144 = vpack.c.bf16 %v3142, %v3141
    %s3145 = scalar_lea.vmem [#allocation3], 64
    %3146 = vst [vmem:[%s3145] sm:$0xff] %v3143
    %3147 = vst [vmem:[%s3145 + $0x8] sm:$0xff] %v3144
    %s3148 = smul.u32 20, 3
    %s3149 = smul.addr %s3148, 8
    %s3150 = scalar_lea.vmem [#allocation2], %s3149
    %v3151 = vld [vmem:[%s3150] sm:$0xff]
    %v3152 = vld [vmem:[%s3150 + $0x8] sm:$0xff]
    %v3153 = vld [vmem:[%s3150 + $0x10] sm:$0xff]
    %v3154 = vld [vmem:[%s3150 + $0x18] sm:$0xff]
    %v3155 = vld [vmem:[%s3150 + $0x20] sm:$0xff]
    %v3156 = vld [vmem:[%s3150 + $0x28] sm:$0xff]
    %v3157 = vld [vmem:[%s3150 + $0x30] sm:$0xff]
    %v3158 = vld [vmem:[%s3150 + $0x38] sm:$0xff]
    %v3159 = vld [vmem:[%s3150 + $0x40] sm:$0xff]
    %v3160 = vld [vmem:[%s3150 + $0x48] sm:$0xff]
    %v3161 = vld [vmem:[%s3150 + $0x50] sm:$0xff]
    %v3162 = vld [vmem:[%s3150 + $0x58] sm:$0xff]
    %v3163 = vld [vmem:[#allocation12] sm:$0xff]
    %v3164 = vld [vmem:[#allocation12 + $0x8] sm:$0xf]
    %v3165 = vld [vmem:[#allocation12 + $0xc] sm:$0xff]
    %v3166 = vld [vmem:[#allocation12 + $0x14] sm:$0xf]
    %v3167 = vld [vmem:[#allocation12 + $0x18] sm:$0xff]
    %v3168 = vld [vmem:[#allocation12 + $0x20] sm:$0xf]
    %v3169 = vld [vmem:[#allocation12 + $0x24] sm:$0xff]
    %v3170 = vld [vmem:[#allocation12 + $0x2c] sm:$0xf]
    %v3171 = vld [vmem:[#allocation12 + $0x30] sm:$0xff]
    %v3172 = vld [vmem:[#allocation12 + $0x38] sm:$0xf]
    %v3173 = vld [vmem:[#allocation12 + $0x3c] sm:$0xff]
    %v3174 = vld [vmem:[#allocation12 + $0x44] sm:$0xf]
    %v3175 = vld [vmem:[#allocation12 + $0x48] sm:$0xff]
    %v3176 = vld [vmem:[#allocation12 + $0x50] sm:$0xf]
    %v3177 = vld [vmem:[#allocation12 + $0x54] sm:$0xff]
    %v3178 = vld [vmem:[#allocation12 + $0x5c] sm:$0xf]
    %v3179 = vld [vmem:[#allocation12 + $0x60] sm:$0xff]
    %v3180 = vld [vmem:[#allocation12 + $0x68] sm:$0xf]
    %v3181 = vld [vmem:[#allocation12 + $0x6c] sm:$0xff]
    %v3182 = vld [vmem:[#allocation12 + $0x74] sm:$0xf]
    %v3183 = vld [vmem:[#allocation12 + $0x78] sm:$0xff]
    %v3184 = vld [vmem:[#allocation12 + $0x80] sm:$0xf]
    %v3185 = vld [vmem:[#allocation12 + $0x84] sm:$0xff]
    %v3186 = vld [vmem:[#allocation12 + $0x8c] sm:$0xf]
    %v3187 = vld [vmem:[#allocation12 + $0x90] sm:$0xff]
    %v3188 = vld [vmem:[#allocation12 + $0x98] sm:$0xf]
    %v3189 = vld [vmem:[#allocation12 + $0x9c] sm:$0xff]
    %v3190 = vld [vmem:[#allocation12 + $0xa4] sm:$0xf]
    %v3191 = vld [vmem:[#allocation12 + $0xa8] sm:$0xff]
    %v3192 = vld [vmem:[#allocation12 + $0xb0] sm:$0xf]
    %v3193 = vld [vmem:[#allocation12 + $0xb4] sm:$0xff]
    %v3194 = vld [vmem:[#allocation12 + $0xbc] sm:$0xf]
    %v3227 = vunpack.c.l.b16 %v3163
    %v3228 = vunpack.c.h.b16 %v3163
    %v3229 = vunpack.c.l.b16 %v3164
    %v3230 = vunpack.c.l.b16 %v3165
    %v3231 = vunpack.c.h.b16 %v3165
    %v3232 = vunpack.c.l.b16 %v3166
    %v3233 = vunpack.c.l.b16 %v3167
    %v3234 = vunpack.c.h.b16 %v3167
    %v3235 = vunpack.c.l.b16 %v3168
    %v3236 = vunpack.c.l.b16 %v3169
    %v3237 = vunpack.c.h.b16 %v3169
    %v3238 = vunpack.c.l.b16 %v3170
    %v3239 = vunpack.c.l.b16 %v3171
    %v3240 = vunpack.c.h.b16 %v3171
    %v3241 = vunpack.c.l.b16 %v3172
    %v3242 = vunpack.c.l.b16 %v3173
    %v3243 = vunpack.c.h.b16 %v3173
    %v3244 = vunpack.c.l.b16 %v3174
    %v3245 = vunpack.c.l.b16 %v3175
    %v3246 = vunpack.c.h.b16 %v3175
    %v3247 = vunpack.c.l.b16 %v3176
    %v3248 = vunpack.c.l.b16 %v3177
    %v3249 = vunpack.c.h.b16 %v3177
    %v3250 = vunpack.c.l.b16 %v3178
    %v3251 = vunpack.c.l.b16 %v3179
    %v3252 = vunpack.c.h.b16 %v3179
    %v3253 = vunpack.c.l.b16 %v3180
    %v3254 = vunpack.c.l.b16 %v3181
    %v3255 = vunpack.c.h.b16 %v3181
    %v3256 = vunpack.c.l.b16 %v3182
    %v3257 = vunpack.c.l.b16 %v3183
    %v3258 = vunpack.c.h.b16 %v3183
    %v3259 = vunpack.c.l.b16 %v3184
    %v3260 = vunpack.c.l.b16 %v3185
    %v3261 = vunpack.c.h.b16 %v3185
    %v3262 = vunpack.c.l.b16 %v3186
    %v3263 = vunpack.c.l.b16 %v3187
    %v3264 = vunpack.c.h.b16 %v3187
    %v3265 = vunpack.c.l.b16 %v3188
    %v3266 = vunpack.c.l.b16 %v3189
    %v3267 = vunpack.c.h.b16 %v3189
    %v3268 = vunpack.c.l.b16 %v3190
    %v3269 = vunpack.c.l.b16 %v3191
    %v3270 = vunpack.c.h.b16 %v3191
    %v3271 = vunpack.c.l.b16 %v3192
    %v3272 = vunpack.c.l.b16 %v3193
    %v3273 = vunpack.c.h.b16 %v3193
    %v3274 = vunpack.c.l.b16 %v3194
    %v3275 = vpack.c.b16 %v3230, %v3227
    %v3276 = vpack.c.b16 %v3231, %v3228
    %v3277 = vpack.c.b16 %v3232, %v3229
    %v3278 = vpack.c.b16 %v3236, %v3233
    %v3279 = vpack.c.b16 %v3237, %v3234
    %v3280 = vpack.c.b16 %v3238, %v3235
    %v3281 = vpack.c.b16 %v3242, %v3239
    %v3282 = vpack.c.b16 %v3243, %v3240
    %v3283 = vpack.c.b16 %v3244, %v3241
    %v3284 = vpack.c.b16 %v3248, %v3245
    %v3285 = vpack.c.b16 %v3249, %v3246
    %v3286 = vpack.c.b16 %v3250, %v3247
    %v3287 = vpack.c.b16 %v3254, %v3251
    %v3288 = vpack.c.b16 %v3255, %v3252
    %v3289 = vpack.c.b16 %v3256, %v3253
    %v3290 = vpack.c.b16 %v3260, %v3257
    %v3291 = vpack.c.b16 %v3261, %v3258
    %v3292 = vpack.c.b16 %v3262, %v3259
    %v3293 = vpack.c.b16 %v3266, %v3263
    %v3294 = vpack.c.b16 %v3267, %v3264
    %v3295 = vpack.c.b16 %v3268, %v3265
    %v3296 = vpack.c.b16 %v3272, %v3269
    %v3297 = vpack.c.b16 %v3273, %v3270
    %v3298 = vpack.c.b16 %v3274, %v3271
    %3323 = vmatprep.subr.bf16.mxu0 %v3276
    %3324 = vmatpush1.bf16.msra.mxu0 %v3275
    %3325 = vmatprep.subr.bf16.mxu0 %v3279
    %3326 = vmatpush1.bf16.msra.mxu0 %v3278
    %3327 = vmatprep.subr.bf16.mxu0 %v3282
    %3328 = vmatpush1.bf16.msra.mxu0 %v3281
    %3329 = vmatprep.subr.bf16.mxu0 %v3285
    %3330 = vmatpush1.bf16.msra.mxu0 %v3284
    %3331 = vmatprep.subr.bf16.mxu0 %v3288
    %3332 = vmatpush1.bf16.msra.mxu0 %v3287
    %3333 = vmatprep.subr.bf16.mxu0 %v3291
    %3334 = vmatpush1.bf16.msra.mxu0 %v3290
    %3335 = vmatprep.subr.bf16.mxu0 %v3294
    %3336 = vmatpush1.bf16.msra.mxu0 %v3293
    %3337 = vmatprep.subr.bf16.mxu0 %v3297
    %3338 = vmatpush1.bf16.msra.mxu0 %v3296
    %3339 = vmatprep.subr.bf16.mxu0 0
    %3340 = vmatpush1.bf16.msra.mxu0 0
    %3341 = vmatprep.subr.bf16.mxu0 0
    %3342 = vmatpush1.bf16.msra.mxu0 0
    %3343 = vmatprep.subr.bf16.mxu0 0
    %3344 = vmatpush1.bf16.msra.mxu0 0
    %3345 = vmatprep.subr.bf16.mxu0 0
    %3346 = vmatpush1.bf16.msra.mxu0 0
    %3347 = vmatprep.subr.bf16.mxu0 0
    %3348 = vmatpush1.bf16.msra.mxu0 0
    %3349 = vmatprep.subr.bf16.mxu0 0
    %3350 = vmatpush1.bf16.msra.mxu0 0
    %3351 = vmatprep.subr.bf16.mxu0 0
    %3352 = vmatpush1.bf16.msra.mxu0 0
    %3353 = vmatprep.subr.bf16.mxu0 0
    %3354 = vmatpush1.bf16.msra.mxu0 0
    %3355 = vmatprep.mubr.bf16.mxu0 0
    %3356 = vmatmul.mubr.bf16.gmra.mrb[0].mxu0 %v3143
    %v3357 = vpop.f32.mrb[0].mxu0
    %v3358 = vadd.f32 0.0, %v3357
    %v3359 = vpop.f32.mrb[0].mxu0
    %v3360 = vadd.f32 0.0, %v3359
    %v3361 = vpop.f32.mrb[0].mxu0
    %v3362 = vadd.f32 0.0, %v3361
    %v3363 = vpop.f32.mrb[0].mxu0
    %v3364 = vadd.f32 0.0, %v3363
    %3365 = vmatprep.mubr.bf16.mxu0 0
    %3366 = vmatmul.mubr.bf16.gmra.mrb[0].mxu0 %v3144
    %v3367 = vpop.f32.mrb[0].mxu0
    %v3368 = vadd.f32 0.0, %v3367
    %v3369 = vpop.f32.mrb[0].mxu0
    %v3370 = vadd.f32 0.0, %v3369
    %v3371 = vpop.f32.mrb[0].mxu0
    %v3372 = vadd.f32 0.0, %v3371
    %v3373 = vpop.f32.mrb[0].mxu0
    %v3374 = vadd.f32 0.0, %v3373
    %3375 = vdwg.mxu0
    %3376 = vmatprep.subr.bf16.mxu0 0
    %3377 = vmatpush1.bf16.msra.mxu0 %v3277
    %3378 = vmatprep.subr.bf16.mxu0 0
    %3379 = vmatpush1.bf16.msra.mxu0 %v3280
    %3380 = vmatprep.subr.bf16.mxu0 0
    %3381 = vmatpush1.bf16.msra.mxu0 %v3283
    %3382 = vmatprep.subr.bf16.mxu0 0
    %3383 = vmatpush1.bf16.msra.mxu0 %v3286
    %3384 = vmatprep.subr.bf16.mxu0 0
    %3385 = vmatpush1.bf16.msra.mxu0 %v3289
    %3386 = vmatprep.subr.bf16.mxu0 0
    %3387 = vmatpush1.bf16.msra.mxu0 %v3292
    %3388 = vmatprep.subr.bf16.mxu0 0
    %3389 = vmatpush1.bf16.msra.mxu0 %v3295
    %3390 = vmatprep.subr.bf16.mxu0 0
    %3391 = vmatpush1.bf16.msra.mxu0 %v3298
    %3392 = vmatprep.subr.bf16.mxu0 0
    %3393 = vmatpush1.bf16.msra.mxu0 0
    %3394 = vmatprep.subr.bf16.mxu0 0
    %3395 = vmatpush1.bf16.msra.mxu0 0
    %3396 = vmatprep.subr.bf16.mxu0 0
    %3397 = vmatpush1.bf16.msra.mxu0 0
    %3398 = vmatprep.subr.bf16.mxu0 0
    %3399 = vmatpush1.bf16.msra.mxu0 0
    %3400 = vmatprep.subr.bf16.mxu0 0
    %3401 = vmatpush1.bf16.msra.mxu0 0
    %3402 = vmatprep.subr.bf16.mxu0 0
    %3403 = vmatpush1.bf16.msra.mxu0 0
    %3404 = vmatprep.subr.bf16.mxu0 0
    %3405 = vmatpush1.bf16.msra.mxu0 0
    %3406 = vmatprep.subr.bf16.mxu0 0
    %3407 = vmatpush1.bf16.msra.mxu0 0
    %3408 = vmatprep.mubr.bf16.mxu0 0
    %3409 = vmatmul.mubr.bf16.gmra.mrb[0].mxu0 %v3143
    %v3410 = vpop.f32.mrb[0].mxu0
    %v3411 = vadd.f32 0.0, %v3410
    %v3412 = vpop.f32.mrb[0].mxu0
    %v3413 = vpop.f32.mrb[0].mxu0
    %v3414 = vadd.f32 0.0, %v3413
    %v3415 = vpop.f32.mrb[0].mxu0
    %3416 = vmatprep.mubr.bf16.mxu0 0
    %3417 = vmatmul.mubr.bf16.gmra.mrb[0].mxu0 %v3144
    %v3418 = vpop.f32.mrb[0].mxu0
    %v3419 = vadd.f32 0.0, %v3418
    %v3420 = vpop.f32.mrb[0].mxu0
    %v3421 = vpop.f32.mrb[0].mxu0
    %v3422 = vadd.f32 0.0, %v3421
    %v3423 = vpop.f32.mrb[0].mxu0
    %3424 = vdwg.mxu0
    %v3425 = vadd.f32 %v3151, %v3358
    %v3426 = vadd.f32 %v3154, %v3362
    %v3427 = vadd.f32 %v3157, %v3368
    %v3428 = vadd.f32 %v3160, %v3372
    %v3429 = vxor.u32 %v3425, 2147483648
    %v3430 = vxor.u32 %v3426, 2147483648
    %v3431 = vxor.u32 %v3427, 2147483648
    %v3432 = vxor.u32 %v3428, 2147483648
    %v3433 = vmul.f32 %v3429, 1.442695
    %v3434 = vpow.pop %v3433
    %v3435 = vmul.f32 %v3430, 1.442695
    %v3436 = vpow.pop %v3435
    %v3437 = vmul.f32 %v3431, 1.442695
    %v3438 = vpow.pop %v3437
    %v3439 = vmul.f32 %v3432, 1.442695
    %v3440 = vpow.pop %v3439
    %v3441 = vadd.f32 %v3434, 1.0
    %v3442 = vadd.f32 %v3436, 1.0
    %v3443 = vadd.f32 %v3438, 1.0
    %v3444 = vadd.f32 %v3440, 1.0
    %v3445 = vrcp.pop %v3441
    %v3446 = vmul.f32 1.0, %v3445
    %v3447 = vrcp.pop %v3442
    %v3448 = vmul.f32 1.0, %v3447
    %v3449 = vrcp.pop %v3443
    %v3450 = vmul.f32 1.0, %v3449
    %v3451 = vrcp.pop %v3444
    %v3452 = vmul.f32 1.0, %v3451
    %v3453 = vadd.f32 %v3152, %v3360
    %v3454 = vadd.f32 %v3155, %v3364
    %v3455 = vadd.f32 %v3158, %v3370
    %v3456 = vadd.f32 %v3161, %v3374
    %v3457 = vxor.u32 %v3453, 2147483648
    %v3458 = vxor.u32 %v3454, 2147483648
    %v3459 = vxor.u32 %v3455, 2147483648
    %v3460 = vxor.u32 %v3456, 2147483648
    %v3461 = vmul.f32 %v3457, 1.442695
    %v3462 = vpow.pop %v3461
    %v3463 = vmul.f32 %v3458, 1.442695
    %v3464 = vpow.pop %v3463
    %v3465 = vmul.f32 %v3459, 1.442695
    %v3466 = vpow.pop %v3465
    %v3467 = vmul.f32 %v3460, 1.442695
    %v3468 = vpow.pop %v3467
    %v3469 = vadd.f32 %v3462, 1.0
    %v3470 = vadd.f32 %v3464, 1.0
    %v3471 = vadd.f32 %v3466, 1.0
    %v3472 = vadd.f32 %v3468, 1.0
    %v3473 = vrcp.pop %v3469
    %v3474 = vmul.f32 1.0, %v3473
    %v3475 = vrcp.pop %v3470
    %v3476 = vmul.f32 1.0, %v3475
    %v3477 = vrcp.pop %v3471
    %v3478 = vmul.f32 1.0, %v3477
    %v3479 = vrcp.pop %v3472
    %v3480 = vmul.f32 1.0, %v3479
    %v3481 = vld [vmem:[%s7] sm:$0x1]
    %v3483 = vlaneseq
    %v3484 = vshrl.u32 %v3483, 7
    %v3485 = vsub.s32 0, %v3484
    %v3486 = vrot.slane %v3481, %v3485
    %v3488 = vadd.f32 %v3411, %v3486
    %v3489 = vadd.f32 %v3414, %v3486
    %v3490 = vadd.f32 %v3419, %v3486
    %v3491 = vadd.f32 %v3422, %v3486
    %v3492 = vmul.f32 %v3446, %v3488
    %v3493 = vmul.f32 %v3448, %v3489
    %v3494 = vmul.f32 %v3450, %v3490
    %v3495 = vmul.f32 %v3452, %v3491
    %v3496 = vadd.f32 %v3153, %v3492
    %v3497 = vadd.f32 %v3156, %v3493
    %v3498 = vadd.f32 %v3159, %v3494
    %v3499 = vadd.f32 %v3162, %v3495
    %v3500 = vtanh.pop %v3496
    %v3501 = vtanh.pop %v3497
    %v3502 = vtanh.pop %v3498
    %v3503 = vtanh.pop %v3499
    %v3504 = vsub.f32 1.0, %v3474
    %v3505 = vsub.f32 1.0, %v3476
    %v3506 = vsub.f32 1.0, %v3478
    %v3507 = vsub.f32 1.0, %v3480
    %v3508 = vmul.f32 %v3504, %v3500
    %v3509 = vmul.f32 %v3505, %v3501
    %v3510 = vmul.f32 %v3506, %v3502
    %v3511 = vmul.f32 %v3507, %v3503
    %v3512 = vmul.f32 %v3474, %v3139
    %v3513 = vmul.f32 %v3476, %v3140
    %v3514 = vmul.f32 %v3478, %v3141
    %v3515 = vmul.f32 %v3480, %v3142
    %v3516 = vadd.f32 %v3508, %v3512
    %v3517 = vadd.f32 %v3509, %v3513
    %v3518 = vadd.f32 %v3510, %v3514
    %v3519 = vadd.f32 %v3511, %v3515
    %v3520 = vpack.c.bf16 %v3517, %v3516
    %v3521 = vpack.c.bf16 %v3519, %v3518
    %s3522 = scalar_lea.vmem [#allocation3], 80
    %3523 = vst [vmem:[%s3522] sm:$0xff] %v3520
    %3524 = vst [vmem:[%s3522 + $0x8] sm:$0xff] %v3521
    %s3525 = smul.u32 24, 3
    %s3526 = smul.addr %s3525, 8
    %s3527 = scalar_lea.vmem [#allocation2], %s3526
    %v3528 = vld [vmem:[%s3527] sm:$0xff]
    %v3529 = vld [vmem:[%s3527 + $0x8] sm:$0xff]
    %v3530 = vld [vmem:[%s3527 + $0x10] sm:$0xff]
    %v3531 = vld [vmem:[%s3527 + $0x18] sm:$0xff]
    %v3532 = vld [vmem:[%s3527 + $0x20] sm:$0xff]
    %v3533 = vld [vmem:[%s3527 + $0x28] sm:$0xff]
    %v3534 = vld [vmem:[%s3527 + $0x30] sm:$0xff]
    %v3535 = vld [vmem:[%s3527 + $0x38] sm:$0xff]
    %v3536 = vld [vmem:[%s3527 + $0x40] sm:$0xff]
    %v3537 = vld [vmem:[%s3527 + $0x48] sm:$0xff]
    %v3538 = vld [vmem:[%s3527 + $0x50] sm:$0xff]
    %v3539 = vld [vmem:[%s3527 + $0x58] sm:$0xff]
    %v3540 = vld [vmem:[#allocation12] sm:$0xff]
    %v3541 = vld [vmem:[#allocation12 + $0x8] sm:$0xf]
    %v3542 = vld [vmem:[#allocation12 + $0xc] sm:$0xff]
    %v3543 = vld [vmem:[#allocation12 + $0x14] sm:$0xf]
    %v3544 = vld [vmem:[#allocation12 + $0x18] sm:$0xff]
    %v3545 = vld [vmem:[#allocation12 + $0x20] sm:$0xf]
    %v3546 = vld [vmem:[#allocation12 + $0x24] sm:$0xff]
    %v3547 = vld [vmem:[#allocation12 + $0x2c] sm:$0xf]
    %v3548 = vld [vmem:[#allocation12 + $0x30] sm:$0xff]
    %v3549 = vld [vmem:[#allocation12 + $0x38] sm:$0xf]
    %v3550 = vld [vmem:[#allocation12 + $0x3c] sm:$0xff]
    %v3551 = vld [vmem:[#allocation12 + $0x44] sm:$0xf]
    %v3552 = vld [vmem:[#allocation12 + $0x48] sm:$0xff]
    %v3553 = vld [vmem:[#allocation12 + $0x50] sm:$0xf]
    %v3554 = vld [vmem:[#allocation12 + $0x54] sm:$0xff]
    %v3555 = vld [vmem:[#allocation12 + $0x5c] sm:$0xf]
    %v3556 = vld [vmem:[#allocation12 + $0x60] sm:$0xff]
    %v3557 = vld [vmem:[#allocation12 + $0x68] sm:$0xf]
    %v3558 = vld [vmem:[#allocation12 + $0x6c] sm:$0xff]
    %v3559 = vld [vmem:[#allocation12 + $0x74] sm:$0xf]
    %v3560 = vld [vmem:[#allocation12 + $0x78] sm:$0xff]
    %v3561 = vld [vmem:[#allocation12 + $0x80] sm:$0xf]
    %v3562 = vld [vmem:[#allocation12 + $0x84] sm:$0xff]
    %v3563 = vld [vmem:[#allocation12 + $0x8c] sm:$0xf]
    %v3564 = vld [vmem:[#allocation12 + $0x90] sm:$0xff]
    %v3565 = vld [vmem:[#allocation12 + $0x98] sm:$0xf]
    %v3566 = vld [vmem:[#allocation12 + $0x9c] sm:$0xff]
    %v3567 = vld [vmem:[#allocation12 + $0xa4] sm:$0xf]
    %v3568 = vld [vmem:[#allocation12 + $0xa8] sm:$0xff]
    %v3569 = vld [vmem:[#allocation12 + $0xb0] sm:$0xf]
    %v3570 = vld [vmem:[#allocation12 + $0xb4] sm:$0xff]
    %v3571 = vld [vmem:[#allocation12 + $0xbc] sm:$0xf]
    %v3604 = vunpack.c.l.b16 %v3540
    %v3605 = vunpack.c.h.b16 %v3540
    %v3606 = vunpack.c.l.b16 %v3541
    %v3607 = vunpack.c.l.b16 %v3542
    %v3608 = vunpack.c.h.b16 %v3542
    %v3609 = vunpack.c.l.b16 %v3543
    %v3610 = vunpack.c.l.b16 %v3544
    %v3611 = vunpack.c.h.b16 %v3544
    %v3612 = vunpack.c.l.b16 %v3545
    %v3613 = vunpack.c.l.b16 %v3546
    %v3614 = vunpack.c.h.b16 %v3546
    %v3615 = vunpack.c.l.b16 %v3547
    %v3616 = vunpack.c.l.b16 %v3548
    %v3617 = vunpack.c.h.b16 %v3548
    %v3618 = vunpack.c.l.b16 %v3549
    %v3619 = vunpack.c.l.b16 %v3550
    %v3620 = vunpack.c.h.b16 %v3550
    %v3621 = vunpack.c.l.b16 %v3551
    %v3622 = vunpack.c.l.b16 %v3552
    %v3623 = vunpack.c.h.b16 %v3552
    %v3624 = vunpack.c.l.b16 %v3553
    %v3625 = vunpack.c.l.b16 %v3554
    %v3626 = vunpack.c.h.b16 %v3554
    %v3627 = vunpack.c.l.b16 %v3555
    %v3628 = vunpack.c.l.b16 %v3556
    %v3629 = vunpack.c.h.b16 %v3556
    %v3630 = vunpack.c.l.b16 %v3557
    %v3631 = vunpack.c.l.b16 %v3558
    %v3632 = vunpack.c.h.b16 %v3558
    %v3633 = vunpack.c.l.b16 %v3559
    %v3634 = vunpack.c.l.b16 %v3560
    %v3635 = vunpack.c.h.b16 %v3560
    %v3636 = vunpack.c.l.b16 %v3561
    %v3637 = vunpack.c.l.b16 %v3562
    %v3638 = vunpack.c.h.b16 %v3562
    %v3639 = vunpack.c.l.b16 %v3563
    %v3640 = vunpack.c.l.b16 %v3564
    %v3641 = vunpack.c.h.b16 %v3564
    %v3642 = vunpack.c.l.b16 %v3565
    %v3643 = vunpack.c.l.b16 %v3566
    %v3644 = vunpack.c.h.b16 %v3566
    %v3645 = vunpack.c.l.b16 %v3567
    %v3646 = vunpack.c.l.b16 %v3568
    %v3647 = vunpack.c.h.b16 %v3568
    %v3648 = vunpack.c.l.b16 %v3569
    %v3649 = vunpack.c.l.b16 %v3570
    %v3650 = vunpack.c.h.b16 %v3570
    %v3651 = vunpack.c.l.b16 %v3571
    %v3652 = vpack.c.b16 %v3607, %v3604
    %v3653 = vpack.c.b16 %v3608, %v3605
    %v3654 = vpack.c.b16 %v3609, %v3606
    %v3655 = vpack.c.b16 %v3613, %v3610
    %v3656 = vpack.c.b16 %v3614, %v3611
    %v3657 = vpack.c.b16 %v3615, %v3612
    %v3658 = vpack.c.b16 %v3619, %v3616
    %v3659 = vpack.c.b16 %v3620, %v3617
    %v3660 = vpack.c.b16 %v3621, %v3618
    %v3661 = vpack.c.b16 %v3625, %v3622
    %v3662 = vpack.c.b16 %v3626, %v3623
    %v3663 = vpack.c.b16 %v3627, %v3624
    %v3664 = vpack.c.b16 %v3631, %v3628
    %v3665 = vpack.c.b16 %v3632, %v3629
    %v3666 = vpack.c.b16 %v3633, %v3630
    %v3667 = vpack.c.b16 %v3637, %v3634
    %v3668 = vpack.c.b16 %v3638, %v3635
    %v3669 = vpack.c.b16 %v3639, %v3636
    %v3670 = vpack.c.b16 %v3643, %v3640
    %v3671 = vpack.c.b16 %v3644, %v3641
    %v3672 = vpack.c.b16 %v3645, %v3642
    %v3673 = vpack.c.b16 %v3649, %v3646
    %v3674 = vpack.c.b16 %v3650, %v3647
    %v3675 = vpack.c.b16 %v3651, %v3648
    %3700 = vmatprep.subr.bf16.mxu0 %v3653
    %3701 = vmatpush1.bf16.msra.mxu0 %v3652
    %3702 = vmatprep.subr.bf16.mxu0 %v3656
    %3703 = vmatpush1.bf16.msra.mxu0 %v3655
    %3704 = vmatprep.subr.bf16.mxu0 %v3659
    %3705 = vmatpush1.bf16.msra.mxu0 %v3658
    %3706 = vmatprep.subr.bf16.mxu0 %v3662
    %3707 = vmatpush1.bf16.msra.mxu0 %v3661
    %3708 = vmatprep.subr.bf16.mxu0 %v3665
    %3709 = vmatpush1.bf16.msra.mxu0 %v3664
    %3710 = vmatprep.subr.bf16.mxu0 %v3668
    %3711 = vmatpush1.bf16.msra.mxu0 %v3667
    %3712 = vmatprep.subr.bf16.mxu0 %v3671
    %3713 = vmatpush1.bf16.msra.mxu0 %v3670
    %3714 = vmatprep.subr.bf16.mxu0 %v3674
    %3715 = vmatpush1.bf16.msra.mxu0 %v3673
    %3716 = vmatprep.subr.bf16.mxu0 0
    %3717 = vmatpush1.bf16.msra.mxu0 0
    %3718 = vmatprep.subr.bf16.mxu0 0
    %3719 = vmatpush1.bf16.msra.mxu0 0
    %3720 = vmatprep.subr.bf16.mxu0 0
    %3721 = vmatpush1.bf16.msra.mxu0 0
    %3722 = vmatprep.subr.bf16.mxu0 0
    %3723 = vmatpush1.bf16.msra.mxu0 0
    %3724 = vmatprep.subr.bf16.mxu0 0
    %3725 = vmatpush1.bf16.msra.mxu0 0
    %3726 = vmatprep.subr.bf16.mxu0 0
    %3727 = vmatpush1.bf16.msra.mxu0 0
    %3728 = vmatprep.subr.bf16.mxu0 0
    %3729 = vmatpush1.bf16.msra.mxu0 0
    %3730 = vmatprep.subr.bf16.mxu0 0
    %3731 = vmatpush1.bf16.msra.mxu0 0
    %3732 = vmatprep.mubr.bf16.mxu0 0
    %3733 = vmatmul.mubr.bf16.gmra.mrb[0].mxu0 %v3520
    %v3734 = vpop.f32.mrb[0].mxu0
    %v3735 = vadd.f32 0.0, %v3734
    %v3736 = vpop.f32.mrb[0].mxu0
    %v3737 = vadd.f32 0.0, %v3736
    %v3738 = vpop.f32.mrb[0].mxu0
    %v3739 = vadd.f32 0.0, %v3738
    %v3740 = vpop.f32.mrb[0].mxu0
    %v3741 = vadd.f32 0.0, %v3740
    %3742 = vmatprep.mubr.bf16.mxu0 0
    %3743 = vmatmul.mubr.bf16.gmra.mrb[0].mxu0 %v3521
    %v3744 = vpop.f32.mrb[0].mxu0
    %v3745 = vadd.f32 0.0, %v3744
    %v3746 = vpop.f32.mrb[0].mxu0
    %v3747 = vadd.f32 0.0, %v3746
    %v3748 = vpop.f32.mrb[0].mxu0
    %v3749 = vadd.f32 0.0, %v3748
    %v3750 = vpop.f32.mrb[0].mxu0
    %v3751 = vadd.f32 0.0, %v3750
    %3752 = vdwg.mxu0
    %3753 = vmatprep.subr.bf16.mxu0 0
    %3754 = vmatpush1.bf16.msra.mxu0 %v3654
    %3755 = vmatprep.subr.bf16.mxu0 0
    %3756 = vmatpush1.bf16.msra.mxu0 %v3657
    %3757 = vmatprep.subr.bf16.mxu0 0
    %3758 = vmatpush1.bf16.msra.mxu0 %v3660
    %3759 = vmatprep.subr.bf16.mxu0 0
    %3760 = vmatpush1.bf16.msra.mxu0 %v3663
    %3761 = vmatprep.subr.bf16.mxu0 0
    %3762 = vmatpush1.bf16.msra.mxu0 %v3666
    %3763 = vmatprep.subr.bf16.mxu0 0
    %3764 = vmatpush1.bf16.msra.mxu0 %v3669
    %3765 = vmatprep.subr.bf16.mxu0 0
    %3766 = vmatpush1.bf16.msra.mxu0 %v3672
    %3767 = vmatprep.subr.bf16.mxu0 0
    %3768 = vmatpush1.bf16.msra.mxu0 %v3675
    %3769 = vmatprep.subr.bf16.mxu0 0
    %3770 = vmatpush1.bf16.msra.mxu0 0
    %3771 = vmatprep.subr.bf16.mxu0 0
    %3772 = vmatpush1.bf16.msra.mxu0 0
    %3773 = vmatprep.subr.bf16.mxu0 0
    %3774 = vmatpush1.bf16.msra.mxu0 0
    %3775 = vmatprep.subr.bf16.mxu0 0
    %3776 = vmatpush1.bf16.msra.mxu0 0
    %3777 = vmatprep.subr.bf16.mxu0 0
    %3778 = vmatpush1.bf16.msra.mxu0 0
    %3779 = vmatprep.subr.bf16.mxu0 0
    %3780 = vmatpush1.bf16.msra.mxu0 0
    %3781 = vmatprep.subr.bf16.mxu0 0
    %3782 = vmatpush1.bf16.msra.mxu0 0
    %3783 = vmatprep.subr.bf16.mxu0 0
    %3784 = vmatpush1.bf16.msra.mxu0 0
    %3785 = vmatprep.mubr.bf16.mxu0 0
    %3786 = vmatmul.mubr.bf16.gmra.mrb[0].mxu0 %v3520
    %v3787 = vpop.f32.mrb[0].mxu0
    %v3788 = vadd.f32 0.0, %v3787
    %v3789 = vpop.f32.mrb[0].mxu0
    %v3790 = vpop.f32.mrb[0].mxu0
    %v3791 = vadd.f32 0.0, %v3790
    %v3792 = vpop.f32.mrb[0].mxu0
    %3793 = vmatprep.mubr.bf16.mxu0 0
    %3794 = vmatmul.mubr.bf16.gmra.mrb[0].mxu0 %v3521
    %v3795 = vpop.f32.mrb[0].mxu0
    %v3796 = vadd.f32 0.0, %v3795
    %v3797 = vpop.f32.mrb[0].mxu0
    %v3798 = vpop.f32.mrb[0].mxu0
    %v3799 = vadd.f32 0.0, %v3798
    %v3800 = vpop.f32.mrb[0].mxu0
    %3801 = vdwg.mxu0
    %v3802 = vadd.f32 %v3528, %v3735
    %v3803 = vadd.f32 %v3531, %v3739
    %v3804 = vadd.f32 %v3534, %v3745
    %v3805 = vadd.f32 %v3537, %v3749
    %v3806 = vxor.u32 %v3802, 2147483648
    %v3807 = vxor.u32 %v3803, 2147483648
    %v3808 = vxor.u32 %v3804, 2147483648
    %v3809 = vxor.u32 %v3805, 2147483648
    %v3810 = vmul.f32 %v3806, 1.442695
    %v3811 = vpow.pop %v3810
    %v3812 = vmul.f32 %v3807, 1.442695
    %v3813 = vpow.pop %v3812
    %v3814 = vmul.f32 %v3808, 1.442695
    %v3815 = vpow.pop %v3814
    %v3816 = vmul.f32 %v3809, 1.442695
    %v3817 = vpow.pop %v3816
    %v3818 = vadd.f32 %v3811, 1.0
    %v3819 = vadd.f32 %v3813, 1.0
    %v3820 = vadd.f32 %v3815, 1.0
    %v3821 = vadd.f32 %v3817, 1.0
    %v3822 = vrcp.pop %v3818
    %v3823 = vmul.f32 1.0, %v3822
    %v3824 = vrcp.pop %v3819
    %v3825 = vmul.f32 1.0, %v3824
    %v3826 = vrcp.pop %v3820
    %v3827 = vmul.f32 1.0, %v3826
    %v3828 = vrcp.pop %v3821
    %v3829 = vmul.f32 1.0, %v3828
    %v3830 = vadd.f32 %v3529, %v3737
    %v3831 = vadd.f32 %v3532, %v3741
    %v3832 = vadd.f32 %v3535, %v3747
    %v3833 = vadd.f32 %v3538, %v3751
    %v3834 = vxor.u32 %v3830, 2147483648
    %v3835 = vxor.u32 %v3831, 2147483648
    %v3836 = vxor.u32 %v3832, 2147483648
    %v3837 = vxor.u32 %v3833, 2147483648
    %v3838 = vmul.f32 %v3834, 1.442695
    %v3839 = vpow.pop %v3838
    %v3840 = vmul.f32 %v3835, 1.442695
    %v3841 = vpow.pop %v3840
    %v3842 = vmul.f32 %v3836, 1.442695
    %v3843 = vpow.pop %v3842
    %v3844 = vmul.f32 %v3837, 1.442695
    %v3845 = vpow.pop %v3844
    %v3846 = vadd.f32 %v3839, 1.0
    %v3847 = vadd.f32 %v3841, 1.0
    %v3848 = vadd.f32 %v3843, 1.0
    %v3849 = vadd.f32 %v3845, 1.0
    %v3850 = vrcp.pop %v3846
    %v3851 = vmul.f32 1.0, %v3850
    %v3852 = vrcp.pop %v3847
    %v3853 = vmul.f32 1.0, %v3852
    %v3854 = vrcp.pop %v3848
    %v3855 = vmul.f32 1.0, %v3854
    %v3856 = vrcp.pop %v3849
    %v3857 = vmul.f32 1.0, %v3856
    %v3858 = vld [vmem:[%s7] sm:$0x1]
    %v3860 = vlaneseq
    %v3861 = vshrl.u32 %v3860, 7
    %v3862 = vsub.s32 0, %v3861
    %v3863 = vrot.slane %v3858, %v3862
    %v3865 = vadd.f32 %v3788, %v3863
    %v3866 = vadd.f32 %v3791, %v3863
    %v3867 = vadd.f32 %v3796, %v3863
    %v3868 = vadd.f32 %v3799, %v3863
    %v3869 = vmul.f32 %v3823, %v3865
    %v3870 = vmul.f32 %v3825, %v3866
    %v3871 = vmul.f32 %v3827, %v3867
    %v3872 = vmul.f32 %v3829, %v3868
    %v3873 = vadd.f32 %v3530, %v3869
    %v3874 = vadd.f32 %v3533, %v3870
    %v3875 = vadd.f32 %v3536, %v3871
    %v3876 = vadd.f32 %v3539, %v3872
    %v3877 = vtanh.pop %v3873
    %v3878 = vtanh.pop %v3874
    %v3879 = vtanh.pop %v3875
    %v3880 = vtanh.pop %v3876
    %v3881 = vsub.f32 1.0, %v3851
    %v3882 = vsub.f32 1.0, %v3853
    %v3883 = vsub.f32 1.0, %v3855
    %v3884 = vsub.f32 1.0, %v3857
    %v3885 = vmul.f32 %v3881, %v3877
    %v3886 = vmul.f32 %v3882, %v3878
    %v3887 = vmul.f32 %v3883, %v3879
    %v3888 = vmul.f32 %v3884, %v3880
    %v3889 = vmul.f32 %v3851, %v3516
    %v3890 = vmul.f32 %v3853, %v3517
    %v3891 = vmul.f32 %v3855, %v3518
    %v3892 = vmul.f32 %v3857, %v3519
    %v3893 = vadd.f32 %v3885, %v3889
    %v3894 = vadd.f32 %v3886, %v3890
    %v3895 = vadd.f32 %v3887, %v3891
    %v3896 = vadd.f32 %v3888, %v3892
    %v3897 = vpack.c.bf16 %v3894, %v3893
    %v3898 = vpack.c.bf16 %v3896, %v3895
    %s3899 = scalar_lea.vmem [#allocation3], 96
    %3900 = vst [vmem:[%s3899] sm:$0xff] %v3897
    %3901 = vst [vmem:[%s3899 + $0x8] sm:$0xff] %v3898
    %s3902 = smul.u32 28, 3
    %s3903 = smul.addr %s3902, 8
    %s3904 = scalar_lea.vmem [#allocation2], %s3903
    %v3905 = vld [vmem:[%s3904] sm:$0xff]
    %v3906 = vld [vmem:[%s3904 + $0x8] sm:$0xff]
    %v3907 = vld [vmem:[%s3904 + $0x10] sm:$0xff]
    %v3908 = vld [vmem:[%s3904 + $0x18] sm:$0xff]
    %v3909 = vld [vmem:[%s3904 + $0x20] sm:$0xff]
    %v3910 = vld [vmem:[%s3904 + $0x28] sm:$0xff]
    %v3911 = vld [vmem:[%s3904 + $0x30] sm:$0xff]
    %v3912 = vld [vmem:[%s3904 + $0x38] sm:$0xff]
    %v3913 = vld [vmem:[%s3904 + $0x40] sm:$0xff]
    %v3914 = vld [vmem:[%s3904 + $0x48] sm:$0xff]
    %v3915 = vld [vmem:[%s3904 + $0x50] sm:$0xff]
    %v3916 = vld [vmem:[%s3904 + $0x58] sm:$0xff]
    %v3917 = vld [vmem:[#allocation12] sm:$0xff]
    %v3918 = vld [vmem:[#allocation12 + $0x8] sm:$0xf]
    %v3919 = vld [vmem:[#allocation12 + $0xc] sm:$0xff]
    %v3920 = vld [vmem:[#allocation12 + $0x14] sm:$0xf]
    %v3921 = vld [vmem:[#allocation12 + $0x18] sm:$0xff]
    %v3922 = vld [vmem:[#allocation12 + $0x20] sm:$0xf]
    %v3923 = vld [vmem:[#allocation12 + $0x24] sm:$0xff]
    %v3924 = vld [vmem:[#allocation12 + $0x2c] sm:$0xf]
    %v3925 = vld [vmem:[#allocation12 + $0x30] sm:$0xff]
    %v3926 = vld [vmem:[#allocation12 + $0x38] sm:$0xf]
    %v3927 = vld [vmem:[#allocation12 + $0x3c] sm:$0xff]
    %v3928 = vld [vmem:[#allocation12 + $0x44] sm:$0xf]
    %v3929 = vld [vmem:[#allocation12 + $0x48] sm:$0xff]
    %v3930 = vld [vmem:[#allocation12 + $0x50] sm:$0xf]
    %v3931 = vld [vmem:[#allocation12 + $0x54] sm:$0xff]
    %v3932 = vld [vmem:[#allocation12 + $0x5c] sm:$0xf]
    %v3933 = vld [vmem:[#allocation12 + $0x60] sm:$0xff]
    %v3934 = vld [vmem:[#allocation12 + $0x68] sm:$0xf]
    %v3935 = vld [vmem:[#allocation12 + $0x6c] sm:$0xff]
    %v3936 = vld [vmem:[#allocation12 + $0x74] sm:$0xf]
    %v3937 = vld [vmem:[#allocation12 + $0x78] sm:$0xff]
    %v3938 = vld [vmem:[#allocation12 + $0x80] sm:$0xf]
    %v3939 = vld [vmem:[#allocation12 + $0x84] sm:$0xff]
    %v3940 = vld [vmem:[#allocation12 + $0x8c] sm:$0xf]
    %v3941 = vld [vmem:[#allocation12 + $0x90] sm:$0xff]
    %v3942 = vld [vmem:[#allocation12 + $0x98] sm:$0xf]
    %v3943 = vld [vmem:[#allocation12 + $0x9c] sm:$0xff]
    %v3944 = vld [vmem:[#allocation12 + $0xa4] sm:$0xf]
    %v3945 = vld [vmem:[#allocation12 + $0xa8] sm:$0xff]
    %v3946 = vld [vmem:[#allocation12 + $0xb0] sm:$0xf]
    %v3947 = vld [vmem:[#allocation12 + $0xb4] sm:$0xff]
    %v3948 = vld [vmem:[#allocation12 + $0xbc] sm:$0xf]
    %v3981 = vunpack.c.l.b16 %v3917
    %v3982 = vunpack.c.h.b16 %v3917
    %v3983 = vunpack.c.l.b16 %v3918
    %v3984 = vunpack.c.l.b16 %v3919
    %v3985 = vunpack.c.h.b16 %v3919
    %v3986 = vunpack.c.l.b16 %v3920
    %v3987 = vunpack.c.l.b16 %v3921
    %v3988 = vunpack.c.h.b16 %v3921
    %v3989 = vunpack.c.l.b16 %v3922
    %v3990 = vunpack.c.l.b16 %v3923
    %v3991 = vunpack.c.h.b16 %v3923
    %v3992 = vunpack.c.l.b16 %v3924
    %v3993 = vunpack.c.l.b16 %v3925
    %v3994 = vunpack.c.h.b16 %v3925
    %v3995 = vunpack.c.l.b16 %v3926
    %v3996 = vunpack.c.l.b16 %v3927
    %v3997 = vunpack.c.h.b16 %v3927
    %v3998 = vunpack.c.l.b16 %v3928
    %v3999 = vunpack.c.l.b16 %v3929
    %v4000 = vunpack.c.h.b16 %v3929
    %v4001 = vunpack.c.l.b16 %v3930
    %v4002 = vunpack.c.l.b16 %v3931
    %v4003 = vunpack.c.h.b16 %v3931
    %v4004 = vunpack.c.l.b16 %v3932
    %v4005 = vunpack.c.l.b16 %v3933
    %v4006 = vunpack.c.h.b16 %v3933
    %v4007 = vunpack.c.l.b16 %v3934
    %v4008 = vunpack.c.l.b16 %v3935
    %v4009 = vunpack.c.h.b16 %v3935
    %v4010 = vunpack.c.l.b16 %v3936
    %v4011 = vunpack.c.l.b16 %v3937
    %v4012 = vunpack.c.h.b16 %v3937
    %v4013 = vunpack.c.l.b16 %v3938
    %v4014 = vunpack.c.l.b16 %v3939
    %v4015 = vunpack.c.h.b16 %v3939
    %v4016 = vunpack.c.l.b16 %v3940
    %v4017 = vunpack.c.l.b16 %v3941
    %v4018 = vunpack.c.h.b16 %v3941
    %v4019 = vunpack.c.l.b16 %v3942
    %v4020 = vunpack.c.l.b16 %v3943
    %v4021 = vunpack.c.h.b16 %v3943
    %v4022 = vunpack.c.l.b16 %v3944
    %v4023 = vunpack.c.l.b16 %v3945
    %v4024 = vunpack.c.h.b16 %v3945
    %v4025 = vunpack.c.l.b16 %v3946
    %v4026 = vunpack.c.l.b16 %v3947
    %v4027 = vunpack.c.h.b16 %v3947
    %v4028 = vunpack.c.l.b16 %v3948
    %v4029 = vpack.c.b16 %v3984, %v3981
    %v4030 = vpack.c.b16 %v3985, %v3982
    %v4031 = vpack.c.b16 %v3986, %v3983
    %v4032 = vpack.c.b16 %v3990, %v3987
    %v4033 = vpack.c.b16 %v3991, %v3988
    %v4034 = vpack.c.b16 %v3992, %v3989
    %v4035 = vpack.c.b16 %v3996, %v3993
    %v4036 = vpack.c.b16 %v3997, %v3994
    %v4037 = vpack.c.b16 %v3998, %v3995
    %v4038 = vpack.c.b16 %v4002, %v3999
    %v4039 = vpack.c.b16 %v4003, %v4000
    %v4040 = vpack.c.b16 %v4004, %v4001
    %v4041 = vpack.c.b16 %v4008, %v4005
    %v4042 = vpack.c.b16 %v4009, %v4006
    %v4043 = vpack.c.b16 %v4010, %v4007
    %v4044 = vpack.c.b16 %v4014, %v4011
    %v4045 = vpack.c.b16 %v4015, %v4012
    %v4046 = vpack.c.b16 %v4016, %v4013
    %v4047 = vpack.c.b16 %v4020, %v4017
    %v4048 = vpack.c.b16 %v4021, %v4018
    %v4049 = vpack.c.b16 %v4022, %v4019
    %v4050 = vpack.c.b16 %v4026, %v4023
    %v4051 = vpack.c.b16 %v4027, %v4024
    %v4052 = vpack.c.b16 %v4028, %v4025
    %4077 = vmatprep.subr.bf16.mxu0 %v4030
    %4078 = vmatpush1.bf16.msra.mxu0 %v4029
    %4079 = vmatprep.subr.bf16.mxu0 %v4033
    %4080 = vmatpush1.bf16.msra.mxu0 %v4032
    %4081 = vmatprep.subr.bf16.mxu0 %v4036
    %4082 = vmatpush1.bf16.msra.mxu0 %v4035
    %4083 = vmatprep.subr.bf16.mxu0 %v4039
    %4084 = vmatpush1.bf16.msra.mxu0 %v4038
    %4085 = vmatprep.subr.bf16.mxu0 %v4042
    %4086 = vmatpush1.bf16.msra.mxu0 %v4041
    %4087 = vmatprep.subr.bf16.mxu0 %v4045
    %4088 = vmatpush1.bf16.msra.mxu0 %v4044
    %4089 = vmatprep.subr.bf16.mxu0 %v4048
    %4090 = vmatpush1.bf16.msra.mxu0 %v4047
    %4091 = vmatprep.subr.bf16.mxu0 %v4051
    %4092 = vmatpush1.bf16.msra.mxu0 %v4050
    %4093 = vmatprep.subr.bf16.mxu0 0
    %4094 = vmatpush1.bf16.msra.mxu0 0
    %4095 = vmatprep.subr.bf16.mxu0 0
    %4096 = vmatpush1.bf16.msra.mxu0 0
    %4097 = vmatprep.subr.bf16.mxu0 0
    %4098 = vmatpush1.bf16.msra.mxu0 0
    %4099 = vmatprep.subr.bf16.mxu0 0
    %4100 = vmatpush1.bf16.msra.mxu0 0
    %4101 = vmatprep.subr.bf16.mxu0 0
    %4102 = vmatpush1.bf16.msra.mxu0 0
    %4103 = vmatprep.subr.bf16.mxu0 0
    %4104 = vmatpush1.bf16.msra.mxu0 0
    %4105 = vmatprep.subr.bf16.mxu0 0
    %4106 = vmatpush1.bf16.msra.mxu0 0
    %4107 = vmatprep.subr.bf16.mxu0 0
    %4108 = vmatpush1.bf16.msra.mxu0 0
    %4109 = vmatprep.mubr.bf16.mxu0 0
    %4110 = vmatmul.mubr.bf16.gmra.mrb[0].mxu0 %v3897
    %v4111 = vpop.f32.mrb[0].mxu0
    %v4112 = vadd.f32 0.0, %v4111
    %v4113 = vpop.f32.mrb[0].mxu0
    %v4114 = vadd.f32 0.0, %v4113
    %v4115 = vpop.f32.mrb[0].mxu0
    %v4116 = vadd.f32 0.0, %v4115
    %v4117 = vpop.f32.mrb[0].mxu0
    %v4118 = vadd.f32 0.0, %v4117
    %4119 = vmatprep.mubr.bf16.mxu0 0
    %4120 = vmatmul.mubr.bf16.gmra.mrb[0].mxu0 %v3898
    %v4121 = vpop.f32.mrb[0].mxu0
    %v4122 = vadd.f32 0.0, %v4121
    %v4123 = vpop.f32.mrb[0].mxu0
    %v4124 = vadd.f32 0.0, %v4123
    %v4125 = vpop.f32.mrb[0].mxu0
    %v4126 = vadd.f32 0.0, %v4125
    %v4127 = vpop.f32.mrb[0].mxu0
    %v4128 = vadd.f32 0.0, %v4127
    %4129 = vdwg.mxu0
    %4130 = vmatprep.subr.bf16.mxu0 0
    %4131 = vmatpush1.bf16.msra.mxu0 %v4031
    %4132 = vmatprep.subr.bf16.mxu0 0
    %4133 = vmatpush1.bf16.msra.mxu0 %v4034
    %4134 = vmatprep.subr.bf16.mxu0 0
    %4135 = vmatpush1.bf16.msra.mxu0 %v4037
    %4136 = vmatprep.subr.bf16.mxu0 0
    %4137 = vmatpush1.bf16.msra.mxu0 %v4040
    %4138 = vmatprep.subr.bf16.mxu0 0
    %4139 = vmatpush1.bf16.msra.mxu0 %v4043
    %4140 = vmatprep.subr.bf16.mxu0 0
    %4141 = vmatpush1.bf16.msra.mxu0 %v4046
    %4142 = vmatprep.subr.bf16.mxu0 0
    %4143 = vmatpush1.bf16.msra.mxu0 %v4049
    %4144 = vmatprep.subr.bf16.mxu0 0
    %4145 = vmatpush1.bf16.msra.mxu0 %v4052
    %4146 = vmatprep.subr.bf16.mxu0 0
    %4147 = vmatpush1.bf16.msra.mxu0 0
    %4148 = vmatprep.subr.bf16.mxu0 0
    %4149 = vmatpush1.bf16.msra.mxu0 0
    %4150 = vmatprep.subr.bf16.mxu0 0
    %4151 = vmatpush1.bf16.msra.mxu0 0
    %4152 = vmatprep.subr.bf16.mxu0 0
    %4153 = vmatpush1.bf16.msra.mxu0 0
    %4154 = vmatprep.subr.bf16.mxu0 0
    %4155 = vmatpush1.bf16.msra.mxu0 0
    %4156 = vmatprep.subr.bf16.mxu0 0
    %4157 = vmatpush1.bf16.msra.mxu0 0
    %4158 = vmatprep.subr.bf16.mxu0 0
    %4159 = vmatpush1.bf16.msra.mxu0 0
    %4160 = vmatprep.subr.bf16.mxu0 0
    %4161 = vmatpush1.bf16.msra.mxu0 0
    %4162 = vmatprep.mubr.bf16.mxu0 0
    %4163 = vmatmul.mubr.bf16.gmra.mrb[0].mxu0 %v3897
    %v4164 = vpop.f32.mrb[0].mxu0
    %v4165 = vadd.f32 0.0, %v4164
    %v4166 = vpop.f32.mrb[0].mxu0
    %v4167 = vpop.f32.mrb[0].mxu0
    %v4168 = vadd.f32 0.0, %v4167
    %v4169 = vpop.f32.mrb[0].mxu0
    %4170 = vmatprep.mubr.bf16.mxu0 0
    %4171 = vmatmul.mubr.bf16.gmra.mrb[0].mxu0 %v3898
    %v4172 = vpop.f32.mrb[0].mxu0
    %v4173 = vadd.f32 0.0, %v4172
    %v4174 = vpop.f32.mrb[0].mxu0
    %v4175 = vpop.f32.mrb[0].mxu0
    %v4176 = vadd.f32 0.0, %v4175
    %v4177 = vpop.f32.mrb[0].mxu0
    %4178 = vdwg.mxu0
    %v4179 = vadd.f32 %v3905, %v4112
    %v4180 = vadd.f32 %v3908, %v4116
    %v4181 = vadd.f32 %v3911, %v4122
    %v4182 = vadd.f32 %v3914, %v4126
    %v4183 = vxor.u32 %v4179, 2147483648
    %v4184 = vxor.u32 %v4180, 2147483648
    %v4185 = vxor.u32 %v4181, 2147483648
    %v4186 = vxor.u32 %v4182, 2147483648
    %v4187 = vmul.f32 %v4183, 1.442695
    %v4188 = vpow.pop %v4187
    %v4189 = vmul.f32 %v4184, 1.442695
    %v4190 = vpow.pop %v4189
    %v4191 = vmul.f32 %v4185, 1.442695
    %v4192 = vpow.pop %v4191
    %v4193 = vmul.f32 %v4186, 1.442695
    %v4194 = vpow.pop %v4193
    %v4195 = vadd.f32 %v4188, 1.0
    %v4196 = vadd.f32 %v4190, 1.0
    %v4197 = vadd.f32 %v4192, 1.0
    %v4198 = vadd.f32 %v4194, 1.0
    %v4199 = vrcp.pop %v4195
    %v4200 = vmul.f32 1.0, %v4199
    %v4201 = vrcp.pop %v4196
    %v4202 = vmul.f32 1.0, %v4201
    %v4203 = vrcp.pop %v4197
    %v4204 = vmul.f32 1.0, %v4203
    %v4205 = vrcp.pop %v4198
    %v4206 = vmul.f32 1.0, %v4205
    %v4207 = vadd.f32 %v3906, %v4114
    %v4208 = vadd.f32 %v3909, %v4118
    %v4209 = vadd.f32 %v3912, %v4124
    %v4210 = vadd.f32 %v3915, %v4128
    %v4211 = vxor.u32 %v4207, 2147483648
    %v4212 = vxor.u32 %v4208, 2147483648
    %v4213 = vxor.u32 %v4209, 2147483648
    %v4214 = vxor.u32 %v4210, 2147483648
    %v4215 = vmul.f32 %v4211, 1.442695
    %v4216 = vpow.pop %v4215
    %v4217 = vmul.f32 %v4212, 1.442695
    %v4218 = vpow.pop %v4217
    %v4219 = vmul.f32 %v4213, 1.442695
    %v4220 = vpow.pop %v4219
    %v4221 = vmul.f32 %v4214, 1.442695
    %v4222 = vpow.pop %v4221
    %v4223 = vadd.f32 %v4216, 1.0
    %v4224 = vadd.f32 %v4218, 1.0
    %v4225 = vadd.f32 %v4220, 1.0
    %v4226 = vadd.f32 %v4222, 1.0
    %v4227 = vrcp.pop %v4223
    %v4228 = vmul.f32 1.0, %v4227
    %v4229 = vrcp.pop %v4224
    %v4230 = vmul.f32 1.0, %v4229
    %v4231 = vrcp.pop %v4225
    %v4232 = vmul.f32 1.0, %v4231
    %v4233 = vrcp.pop %v4226
    %v4234 = vmul.f32 1.0, %v4233
    %v4235 = vld [vmem:[%s7] sm:$0x1]
    %v4237 = vlaneseq
    %v4238 = vshrl.u32 %v4237, 7
    %v4239 = vsub.s32 0, %v4238
    %v4240 = vrot.slane %v4235, %v4239
    %v4242 = vadd.f32 %v4165, %v4240
    %v4243 = vadd.f32 %v4168, %v4240
    %v4244 = vadd.f32 %v4173, %v4240
    %v4245 = vadd.f32 %v4176, %v4240
    %v4246 = vmul.f32 %v4200, %v4242
    %v4247 = vmul.f32 %v4202, %v4243
    %v4248 = vmul.f32 %v4204, %v4244
    %v4249 = vmul.f32 %v4206, %v4245
    %v4250 = vadd.f32 %v3907, %v4246
    %v4251 = vadd.f32 %v3910, %v4247
    %v4252 = vadd.f32 %v3913, %v4248
    %v4253 = vadd.f32 %v3916, %v4249
    %v4254 = vtanh.pop %v4250
    %v4255 = vtanh.pop %v4251
    %v4256 = vtanh.pop %v4252
    %v4257 = vtanh.pop %v4253
    %v4258 = vsub.f32 1.0, %v4228
    %v4259 = vsub.f32 1.0, %v4230
    %v4260 = vsub.f32 1.0, %v4232
    %v4261 = vsub.f32 1.0, %v4234
    %v4262 = vmul.f32 %v4258, %v4254
    %v4263 = vmul.f32 %v4259, %v4255
    %v4264 = vmul.f32 %v4260, %v4256
    %v4265 = vmul.f32 %v4261, %v4257
    %v4266 = vmul.f32 %v4228, %v3893
    %v4267 = vmul.f32 %v4230, %v3894
    %v4268 = vmul.f32 %v4232, %v3895
    %v4269 = vmul.f32 %v4234, %v3896
    %v4270 = vadd.f32 %v4262, %v4266
    %v4271 = vadd.f32 %v4263, %v4267
    %v4272 = vadd.f32 %v4264, %v4268
    %v4273 = vadd.f32 %v4265, %v4269
    %v4274 = vpack.c.bf16 %v4271, %v4270
    %v4275 = vpack.c.bf16 %v4273, %v4272
    %s4276 = scalar_lea.vmem [#allocation3], 112
    %4277 = vst [vmem:[%s4276] sm:$0xff] %v4274
    %4278 = vst [vmem:[%s4276 + $0x8] sm:$0xff] %v4275
    %v4279 = vld [vmem:[#allocation3] sm:$0xff]
    %v4280 = vld [vmem:[#allocation3 + $0x8] sm:$0xff]
    %v4281 = vld [vmem:[#allocation3 + $0x10] sm:$0xff]
    %v4282 = vld [vmem:[#allocation3 + $0x18] sm:$0xff]
    %v4283 = vld [vmem:[#allocation3 + $0x20] sm:$0xff]
    %v4284 = vld [vmem:[#allocation3 + $0x28] sm:$0xff]
    %v4285 = vld [vmem:[#allocation3 + $0x30] sm:$0xff]
    %v4286 = vld [vmem:[#allocation3 + $0x38] sm:$0xff]
    %v4287 = vld [vmem:[#allocation3 + $0x40] sm:$0xff]
    %v4288 = vld [vmem:[#allocation3 + $0x48] sm:$0xff]
    %v4289 = vld [vmem:[#allocation3 + $0x50] sm:$0xff]
    %v4290 = vld [vmem:[#allocation3 + $0x58] sm:$0xff]
    %v4291 = vld [vmem:[#allocation3 + $0x60] sm:$0xff]
    %v4292 = vld [vmem:[#allocation3 + $0x68] sm:$0xff]
    %v4293 = vld [vmem:[#allocation3 + $0x70] sm:$0xff]
    %v4294 = vld [vmem:[#allocation3 + $0x78] sm:$0xff]
    %v4295 = vld [vmem:[#allocation13] sm:$0xf]
    %v4296 = vld [vmem:[#allocation13 + $0x4] sm:$0xf]
    %v4297 = vld [vmem:[#allocation13 + $0x8] sm:$0xf]
    %v4298 = vld [vmem:[#allocation13 + $0xc] sm:$0xf]
    %v4299 = vld [vmem:[#allocation13 + $0x10] sm:$0xf]
    %v4300 = vld [vmem:[#allocation13 + $0x14] sm:$0xf]
    %v4301 = vld [vmem:[#allocation13 + $0x18] sm:$0xf]
    %v4302 = vld [vmem:[#allocation13 + $0x1c] sm:$0xf]
    %v4303 = vld [vmem:[#allocation13 + $0x20] sm:$0xf]
    %v4304 = vld [vmem:[#allocation13 + $0x24] sm:$0xf]
    %v4305 = vld [vmem:[#allocation13 + $0x28] sm:$0xf]
    %v4306 = vld [vmem:[#allocation13 + $0x2c] sm:$0xf]
    %v4307 = vld [vmem:[#allocation13 + $0x30] sm:$0xf]
    %v4308 = vld [vmem:[#allocation13 + $0x34] sm:$0xf]
    %v4309 = vld [vmem:[#allocation13 + $0x38] sm:$0xf]
    %v4310 = vld [vmem:[#allocation13 + $0x3c] sm:$0xf]
    %v4311 = vld [vmem:[%s9] sm:$0x1]
    %v4313 = vlaneseq
    %v4314 = vshrl.u32 %v4313, 7
    %v4315 = vsub.s32 0, %v4314
    %v4316 = vrot.slane %v4311, %v4315
    %v4334 = vunpack.c.l.b16 %v4295
    %v4335 = vunpack.c.l.b16 %v4296
    %v4336 = vunpack.c.l.b16 %v4297
    %v4337 = vunpack.c.l.b16 %v4298
    %v4338 = vunpack.c.l.b16 %v4299
    %v4339 = vunpack.c.l.b16 %v4300
    %v4340 = vunpack.c.l.b16 %v4301
    %v4341 = vunpack.c.l.b16 %v4302
    %v4342 = vunpack.c.l.b16 %v4303
    %v4343 = vunpack.c.l.b16 %v4304
    %v4344 = vunpack.c.l.b16 %v4305
    %v4345 = vunpack.c.l.b16 %v4306
    %v4346 = vunpack.c.l.b16 %v4307
    %v4347 = vunpack.c.l.b16 %v4308
    %v4348 = vunpack.c.l.b16 %v4309
    %v4349 = vunpack.c.l.b16 %v4310
    %v4350 = vpack.c.b16 %v4335, %v4334
    %v4351 = vpack.c.b16 %v4337, %v4336
    %v4352 = vpack.c.b16 %v4339, %v4338
    %v4353 = vpack.c.b16 %v4341, %v4340
    %v4354 = vpack.c.b16 %v4343, %v4342
    %v4355 = vpack.c.b16 %v4345, %v4344
    %v4356 = vpack.c.b16 %v4347, %v4346
    %v4357 = vpack.c.b16 %v4349, %v4348
    %4366 = vmatprep.subr.bf16.mxu0 0
    %4367 = vmatpush1.bf16.msra.mxu0 %v4350
    %4368 = vmatprep.subr.bf16.mxu0 0
    %4369 = vmatpush1.bf16.msra.mxu0 %v4351
    %4370 = vmatprep.subr.bf16.mxu0 0
    %4371 = vmatpush1.bf16.msra.mxu0 %v4352
    %4372 = vmatprep.subr.bf16.mxu0 0
    %4373 = vmatpush1.bf16.msra.mxu0 %v4353
    %4374 = vmatprep.subr.bf16.mxu0 0
    %4375 = vmatpush1.bf16.msra.mxu0 %v4354
    %4376 = vmatprep.subr.bf16.mxu0 0
    %4377 = vmatpush1.bf16.msra.mxu0 %v4355
    %4378 = vmatprep.subr.bf16.mxu0 0
    %4379 = vmatpush1.bf16.msra.mxu0 %v4356
    %4380 = vmatprep.subr.bf16.mxu0 0
    %4381 = vmatpush1.bf16.msra.mxu0 %v4357
    %4382 = vmatprep.subr.bf16.mxu0 0
    %4383 = vmatpush1.bf16.msra.mxu0 0
    %4384 = vmatprep.subr.bf16.mxu0 0
    %4385 = vmatpush1.bf16.msra.mxu0 0
    %4386 = vmatprep.subr.bf16.mxu0 0
    %4387 = vmatpush1.bf16.msra.mxu0 0
    %4388 = vmatprep.subr.bf16.mxu0 0
    %4389 = vmatpush1.bf16.msra.mxu0 0
    %4390 = vmatprep.subr.bf16.mxu0 0
    %4391 = vmatpush1.bf16.msra.mxu0 0
    %4392 = vmatprep.subr.bf16.mxu0 0
    %4393 = vmatpush1.bf16.msra.mxu0 0
    %4394 = vmatprep.subr.bf16.mxu0 0
    %4395 = vmatpush1.bf16.msra.mxu0 0
    %4396 = vmatprep.subr.bf16.mxu0 0
    %4397 = vmatpush1.bf16.msra.mxu0 0
    %4398 = vmatprep.mubr.bf16.mxu0 0
    %4399 = vmatmul.mubr.bf16.gmra.mrb[0].mxu0 %v4279
    %v4400 = vpop.f32.mrb[0].mxu0
    %v4401 = vadd.f32 %v4316, %v4400
    %v4402 = vpop.f32.mrb[0].mxu0
    %v4403 = vpop.f32.mrb[0].mxu0
    %v4404 = vadd.f32 %v4316, %v4403
    %v4405 = vpop.f32.mrb[0].mxu0
    %4406 = vmatprep.mubr.bf16.mxu0 0
    %4407 = vmatmul.mubr.bf16.gmra.mrb[0].mxu0 %v4280
    %v4408 = vpop.f32.mrb[0].mxu0
    %v4409 = vadd.f32 %v4316, %v4408
    %v4410 = vpop.f32.mrb[0].mxu0
    %v4411 = vpop.f32.mrb[0].mxu0
    %v4412 = vadd.f32 %v4316, %v4411
    %v4413 = vpop.f32.mrb[0].mxu0
    %4414 = vmatprep.mubr.bf16.mxu0 0
    %4415 = vmatmul.mubr.bf16.gmra.mrb[0].mxu0 %v4281
    %v4416 = vpop.f32.mrb[0].mxu0
    %v4417 = vadd.f32 %v4316, %v4416
    %v4418 = vpop.f32.mrb[0].mxu0
    %v4419 = vpop.f32.mrb[0].mxu0
    %v4420 = vadd.f32 %v4316, %v4419
    %v4421 = vpop.f32.mrb[0].mxu0
    %4422 = vmatprep.mubr.bf16.mxu0 0
    %4423 = vmatmul.mubr.bf16.gmra.mrb[0].mxu0 %v4282
    %v4424 = vpop.f32.mrb[0].mxu0
    %v4425 = vadd.f32 %v4316, %v4424
    %v4426 = vpop.f32.mrb[0].mxu0
    %v4427 = vpop.f32.mrb[0].mxu0
    %v4428 = vadd.f32 %v4316, %v4427
    %v4429 = vpop.f32.mrb[0].mxu0
    %4430 = vmatprep.mubr.bf16.mxu0 0
    %4431 = vmatmul.mubr.bf16.gmra.mrb[0].mxu0 %v4283
    %v4432 = vpop.f32.mrb[0].mxu0
    %v4433 = vadd.f32 %v4316, %v4432
    %v4434 = vpop.f32.mrb[0].mxu0
    %v4435 = vpop.f32.mrb[0].mxu0
    %v4436 = vadd.f32 %v4316, %v4435
    %v4437 = vpop.f32.mrb[0].mxu0
    %4438 = vmatprep.mubr.bf16.mxu0 0
    %4439 = vmatmul.mubr.bf16.gmra.mrb[0].mxu0 %v4284
    %v4440 = vpop.f32.mrb[0].mxu0
    %v4441 = vadd.f32 %v4316, %v4440
    %v4442 = vpop.f32.mrb[0].mxu0
    %v4443 = vpop.f32.mrb[0].mxu0
    %v4444 = vadd.f32 %v4316, %v4443
    %v4445 = vpop.f32.mrb[0].mxu0
    %4446 = vmatprep.mubr.bf16.mxu0 0
    %4447 = vmatmul.mubr.bf16.gmra.mrb[0].mxu0 %v4285
    %v4448 = vpop.f32.mrb[0].mxu0
    %v4449 = vadd.f32 %v4316, %v4448
    %v4450 = vpop.f32.mrb[0].mxu0
    %v4451 = vpop.f32.mrb[0].mxu0
    %v4452 = vadd.f32 %v4316, %v4451
    %v4453 = vpop.f32.mrb[0].mxu0
    %4454 = vmatprep.mubr.bf16.mxu0 0
    %4455 = vmatmul.mubr.bf16.gmra.mrb[0].mxu0 %v4286
    %v4456 = vpop.f32.mrb[0].mxu0
    %v4457 = vadd.f32 %v4316, %v4456
    %v4458 = vpop.f32.mrb[0].mxu0
    %v4459 = vpop.f32.mrb[0].mxu0
    %v4460 = vadd.f32 %v4316, %v4459
    %v4461 = vpop.f32.mrb[0].mxu0
    %4462 = vmatprep.mubr.bf16.mxu0 0
    %4463 = vmatmul.mubr.bf16.gmra.mrb[0].mxu0 %v4287
    %v4464 = vpop.f32.mrb[0].mxu0
    %v4465 = vadd.f32 %v4316, %v4464
    %v4466 = vpop.f32.mrb[0].mxu0
    %v4467 = vpop.f32.mrb[0].mxu0
    %v4468 = vadd.f32 %v4316, %v4467
    %v4469 = vpop.f32.mrb[0].mxu0
    %4470 = vmatprep.mubr.bf16.mxu0 0
    %4471 = vmatmul.mubr.bf16.gmra.mrb[0].mxu0 %v4288
    %v4472 = vpop.f32.mrb[0].mxu0
    %v4473 = vadd.f32 %v4316, %v4472
    %v4474 = vpop.f32.mrb[0].mxu0
    %v4475 = vpop.f32.mrb[0].mxu0
    %v4476 = vadd.f32 %v4316, %v4475
    %v4477 = vpop.f32.mrb[0].mxu0
    %4478 = vmatprep.mubr.bf16.mxu0 0
    %4479 = vmatmul.mubr.bf16.gmra.mrb[0].mxu0 %v4289
    %v4480 = vpop.f32.mrb[0].mxu0
    %v4481 = vadd.f32 %v4316, %v4480
    %v4482 = vpop.f32.mrb[0].mxu0
    %v4483 = vpop.f32.mrb[0].mxu0
    %v4484 = vadd.f32 %v4316, %v4483
    %v4485 = vpop.f32.mrb[0].mxu0
    %4486 = vmatprep.mubr.bf16.mxu0 0
    %4487 = vmatmul.mubr.bf16.gmra.mrb[0].mxu0 %v4290
    %v4488 = vpop.f32.mrb[0].mxu0
    %v4489 = vadd.f32 %v4316, %v4488
    %v4490 = vpop.f32.mrb[0].mxu0
    %v4491 = vpop.f32.mrb[0].mxu0
    %v4492 = vadd.f32 %v4316, %v4491
    %v4493 = vpop.f32.mrb[0].mxu0
    %4494 = vmatprep.mubr.bf16.mxu0 0
    %4495 = vmatmul.mubr.bf16.gmra.mrb[0].mxu0 %v4291
    %v4496 = vpop.f32.mrb[0].mxu0
    %v4497 = vadd.f32 %v4316, %v4496
    %v4498 = vpop.f32.mrb[0].mxu0
    %v4499 = vpop.f32.mrb[0].mxu0
    %v4500 = vadd.f32 %v4316, %v4499
    %v4501 = vpop.f32.mrb[0].mxu0
    %4502 = vmatprep.mubr.bf16.mxu0 0
    %4503 = vmatmul.mubr.bf16.gmra.mrb[0].mxu0 %v4292
    %v4504 = vpop.f32.mrb[0].mxu0
    %v4505 = vadd.f32 %v4316, %v4504
    %v4506 = vpop.f32.mrb[0].mxu0
    %v4507 = vpop.f32.mrb[0].mxu0
    %v4508 = vadd.f32 %v4316, %v4507
    %v4509 = vpop.f32.mrb[0].mxu0
    %4510 = vmatprep.mubr.bf16.mxu0 0
    %4511 = vmatmul.mubr.bf16.gmra.mrb[0].mxu0 %v4293
    %v4512 = vpop.f32.mrb[0].mxu0
    %v4513 = vadd.f32 %v4316, %v4512
    %v4514 = vpop.f32.mrb[0].mxu0
    %v4515 = vpop.f32.mrb[0].mxu0
    %v4516 = vadd.f32 %v4316, %v4515
    %v4517 = vpop.f32.mrb[0].mxu0
    %4518 = vmatprep.mubr.bf16.mxu0 0
    %4519 = vmatmul.mubr.bf16.gmra.mrb[0].mxu0 %v4294
    %v4520 = vpop.f32.mrb[0].mxu0
    %v4521 = vadd.f32 %v4316, %v4520
    %v4522 = vpop.f32.mrb[0].mxu0
    %v4523 = vpop.f32.mrb[0].mxu0
    %v4524 = vadd.f32 %v4316, %v4523
    %v4525 = vpop.f32.mrb[0].mxu0
    %4526 = vdwg.mxu0
    %4527 = vst [vmem:[#allocation15] sm:$0xff] %v4401
    %4528 = vst [vmem:[#allocation15 + $0x8] sm:$0xff] %v4404
    %4529 = vst [vmem:[#allocation15 + $0x10] sm:$0xff] %v4409
    %4530 = vst [vmem:[#allocation15 + $0x18] sm:$0xff] %v4412
    %4531 = vst [vmem:[#allocation15 + $0x20] sm:$0xff] %v4417
    %4532 = vst [vmem:[#allocation15 + $0x28] sm:$0xff] %v4420
    %4533 = vst [vmem:[#allocation15 + $0x30] sm:$0xff] %v4425
    %4534 = vst [vmem:[#allocation15 + $0x38] sm:$0xff] %v4428
    %4535 = vst [vmem:[#allocation15 + $0x40] sm:$0xff] %v4433
    %4536 = vst [vmem:[#allocation15 + $0x48] sm:$0xff] %v4436
    %4537 = vst [vmem:[#allocation15 + $0x50] sm:$0xff] %v4441
    %4538 = vst [vmem:[#allocation15 + $0x58] sm:$0xff] %v4444
    %4539 = vst [vmem:[#allocation15 + $0x60] sm:$0xff] %v4449
    %4540 = vst [vmem:[#allocation15 + $0x68] sm:$0xff] %v4452
    %4541 = vst [vmem:[#allocation15 + $0x70] sm:$0xff] %v4457
    %4542 = vst [vmem:[#allocation15 + $0x78] sm:$0xff] %v4460
    %4543 = vst [vmem:[#allocation15 + $0x80] sm:$0xff] %v4465
    %4544 = vst [vmem:[#allocation15 + $0x88] sm:$0xff] %v4468
    %4545 = vst [vmem:[#allocation15 + $0x90] sm:$0xff] %v4473
    %4546 = vst [vmem:[#allocation15 + $0x98] sm:$0xff] %v4476
    %4547 = vst [vmem:[#allocation15 + $0xa0] sm:$0xff] %v4481
    %4548 = vst [vmem:[#allocation15 + $0xa8] sm:$0xff] %v4484
    %4549 = vst [vmem:[#allocation15 + $0xb0] sm:$0xff] %v4489
    %4550 = vst [vmem:[#allocation15 + $0xb8] sm:$0xff] %v4492
    %4551 = vst [vmem:[#allocation15 + $0xc0] sm:$0xff] %v4497
    %4552 = vst [vmem:[#allocation15 + $0xc8] sm:$0xff] %v4500
    %4553 = vst [vmem:[#allocation15 + $0xd0] sm:$0xff] %v4505
    %4554 = vst [vmem:[#allocation15 + $0xd8] sm:$0xff] %v4508
    %4555 = vst [vmem:[#allocation15 + $0xe0] sm:$0xff] %v4513
    %4556 = vst [vmem:[#allocation15 + $0xe8] sm:$0xff] %v4516
    %4557 = vst [vmem:[#allocation15 + $0xf0] sm:$0xff] %v4521
    %4558 = vst [vmem:[#allocation15 + $0xf8] sm:$0xff] %v4524
    // Predicated region
    $region66: #{tpu_custom_call.1} parent=1 // pred_check
      _
    $region67: #{tpu_custom_call.1} parent=1 // pred_check_branch
      %4560 = sbr.rel (0) target = $region69
    $region68: #{tpu_custom_call.1} parent=1 // pred_region
      %s4562 = ssub.s32 4096, 4096
      %4563 = vsyncadd [#allocation6], %s4562
      %s4564 = sshll.u32 [#allocation15], 4
      %s4565 = int_to_ptr.vmem [resolvable:$true] %s4564
      %4570 = dma.vmem_to_hbm [thread:$0]  %s4565, 4096, %s10, [#allocation6], 128, 128, 8
    $region69: #{tpu_custom_call.1} parent=1 // pred_fallthru
      _
    // Predicated region
    $region70: #{tpu_custom_call.1} parent=1 // pred_check
      _
    $region71: #{tpu_custom_call.1} parent=1 // pred_check_branch
      %4572 = sbr.rel (0) target = $region73
    $region72: #{tpu_custom_call.1} parent=1 // pred_region
      %4573 = dma.done [#allocation6], 4096
    $region73: #{tpu_custom_call.1} parent=1 // pred_fallthru
      _
    %4574 = vsyncpa [#allocation5], 1
    %4575 = vsyncpa [#allocation8], 1
    %4576 = vsyncpa [#allocation11], 1
    %4577 = vsyncpa [#allocation14], 1
    %4578 = vsyncpa [#allocation6], 1

</llo_original>
